<compile_context>
chip_gen: v6e
topology: v6e:2x2x1
jax: 0.10.0
libtpu: 0.0.40
codegen_flags: <defaults>
</compile_context>

<pallas_src>
import functools

import jax
import jax.numpy as jnp
from jax.experimental import pallas as pl
from jax.experimental.pallas import tpu as pltpu


# ----------------------------------------------------------------------------
# Fused Pallas kernel: cond_mlp + L coupling layers + permutations + log-det
# ----------------------------------------------------------------------------
def _fused_flow_kernel(
    x_ref, c_ref,
    cw1_ref, cb1_ref, cw2_ref, cb2_ref,            # cond_mlp params
    pb_ref, sa_ref, eb_ref,                        # permutation/placement consts
    w1z_ref, w1c_ref, b1_ref,                      # packed first layers  (L,...)
    w2s_ref, b2s_ref, w2t_ref, b2t_ref,            # packed second layers (L,...)
    z_ref, ld_ref,
):
    f32 = jnp.float32
    cdt = w1z_ref.dtype                  # MXU operand dtype (f32 or bf16)
    n_layers = w1z_ref.shape[0]

    def mm(a, b):                        # MXU matmul with f32 accumulation
        return jnp.dot(a.astype(cdt), b, preferred_element_type=f32)

    # --- cond_mlp: Linear -> ReLU -> Linear (once per batch tile) ---
    c = c_ref[...]
    hc = jnp.maximum(mm(c, cw1_ref[...]) + cb1_ref[...], 0.0)
    c_emb = mm(hc, cw2_ref[...]) + cb2_ref[...]

    pb = pb_ref[...]                     # (dim, half): x_b = perm(z)[:, half:]
    sa = sa_ref[...]                     # (dim, dim) : z @ sa == [x_a | 0]
    eb = eb_ref[...]                     # (half, dim): z_b @ eb == [0 | z_b]

    z = x_ref[...].astype(f32)
    scale_acc = jnp.zeros((z.shape[0], pb.shape[1]), f32)

    # flow_length is small and static -> unrolled (full LLO visibility).
    for l in range(n_layers):
        x_b = mm(z, pb)                                                # (B, half)
        # fused scale||shift first layer; permutation folded into w1z rows
        h = jnp.maximum(mm(z, w1z_ref[l]) + mm(c_emb, w1c_ref[l]) + b1_ref[l], 0.0)
        scale = jnp.tanh(mm(h, w2s_ref[l]) + b2s_ref[l])               # (B, half)
        shift = mm(h, w2t_ref[l]) + b2t_ref[l]                         # (B, half)
        z_b = x_b * jnp.exp(scale) + shift
        z = mm(z, sa) + mm(z_b, eb)                                    # [x_a | z_b]
        scale_acc = scale_acc + scale

    z_ref[...] = z.astype(z_ref.dtype)
    ld_ref[...] = jnp.sum(scale_acc, axis=1, keepdims=True)


# ----------------------------------------------------------------------------
# Wrapper: batch-tiled grid, weights broadcast (VMEM-resident) to every step
# ----------------------------------------------------------------------------
def _bcast_spec(shape):
    n = len(shape)
    return pl.BlockSpec(shape, lambda i, _n=n: (0,) * _n)


def normalizing_flow_forward(x, c, packed, *, tile_b=256):
    B, dim = x.shape
    n_cond = c.shape[1]

    tb = tile_b if B >= tile_b else B
    grid_b = pl.cdiv(B, tb)
    Bp = grid_b * tb
    if Bp != B:                          # pad batch to a whole number of tiles
        x = jnp.pad(x, ((0, Bp - B), (0, 0)))
        c = jnp.pad(c, ((0, Bp - B), (0, 0)))

    weights = (
        packed["cw1"], packed["cb1"], packed["cw2"], packed["cb2"],
        packed["pb"], packed["sa"], packed["eb"],
        packed["w1z"], packed["w1c"], packed["b1"],
        packed["w2s"], packed["b2s"], packed["w2t"], packed["b2t"],
    )
    in_specs = [
        pl.BlockSpec((tb, dim), lambda i: (i, 0)),
        pl.BlockSpec((tb, n_cond), lambda i: (i, 0)),
    ] + [_bcast_spec(w.shape) for w in weights]

    z, ld = pl.pallas_call(
        _fused_flow_kernel,
        grid=(grid_b,),
        out_shape=(
            jax.ShapeDtypeStruct((Bp, dim), jnp.float32),
            jax.ShapeDtypeStruct((Bp, 1), jnp.float32),
        ),
        in_specs=in_specs,
        out_specs=(
            pl.BlockSpec((tb, dim), lambda i: (i, 0)),
            pl.BlockSpec((tb, 1), lambda i: (i, 0)),
        ),
        compiler_params=pltpu.CompilerParams(
            dimension_semantics=("parallel",),      # shards tiles across v7x TCs
            vmem_limit_bytes=32 * 1024 * 1024,      # safe on 64 MiB v7x VMEM
        ),
    )(x, c, *weights)
    return z[:B], ld[:B, 0]


# ----------------------------------------------------------------------------
# Weight packing (init-time, exact 0/1 folds -- no matmuls used here)
# ----------------------------------------------------------------------------
def pack_params(cond_params, flow_params, dim, compute_dtype=jnp.float32):
    f32 = jnp.float32
    half = dim // 2
    hidden = flow_params[0]["sw1"].shape[1]
    eye = jnp.eye(half, dtype=f32)

    # perm(z) = [z[:, ::2] | z[:, 1::2]];  x_a = z @ Pa,  x_b = z @ Pb
    pb = jnp.zeros((dim, half), f32).at[1::2, :].set(eye)     # x_b selector
    sa = jnp.zeros((dim, dim), f32).at[0::2, :half].set(eye)  # z @ sa == [x_a | 0]
    eb = jnp.zeros((half, dim), f32).at[:, half:].set(eye)    # z_b @ eb == [0 | z_b]

    w1z, w1c, b1, w2s, b2s, w2t, b2t = [], [], [], [], [], [], []
    for p in flow_params:
        # scale/shift first layers fused along the output axis; x_a rows get
        # the odd/even permutation folded in (placed on even rows of w1z).
        w1a = jnp.concatenate([p["sw1"][:half], p["tw1"][:half]], axis=1)   # (half, 2H)
        w1z.append(jnp.zeros((dim, 2 * hidden), f32).at[0::2, :].set(w1a))
        w1c.append(jnp.concatenate([p["sw1"][half:], p["tw1"][half:]], axis=1))
        b1.append(jnp.concatenate([p["sb1"], p["tb1"]], axis=1))            # (1, 2H)
        zpad = jnp.zeros((hidden, half), f32)
        w2s.append(jnp.concatenate([p["sw2"], zpad], axis=0))                # (2H, half)
        w2t.append(jnp.concatenate([zpad, p["tw2"]], axis=0))
        b2s.append(p["sb2"])
        b2t.append(p["tb2"])

    packed = {
        "cw1": cond_params["w1"], "cb1": cond_params["b1"],
        "cw2": cond_params["w2"], "cb2": cond_params["b2"],
        "pb": pb, "sa": sa, "eb": eb,
        "w1z": jnp.stack(w1z), "w1c": jnp.stack(w1c), "b1": jnp.stack(b1),
        "w2s": jnp.stack(w2s), "b2s": jnp.stack(b2s),
        "w2t": jnp.stack(w2t), "b2t": jnp.stack(b2t),
    }
    # MXU operands take compute_dtype; biases stay f32 (added after f32 accum).
    for k in ("cw1", "cw2", "pb", "sa", "eb", "w1z", "w1c", "w2s", "w2t"):
        packed[k] = packed[k].astype(compute_dtype)
    return packed


# ----------------------------------------------------------------------------
# Pure-JAX reference (mirrors the PyTorch module structure; unpacked params)
# ----------------------------------------------------------------------------
def _ref_forward(x, c, cond_params, flow_params):
    h = jnp.maximum(c @ cond_params["w1"] + cond_params["b1"], 0.0)
    c_emb = h @ cond_params["w2"] + cond_params["b2"]
    z = x
    log_det = jnp.zeros((x.shape[0],), jnp.float32)
    for p in flow_params:
        z = jnp.concatenate([z[:, ::2], z[:, 1::2]], axis=1)
        half = z.shape[1] // 2
        x_a, x_b = z[:, :half], z[:, half:]
        xac = jnp.concatenate([x_a, c_emb], axis=1)
        scale = jnp.tanh(jnp.maximum(xac @ p["sw1"] + p["sb1"], 0.0) @ p["sw2"] + p["sb2"])
        shift = jnp.maximum(xac @ p["tw1"] + p["tb1"], 0.0) @ p["tw2"] + p["tb2"]
        z_b = x_b * jnp.exp(scale) + shift
        z = jnp.concatenate([x_a, z_b], axis=1)
        log_det = log_det + jnp.sum(scale, axis=1)
    return z, log_det


# ----------------------------------------------------------------------------
# Deterministic parameter init (nn.Linear-style shapes, stored as (in, out))
# ----------------------------------------------------------------------------
def _init_linear(key, fan_in, fan_out):
    kw, kb = jax.random.split(key)
    bound = 1.0 / jnp.sqrt(fan_in)
    w = jax.random.uniform(kw, (fan_in, fan_out), jnp.float32, -bound, bound)
    b = jax.random.uniform(kb, (1, fan_out), jnp.float32, -bound, bound)
    return w, b


def init_params(key, dim, hidden_dim, n_cond, d_cond, flow_length):
    keys = jax.random.split(key, 2 + 4 * flow_length)
    cw1, cb1 = _init_linear(keys[0], n_cond, d_cond)
    cw2, cb2 = _init_linear(keys[1], d_cond, d_cond)
    cond_params = {"w1": cw1, "b1": cb1, "w2": cw2, "b2": cb2}

    flow_params = []
    half = dim // 2
    for i in range(flow_length):
        sw1, sb1 = _init_linear(keys[2 + 4 * i + 0], half + d_cond, hidden_dim)
        sw2, sb2 = _init_linear(keys[2 + 4 * i + 1], hidden_dim, half)
        tw1, tb1 = _init_linear(keys[2 + 4 * i + 2], half + d_cond, hidden_dim)
        tw2, tb2 = _init_linear(keys[2 + 4 * i + 3], hidden_dim, half)
        flow_params.append(
            {"sw1": sw1, "sb1": sb1, "sw2": sw2, "sb2": sb2,
             "tw1": tw1, "tb1": tb1, "tw2": tw2, "tb2": tb2}
        )
    return cond_params, flow_params


# ----------------------------------------------------------------------------
# Main
# ----------------------------------------------------------------------------
if __name__ == "__main__":
    dim, hidden_dim, n_cond, d_cond, flow_length = 16, 32, 8, 8, 4
    batch = 8

    key = jax.random.PRNGKey(0)
    kx, kc, kp = jax.random.split(key, 3)
    x = jax.random.normal(kx, (batch, dim), jnp.float32)
    c = jax.random.normal(kc, (batch, n_cond), jnp.float32)
    cond_params, flow_params = init_params(kp, dim, hidden_dim, n_cond, d_cond, flow_length)

    z_ref, ld_ref = _ref_forward(x, c, cond_params, flow_params)

    # --- f32 MXU operands ---
    packed_f32 = pack_params(cond_params, flow_params, dim, jnp.float32)
    fwd = jax.jit(functools.partial(normalizing_flow_forward, packed=packed_f32))
    z, log_det = fwd(x, c)
    jax.block_until_ready((z, log_det))
    assert z.shape == (batch, dim) and log_det.shape == (batch,)
    # Matmul grouping differs from the reference (packed/folded weights), so
    # allow default-matmul-precision-level divergence.
    assert jnp.allclose(z, z_ref, rtol=5e-2, atol=5e-2), "z mismatch vs reference"
    assert jnp.allclose(log_det, ld_ref, rtol=5e-2, atol=5e-2), "log_det mismatch vs reference"

    # --- bf16 MXU operands (f32 accumulation + f32 elementwise), looser tol ---
    packed_bf16 = pack_params(cond_params, flow_params, dim, jnp.bfloat16)
    fwd16 = jax.jit(functools.partial(normalizing_flow_forward, packed=packed_bf16))
    z16, ld16 = fwd16(x, c)
    jax.block_until_ready((z16, ld16))
    assert jnp.allclose(z16, z_ref, rtol=1e-1, atol=3.5e-1), "z (bf16) mismatch vs reference"
    assert jnp.allclose(ld16, ld_ref, rtol=1e-1, atol=3.5e-1), "log_det (bf16) mismatch vs reference"

    print("KERNEL_OK")
</pallas_src>

<mosaic_0001>
module attributes {stable_mosaic.version = 11 : i64} {
  func.func @_fused_flow_kernel(%arg0: i32, %arg1: memref<8x16xf32, #tpu.memory_space<vmem>>, %arg2: memref<8x8xf32, #tpu.memory_space<vmem>>, %arg3: memref<8x8xf32, #tpu.memory_space<vmem>>, %arg4: memref<1x8xf32, #tpu.memory_space<vmem>>, %arg5: memref<8x8xf32, #tpu.memory_space<vmem>>, %arg6: memref<1x8xf32, #tpu.memory_space<vmem>>, %arg7: memref<16x8xf32, #tpu.memory_space<vmem>>, %arg8: memref<16x16xf32, #tpu.memory_space<vmem>>, %arg9: memref<8x16xf32, #tpu.memory_space<vmem>>, %arg10: memref<4x16x64xf32, #tpu.memory_space<vmem>>, %arg11: memref<4x8x64xf32, #tpu.memory_space<vmem>>, %arg12: memref<4x1x64xf32, #tpu.memory_space<vmem>>, %arg13: memref<4x64x8xf32, #tpu.memory_space<vmem>>, %arg14: memref<4x1x8xf32, #tpu.memory_space<vmem>>, %arg15: memref<4x64x8xf32, #tpu.memory_space<vmem>>, %arg16: memref<4x1x8xf32, #tpu.memory_space<vmem>>, %arg17: memref<8x16xf32, #tpu.memory_space<vmem>>, %arg18: memref<8x1xf32, #tpu.memory_space<vmem>>) attributes {dimension_semantics = [#tpu.dimension_semantics<parallel>], iteration_bounds = array<i64: 1>, scalar_prefetch = 0 : i64, scratch_operands = 0 : i64, tpu.core_type = #tpu.core_type<tc>, window_params = [{transform_indices = @transform_0, window_bounds = array<i64: 8, 16>}, {transform_indices = @transform_1, window_bounds = array<i64: 8, 8>}, {pipeline_mode = #tpu.pipeline_mode<synchronous>, transform_indices = @transform_2, window_bounds = array<i64: 8, 8>}, {pipeline_mode = #tpu.pipeline_mode<synchronous>, transform_indices = @transform_3, window_bounds = array<i64: 1, 8>}, {pipeline_mode = #tpu.pipeline_mode<synchronous>, transform_indices = @transform_4, window_bounds = array<i64: 8, 8>}, {pipeline_mode = #tpu.pipeline_mode<synchronous>, transform_indices = @transform_5, window_bounds = array<i64: 1, 8>}, {pipeline_mode = #tpu.pipeline_mode<synchronous>, transform_indices = @transform_6, window_bounds = array<i64: 16, 8>}, {pipeline_mode = #tpu.pipeline_mode<synchronous>, transform_indices = @transform_7, window_bounds = array<i64: 16, 16>}, {pipeline_mode = #tpu.pipeline_mode<synchronous>, transform_indices = @transform_8, window_bounds = array<i64: 8, 16>}, {pipeline_mode = #tpu.pipeline_mode<synchronous>, transform_indices = @transform_9, window_bounds = array<i64: 4, 16, 64>}, {pipeline_mode = #tpu.pipeline_mode<synchronous>, transform_indices = @transform_10, window_bounds = array<i64: 4, 8, 64>}, {pipeline_mode = #tpu.pipeline_mode<synchronous>, transform_indices = @transform_11, window_bounds = array<i64: 4, 1, 64>}, {pipeline_mode = #tpu.pipeline_mode<synchronous>, transform_indices = @transform_12, window_bounds = array<i64: 4, 64, 8>}, {pipeline_mode = #tpu.pipeline_mode<synchronous>, transform_indices = @transform_13, window_bounds = array<i64: 4, 1, 8>}, {pipeline_mode = #tpu.pipeline_mode<synchronous>, transform_indices = @transform_14, window_bounds = array<i64: 4, 64, 8>}, {pipeline_mode = #tpu.pipeline_mode<synchronous>, transform_indices = @transform_15, window_bounds = array<i64: 4, 1, 8>}, {transform_indices = @transform_16, window_bounds = array<i64: 8, 16>}, {transform_indices = @transform_17, window_bounds = array<i64: 8, 1>}]} {
    %c0 = arith.constant 0 : index
    %c0_0 = arith.constant 0 : index
    %0 = vector.load %arg2[%c0, %c0_0] : memref<8x8xf32, #tpu.memory_space<vmem>>, vector<8x8xf32>
    %c0_1 = arith.constant 0 : index
    %c0_2 = arith.constant 0 : index
    %1 = vector.load %arg3[%c0_1, %c0_2] : memref<8x8xf32, #tpu.memory_space<vmem>>, vector<8x8xf32>
    %cst = arith.constant dense<0.000000e+00> : vector<8x8xf32>
    %2 = tpu.matmul %0, %1, %cst {dimension_numbers = #tpu.dot_dimension_numbers<[1], [0], [0], [1], [0, 0, 1, 1], [], []>} : vector<8x8xf32>, vector<8x8xf32>, vector<8x8xf32> -> vector<8x8xf32>
    %c0_3 = arith.constant 0 : index
    %c0_4 = arith.constant 0 : index
    %3 = vector.load %arg4[%c0_3, %c0_4] : memref<1x8xf32, #tpu.memory_space<vmem>>, vector<1x8xf32>
    %4 = vector.broadcast %3 : vector<1x8xf32> to vector<8x8xf32>
    %5 = arith.addf %2, %4 : vector<8x8xf32>
    %cst_5 = arith.constant 0.000000e+00 : f32
    %6 = vector.broadcast %cst_5 : f32 to vector<8x8xf32>
    %7 = arith.maximumf %5, %6 : vector<8x8xf32>
    %c0_6 = arith.constant 0 : index
    %c0_7 = arith.constant 0 : index
    %8 = vector.load %arg5[%c0_6, %c0_7] : memref<8x8xf32, #tpu.memory_space<vmem>>, vector<8x8xf32>
    %cst_8 = arith.constant dense<0.000000e+00> : vector<8x8xf32>
    %9 = tpu.matmul %7, %8, %cst_8 {dimension_numbers = #tpu.dot_dimension_numbers<[1], [0], [0], [1], [0, 0, 1, 1], [], []>} : vector<8x8xf32>, vector<8x8xf32>, vector<8x8xf32> -> vector<8x8xf32>
    %c0_9 = arith.constant 0 : index
    %c0_10 = arith.constant 0 : index
    %10 = vector.load %arg6[%c0_9, %c0_10] : memref<1x8xf32, #tpu.memory_space<vmem>>, vector<1x8xf32>
    %11 = vector.broadcast %10 : vector<1x8xf32> to vector<8x8xf32>
    %12 = arith.addf %9, %11 : vector<8x8xf32>
    %c0_11 = arith.constant 0 : index
    %c0_12 = arith.constant 0 : index
    %13 = vector.load %arg7[%c0_11, %c0_12] : memref<16x8xf32, #tpu.memory_space<vmem>>, vector<16x8xf32>
    %c0_13 = arith.constant 0 : index
    %c0_14 = arith.constant 0 : index
    %14 = vector.load %arg8[%c0_13, %c0_14] : memref<16x16xf32, #tpu.memory_space<vmem>>, vector<16x16xf32>
    %c0_15 = arith.constant 0 : index
    %c0_16 = arith.constant 0 : index
    %15 = vector.load %arg9[%c0_15, %c0_16] : memref<8x16xf32, #tpu.memory_space<vmem>>, vector<8x16xf32>
    %c0_17 = arith.constant 0 : index
    %c0_18 = arith.constant 0 : index
    %16 = vector.load %arg1[%c0_17, %c0_18] : memref<8x16xf32, #tpu.memory_space<vmem>>, vector<8x16xf32>
    %cst_19 = arith.constant 0.000000e+00 : f32
    %17 = vector.broadcast %cst_19 : f32 to vector<8x8xf32>
    %cst_20 = arith.constant dense<0.000000e+00> : vector<8x8xf32>
    %18 = tpu.matmul %16, %13, %cst_20 {dimension_numbers = #tpu.dot_dimension_numbers<[1], [0], [0], [1], [0, 0, 1, 1], [], []>} : vector<8x16xf32>, vector<16x8xf32>, vector<8x8xf32> -> vector<8x8xf32>
    %c0_21 = arith.constant 0 : index
    %c0_22 = arith.constant 0 : index
    %c0_23 = arith.constant 0 : index
    %19 = vector.load %arg10[%c0_21, %c0_22, %c0_23] : memref<4x16x64xf32, #tpu.memory_space<vmem>>, vector<1x16x64xf32>
    %20 = vector.shape_cast %19 : vector<1x16x64xf32> to vector<16x64xf32>
    %cst_24 = arith.constant dense<0.000000e+00> : vector<8x64xf32>
    %21 = tpu.matmul %16, %20, %cst_24 {dimension_numbers = #tpu.dot_dimension_numbers<[1], [0], [0], [1], [0, 0, 1, 1], [], []>} : vector<8x16xf32>, vector<16x64xf32>, vector<8x64xf32> -> vector<8x64xf32>
    %c0_25 = arith.constant 0 : index
    %c0_26 = arith.constant 0 : index
    %c0_27 = arith.constant 0 : index
    %22 = vector.load %arg11[%c0_25, %c0_26, %c0_27] : memref<4x8x64xf32, #tpu.memory_space<vmem>>, vector<1x8x64xf32>
    %23 = vector.shape_cast %22 : vector<1x8x64xf32> to vector<8x64xf32>
    %cst_28 = arith.constant dense<0.000000e+00> : vector<8x64xf32>
    %24 = tpu.matmul %12, %23, %cst_28 {dimension_numbers = #tpu.dot_dimension_numbers<[1], [0], [0], [1], [0, 0, 1, 1], [], []>} : vector<8x8xf32>, vector<8x64xf32>, vector<8x64xf32> -> vector<8x64xf32>
    %25 = arith.addf %21, %24 : vector<8x64xf32>
    %c0_29 = arith.constant 0 : index
    %c0_30 = arith.constant 0 : index
    %c0_31 = arith.constant 0 : index
    %26 = vector.load %arg12[%c0_29, %c0_30, %c0_31] : memref<4x1x64xf32, #tpu.memory_space<vmem>>, vector<1x1x64xf32>
    %27 = vector.shape_cast %26 : vector<1x1x64xf32> to vector<1x64xf32>
    %28 = vector.broadcast %27 : vector<1x64xf32> to vector<8x64xf32>
    %29 = arith.addf %25, %28 : vector<8x64xf32>
    %cst_32 = arith.constant 0.000000e+00 : f32
    %30 = vector.broadcast %cst_32 : f32 to vector<8x64xf32>
    %31 = arith.maximumf %29, %30 : vector<8x64xf32>
    %c0_33 = arith.constant 0 : index
    %c0_34 = arith.constant 0 : index
    %c0_35 = arith.constant 0 : index
    %32 = vector.load %arg13[%c0_33, %c0_34, %c0_35] : memref<4x64x8xf32, #tpu.memory_space<vmem>>, vector<1x64x8xf32>
    %33 = vector.shape_cast %32 : vector<1x64x8xf32> to vector<64x8xf32>
    %cst_36 = arith.constant dense<0.000000e+00> : vector<8x8xf32>
    %34 = tpu.matmul %31, %33, %cst_36 {dimension_numbers = #tpu.dot_dimension_numbers<[1], [0], [0], [1], [0, 0, 1, 1], [], []>} : vector<8x64xf32>, vector<64x8xf32>, vector<8x8xf32> -> vector<8x8xf32>
    %c0_37 = arith.constant 0 : index
    %c0_38 = arith.constant 0 : index
    %c0_39 = arith.constant 0 : index
    %35 = vector.load %arg14[%c0_37, %c0_38, %c0_39] : memref<4x1x8xf32, #tpu.memory_space<vmem>>, vector<1x1x8xf32>
    %36 = vector.shape_cast %35 : vector<1x1x8xf32> to vector<1x8xf32>
    %37 = vector.broadcast %36 : vector<1x8xf32> to vector<8x8xf32>
    %38 = arith.addf %34, %37 : vector<8x8xf32>
    %39 = math.tanh %38 : vector<8x8xf32>
    %c0_40 = arith.constant 0 : index
    %c0_41 = arith.constant 0 : index
    %c0_42 = arith.constant 0 : index
    %40 = vector.load %arg15[%c0_40, %c0_41, %c0_42] : memref<4x64x8xf32, #tpu.memory_space<vmem>>, vector<1x64x8xf32>
    %41 = vector.shape_cast %40 : vector<1x64x8xf32> to vector<64x8xf32>
    %cst_43 = arith.constant dense<0.000000e+00> : vector<8x8xf32>
    %42 = tpu.matmul %31, %41, %cst_43 {dimension_numbers = #tpu.dot_dimension_numbers<[1], [0], [0], [1], [0, 0, 1, 1], [], []>} : vector<8x64xf32>, vector<64x8xf32>, vector<8x8xf32> -> vector<8x8xf32>
    %c0_44 = arith.constant 0 : index
    %c0_45 = arith.constant 0 : index
    %c0_46 = arith.constant 0 : index
    %43 = vector.load %arg16[%c0_44, %c0_45, %c0_46] : memref<4x1x8xf32, #tpu.memory_space<vmem>>, vector<1x1x8xf32>
    %44 = vector.shape_cast %43 : vector<1x1x8xf32> to vector<1x8xf32>
    %45 = vector.broadcast %44 : vector<1x8xf32> to vector<8x8xf32>
    %46 = arith.addf %42, %45 : vector<8x8xf32>
    %47 = math.exp %39 : vector<8x8xf32>
    %48 = arith.mulf %18, %47 : vector<8x8xf32>
    %49 = arith.addf %48, %46 : vector<8x8xf32>
    %cst_47 = arith.constant dense<0.000000e+00> : vector<8x16xf32>
    %50 = tpu.matmul %16, %14, %cst_47 {dimension_numbers = #tpu.dot_dimension_numbers<[1], [0], [0], [1], [0, 0, 1, 1], [], []>} : vector<8x16xf32>, vector<16x16xf32>, vector<8x16xf32> -> vector<8x16xf32>
    %cst_48 = arith.constant dense<0.000000e+00> : vector<8x16xf32>
    %51 = tpu.matmul %49, %15, %cst_48 {dimension_numbers = #tpu.dot_dimension_numbers<[1], [0], [0], [1], [0, 0, 1, 1], [], []>} : vector<8x8xf32>, vector<8x16xf32>, vector<8x16xf32> -> vector<8x16xf32>
    %52 = arith.addf %50, %51 : vector<8x16xf32>
    %53 = arith.addf %17, %39 : vector<8x8xf32>
    %cst_49 = arith.constant dense<0.000000e+00> : vector<8x8xf32>
    %54 = tpu.matmul %52, %13, %cst_49 {dimension_numbers = #tpu.dot_dimension_numbers<[1], [0], [0], [1], [0, 0, 1, 1], [], []>} : vector<8x16xf32>, vector<16x8xf32>, vector<8x8xf32> -> vector<8x8xf32>
    %c1 = arith.constant 1 : index
    %c0_50 = arith.constant 0 : index
    %c0_51 = arith.constant 0 : index
    %55 = vector.load %arg10[%c1, %c0_50, %c0_51] : memref<4x16x64xf32, #tpu.memory_space<vmem>>, vector<1x16x64xf32>
    %56 = vector.shape_cast %55 : vector<1x16x64xf32> to vector<16x64xf32>
    %cst_52 = arith.constant dense<0.000000e+00> : vector<8x64xf32>
    %57 = tpu.matmul %52, %56, %cst_52 {dimension_numbers = #tpu.dot_dimension_numbers<[1], [0], [0], [1], [0, 0, 1, 1], [], []>} : vector<8x16xf32>, vector<16x64xf32>, vector<8x64xf32> -> vector<8x64xf32>
    %c1_53 = arith.constant 1 : index
    %c0_54 = arith.constant 0 : index
    %c0_55 = arith.constant 0 : index
    %58 = vector.load %arg11[%c1_53, %c0_54, %c0_55] : memref<4x8x64xf32, #tpu.memory_space<vmem>>, vector<1x8x64xf32>
    %59 = vector.shape_cast %58 : vector<1x8x64xf32> to vector<8x64xf32>
    %cst_56 = arith.constant dense<0.000000e+00> : vector<8x64xf32>
    %60 = tpu.matmul %12, %59, %cst_56 {dimension_numbers = #tpu.dot_dimension_numbers<[1], [0], [0], [1], [0, 0, 1, 1], [], []>} : vector<8x8xf32>, vector<8x64xf32>, vector<8x64xf32> -> vector<8x64xf32>
    %61 = arith.addf %57, %60 : vector<8x64xf32>
    %c1_57 = arith.constant 1 : index
    %c0_58 = arith.constant 0 : index
    %c0_59 = arith.constant 0 : index
    %62 = vector.load %arg12[%c1_57, %c0_58, %c0_59] : memref<4x1x64xf32, #tpu.memory_space<vmem>>, vector<1x1x64xf32>
    %63 = vector.shape_cast %62 : vector<1x1x64xf32> to vector<1x64xf32>
    %64 = vector.broadcast %63 : vector<1x64xf32> to vector<8x64xf32>
    %65 = arith.addf %61, %64 : vector<8x64xf32>
    %cst_60 = arith.constant 0.000000e+00 : f32
    %66 = vector.broadcast %cst_60 : f32 to vector<8x64xf32>
    %67 = arith.maximumf %65, %66 : vector<8x64xf32>
    %c1_61 = arith.constant 1 : index
    %c0_62 = arith.constant 0 : index
    %c0_63 = arith.constant 0 : index
    %68 = vector.load %arg13[%c1_61, %c0_62, %c0_63] : memref<4x64x8xf32, #tpu.memory_space<vmem>>, vector<1x64x8xf32>
    %69 = vector.shape_cast %68 : vector<1x64x8xf32> to vector<64x8xf32>
    %cst_64 = arith.constant dense<0.000000e+00> : vector<8x8xf32>
    %70 = tpu.matmul %67, %69, %cst_64 {dimension_numbers = #tpu.dot_dimension_numbers<[1], [0], [0], [1], [0, 0, 1, 1], [], []>} : vector<8x64xf32>, vector<64x8xf32>, vector<8x8xf32> -> vector<8x8xf32>
    %c1_65 = arith.constant 1 : index
    %c0_66 = arith.constant 0 : index
    %c0_67 = arith.constant 0 : index
    %71 = vector.load %arg14[%c1_65, %c0_66, %c0_67] : memref<4x1x8xf32, #tpu.memory_space<vmem>>, vector<1x1x8xf32>
    %72 = vector.shape_cast %71 : vector<1x1x8xf32> to vector<1x8xf32>
    %73 = vector.broadcast %72 : vector<1x8xf32> to vector<8x8xf32>
    %74 = arith.addf %70, %73 : vector<8x8xf32>
    %75 = math.tanh %74 : vector<8x8xf32>
    %c1_68 = arith.constant 1 : index
    %c0_69 = arith.constant 0 : index
    %c0_70 = arith.constant 0 : index
    %76 = vector.load %arg15[%c1_68, %c0_69, %c0_70] : memref<4x64x8xf32, #tpu.memory_space<vmem>>, vector<1x64x8xf32>
    %77 = vector.shape_cast %76 : vector<1x64x8xf32> to vector<64x8xf32>
    %cst_71 = arith.constant dense<0.000000e+00> : vector<8x8xf32>
    %78 = tpu.matmul %67, %77, %cst_71 {dimension_numbers = #tpu.dot_dimension_numbers<[1], [0], [0], [1], [0, 0, 1, 1], [], []>} : vector<8x64xf32>, vector<64x8xf32>, vector<8x8xf32> -> vector<8x8xf32>
    %c1_72 = arith.constant 1 : index
    %c0_73 = arith.constant 0 : index
    %c0_74 = arith.constant 0 : index
    %79 = vector.load %arg16[%c1_72, %c0_73, %c0_74] : memref<4x1x8xf32, #tpu.memory_space<vmem>>, vector<1x1x8xf32>
    %80 = vector.shape_cast %79 : vector<1x1x8xf32> to vector<1x8xf32>
    %81 = vector.broadcast %80 : vector<1x8xf32> to vector<8x8xf32>
    %82 = arith.addf %78, %81 : vector<8x8xf32>
    %83 = math.exp %75 : vector<8x8xf32>
    %84 = arith.mulf %54, %83 : vector<8x8xf32>
    %85 = arith.addf %84, %82 : vector<8x8xf32>
    %cst_75 = arith.constant dense<0.000000e+00> : vector<8x16xf32>
    %86 = tpu.matmul %52, %14, %cst_75 {dimension_numbers = #tpu.dot_dimension_numbers<[1], [0], [0], [1], [0, 0, 1, 1], [], []>} : vector<8x16xf32>, vector<16x16xf32>, vector<8x16xf32> -> vector<8x16xf32>
    %cst_76 = arith.constant dense<0.000000e+00> : vector<8x16xf32>
    %87 = tpu.matmul %85, %15, %cst_76 {dimension_numbers = #tpu.dot_dimension_numbers<[1], [0], [0], [1], [0, 0, 1, 1], [], []>} : vector<8x8xf32>, vector<8x16xf32>, vector<8x16xf32> -> vector<8x16xf32>
    %88 = arith.addf %86, %87 : vector<8x16xf32>
    %89 = arith.addf %53, %75 : vector<8x8xf32>
    %cst_77 = arith.constant dense<0.000000e+00> : vector<8x8xf32>
    %90 = tpu.matmul %88, %13, %cst_77 {dimension_numbers = #tpu.dot_dimension_numbers<[1], [0], [0], [1], [0, 0, 1, 1], [], []>} : vector<8x16xf32>, vector<16x8xf32>, vector<8x8xf32> -> vector<8x8xf32>
    %c2 = arith.constant 2 : index
    %c0_78 = arith.constant 0 : index
    %c0_79 = arith.constant 0 : index
    %91 = vector.load %arg10[%c2, %c0_78, %c0_79] : memref<4x16x64xf32, #tpu.memory_space<vmem>>, vector<1x16x64xf32>
    %92 = vector.shape_cast %91 : vector<1x16x64xf32> to vector<16x64xf32>
    %cst_80 = arith.constant dense<0.000000e+00> : vector<8x64xf32>
    %93 = tpu.matmul %88, %92, %cst_80 {dimension_numbers = #tpu.dot_dimension_numbers<[1], [0], [0], [1], [0, 0, 1, 1], [], []>} : vector<8x16xf32>, vector<16x64xf32>, vector<8x64xf32> -> vector<8x64xf32>
    %c2_81 = arith.constant 2 : index
    %c0_82 = arith.constant 0 : index
    %c0_83 = arith.constant 0 : index
    %94 = vector.load %arg11[%c2_81, %c0_82, %c0_83] : memref<4x8x64xf32, #tpu.memory_space<vmem>>, vector<1x8x64xf32>
    %95 = vector.shape_cast %94 : vector<1x8x64xf32> to vector<8x64xf32>
    %cst_84 = arith.constant dense<0.000000e+00> : vector<8x64xf32>
    %96 = tpu.matmul %12, %95, %cst_84 {dimension_numbers = #tpu.dot_dimension_numbers<[1], [0], [0], [1], [0, 0, 1, 1], [], []>} : vector<8x8xf32>, vector<8x64xf32>, vector<8x64xf32> -> vector<8x64xf32>
    %97 = arith.addf %93, %96 : vector<8x64xf32>
    %c2_85 = arith.constant 2 : index
    %c0_86 = arith.constant 0 : index
    %c0_87 = arith.constant 0 : index
    %98 = vector.load %arg12[%c2_85, %c0_86, %c0_87] : memref<4x1x64xf32, #tpu.memory_space<vmem>>, vector<1x1x64xf32>
    %99 = vector.shape_cast %98 : vector<1x1x64xf32> to vector<1x64xf32>
    %100 = vector.broadcast %99 : vector<1x64xf32> to vector<8x64xf32>
    %101 = arith.addf %97, %100 : vector<8x64xf32>
    %cst_88 = arith.constant 0.000000e+00 : f32
    %102 = vector.broadcast %cst_88 : f32 to vector<8x64xf32>
    %103 = arith.maximumf %101, %102 : vector<8x64xf32>
    %c2_89 = arith.constant 2 : index
    %c0_90 = arith.constant 0 : index
    %c0_91 = arith.constant 0 : index
    %104 = vector.load %arg13[%c2_89, %c0_90, %c0_91] : memref<4x64x8xf32, #tpu.memory_space<vmem>>, vector<1x64x8xf32>
    %105 = vector.shape_cast %104 : vector<1x64x8xf32> to vector<64x8xf32>
    %cst_92 = arith.constant dense<0.000000e+00> : vector<8x8xf32>
    %106 = tpu.matmul %103, %105, %cst_92 {dimension_numbers = #tpu.dot_dimension_numbers<[1], [0], [0], [1], [0, 0, 1, 1], [], []>} : vector<8x64xf32>, vector<64x8xf32>, vector<8x8xf32> -> vector<8x8xf32>
    %c2_93 = arith.constant 2 : index
    %c0_94 = arith.constant 0 : index
    %c0_95 = arith.constant 0 : index
    %107 = vector.load %arg14[%c2_93, %c0_94, %c0_95] : memref<4x1x8xf32, #tpu.memory_space<vmem>>, vector<1x1x8xf32>
    %108 = vector.shape_cast %107 : vector<1x1x8xf32> to vector<1x8xf32>
    %109 = vector.broadcast %108 : vector<1x8xf32> to vector<8x8xf32>
    %110 = arith.addf %106, %109 : vector<8x8xf32>
    %111 = math.tanh %110 : vector<8x8xf32>
    %c2_96 = arith.constant 2 : index
    %c0_97 = arith.constant 0 : index
    %c0_98 = arith.constant 0 : index
    %112 = vector.load %arg15[%c2_96, %c0_97, %c0_98] : memref<4x64x8xf32, #tpu.memory_space<vmem>>, vector<1x64x8xf32>
    %113 = vector.shape_cast %112 : vector<1x64x8xf32> to vector<64x8xf32>
    %cst_99 = arith.constant dense<0.000000e+00> : vector<8x8xf32>
    %114 = tpu.matmul %103, %113, %cst_99 {dimension_numbers = #tpu.dot_dimension_numbers<[1], [0], [0], [1], [0, 0, 1, 1], [], []>} : vector<8x64xf32>, vector<64x8xf32>, vector<8x8xf32> -> vector<8x8xf32>
    %c2_100 = arith.constant 2 : index
    %c0_101 = arith.constant 0 : index
    %c0_102 = arith.constant 0 : index
    %115 = vector.load %arg16[%c2_100, %c0_101, %c0_102] : memref<4x1x8xf32, #tpu.memory_space<vmem>>, vector<1x1x8xf32>
    %116 = vector.shape_cast %115 : vector<1x1x8xf32> to vector<1x8xf32>
    %117 = vector.broadcast %116 : vector<1x8xf32> to vector<8x8xf32>
    %118 = arith.addf %114, %117 : vector<8x8xf32>
    %119 = math.exp %111 : vector<8x8xf32>
    %120 = arith.mulf %90, %119 : vector<8x8xf32>
    %121 = arith.addf %120, %118 : vector<8x8xf32>
    %cst_103 = arith.constant dense<0.000000e+00> : vector<8x16xf32>
    %122 = tpu.matmul %88, %14, %cst_103 {dimension_numbers = #tpu.dot_dimension_numbers<[1], [0], [0], [1], [0, 0, 1, 1], [], []>} : vector<8x16xf32>, vector<16x16xf32>, vector<8x16xf32> -> vector<8x16xf32>
    %cst_104 = arith.constant dense<0.000000e+00> : vector<8x16xf32>
    %123 = tpu.matmul %121, %15, %cst_104 {dimension_numbers = #tpu.dot_dimension_numbers<[1], [0], [0], [1], [0, 0, 1, 1], [], []>} : vector<8x8xf32>, vector<8x16xf32>, vector<8x16xf32> -> vector<8x16xf32>
    %124 = arith.addf %122, %123 : vector<8x16xf32>
    %125 = arith.addf %89, %111 : vector<8x8xf32>
    %cst_105 = arith.constant dense<0.000000e+00> : vector<8x8xf32>
    %126 = tpu.matmul %124, %13, %cst_105 {dimension_numbers = #tpu.dot_dimension_numbers<[1], [0], [0], [1], [0, 0, 1, 1], [], []>} : vector<8x16xf32>, vector<16x8xf32>, vector<8x8xf32> -> vector<8x8xf32>
    %c3 = arith.constant 3 : index
    %c0_106 = arith.constant 0 : index
    %c0_107 = arith.constant 0 : index
    %127 = vector.load %arg10[%c3, %c0_106, %c0_107] : memref<4x16x64xf32, #tpu.memory_space<vmem>>, vector<1x16x64xf32>
    %128 = vector.shape_cast %127 : vector<1x16x64xf32> to vector<16x64xf32>
    %cst_108 = arith.constant dense<0.000000e+00> : vector<8x64xf32>
    %129 = tpu.matmul %124, %128, %cst_108 {dimension_numbers = #tpu.dot_dimension_numbers<[1], [0], [0], [1], [0, 0, 1, 1], [], []>} : vector<8x16xf32>, vector<16x64xf32>, vector<8x64xf32> -> vector<8x64xf32>
    %c3_109 = arith.constant 3 : index
    %c0_110 = arith.constant 0 : index
    %c0_111 = arith.constant 0 : index
    %130 = vector.load %arg11[%c3_109, %c0_110, %c0_111] : memref<4x8x64xf32, #tpu.memory_space<vmem>>, vector<1x8x64xf32>
    %131 = vector.shape_cast %130 : vector<1x8x64xf32> to vector<8x64xf32>
    %cst_112 = arith.constant dense<0.000000e+00> : vector<8x64xf32>
    %132 = tpu.matmul %12, %131, %cst_112 {dimension_numbers = #tpu.dot_dimension_numbers<[1], [0], [0], [1], [0, 0, 1, 1], [], []>} : vector<8x8xf32>, vector<8x64xf32>, vector<8x64xf32> -> vector<8x64xf32>
    %133 = arith.addf %129, %132 : vector<8x64xf32>
    %c3_113 = arith.constant 3 : index
    %c0_114 = arith.constant 0 : index
    %c0_115 = arith.constant 0 : index
    %134 = vector.load %arg12[%c3_113, %c0_114, %c0_115] : memref<4x1x64xf32, #tpu.memory_space<vmem>>, vector<1x1x64xf32>
    %135 = vector.shape_cast %134 : vector<1x1x64xf32> to vector<1x64xf32>
    %136 = vector.broadcast %135 : vector<1x64xf32> to vector<8x64xf32>
    %137 = arith.addf %133, %136 : vector<8x64xf32>
    %cst_116 = arith.constant 0.000000e+00 : f32
    %138 = vector.broadcast %cst_116 : f32 to vector<8x64xf32>
    %139 = arith.maximumf %137, %138 : vector<8x64xf32>
    %c3_117 = arith.constant 3 : index
    %c0_118 = arith.constant 0 : index
    %c0_119 = arith.constant 0 : index
    %140 = vector.load %arg13[%c3_117, %c0_118, %c0_119] : memref<4x64x8xf32, #tpu.memory_space<vmem>>, vector<1x64x8xf32>
    %141 = vector.shape_cast %140 : vector<1x64x8xf32> to vector<64x8xf32>
    %cst_120 = arith.constant dense<0.000000e+00> : vector<8x8xf32>
    %142 = tpu.matmul %139, %141, %cst_120 {dimension_numbers = #tpu.dot_dimension_numbers<[1], [0], [0], [1], [0, 0, 1, 1], [], []>} : vector<8x64xf32>, vector<64x8xf32>, vector<8x8xf32> -> vector<8x8xf32>
    %c3_121 = arith.constant 3 : index
    %c0_122 = arith.constant 0 : index
    %c0_123 = arith.constant 0 : index
    %143 = vector.load %arg14[%c3_121, %c0_122, %c0_123] : memref<4x1x8xf32, #tpu.memory_space<vmem>>, vector<1x1x8xf32>
    %144 = vector.shape_cast %143 : vector<1x1x8xf32> to vector<1x8xf32>
    %145 = vector.broadcast %144 : vector<1x8xf32> to vector<8x8xf32>
    %146 = arith.addf %142, %145 : vector<8x8xf32>
    %147 = math.tanh %146 : vector<8x8xf32>
    %c3_124 = arith.constant 3 : index
    %c0_125 = arith.constant 0 : index
    %c0_126 = arith.constant 0 : index
    %148 = vector.load %arg15[%c3_124, %c0_125, %c0_126] : memref<4x64x8xf32, #tpu.memory_space<vmem>>, vector<1x64x8xf32>
    %149 = vector.shape_cast %148 : vector<1x64x8xf32> to vector<64x8xf32>
    %cst_127 = arith.constant dense<0.000000e+00> : vector<8x8xf32>
    %150 = tpu.matmul %139, %149, %cst_127 {dimension_numbers = #tpu.dot_dimension_numbers<[1], [0], [0], [1], [0, 0, 1, 1], [], []>} : vector<8x64xf32>, vector<64x8xf32>, vector<8x8xf32> -> vector<8x8xf32>
    %c3_128 = arith.constant 3 : index
    %c0_129 = arith.constant 0 : index
    %c0_130 = arith.constant 0 : index
    %151 = vector.load %arg16[%c3_128, %c0_129, %c0_130] : memref<4x1x8xf32, #tpu.memory_space<vmem>>, vector<1x1x8xf32>
    %152 = vector.shape_cast %151 : vector<1x1x8xf32> to vector<1x8xf32>
    %153 = vector.broadcast %152 : vector<1x8xf32> to vector<8x8xf32>
    %154 = arith.addf %150, %153 : vector<8x8xf32>
    %155 = math.exp %147 : vector<8x8xf32>
    %156 = arith.mulf %126, %155 : vector<8x8xf32>
    %157 = arith.addf %156, %154 : vector<8x8xf32>
    %cst_131 = arith.constant dense<0.000000e+00> : vector<8x16xf32>
    %158 = tpu.matmul %124, %14, %cst_131 {dimension_numbers = #tpu.dot_dimension_numbers<[1], [0], [0], [1], [0, 0, 1, 1], [], []>} : vector<8x16xf32>, vector<16x16xf32>, vector<8x16xf32> -> vector<8x16xf32>
    %cst_132 = arith.constant dense<0.000000e+00> : vector<8x16xf32>
    %159 = tpu.matmul %157, %15, %cst_132 {dimension_numbers = #tpu.dot_dimension_numbers<[1], [0], [0], [1], [0, 0, 1, 1], [], []>} : vector<8x8xf32>, vector<8x16xf32>, vector<8x16xf32> -> vector<8x16xf32>
    %160 = arith.addf %158, %159 : vector<8x16xf32>
    %161 = arith.addf %125, %147 : vector<8x8xf32>
    %c0_133 = arith.constant 0 : index
    %c0_134 = arith.constant 0 : index
    %162 = vector.load %arg17[%c0_133, %c0_134] : memref<8x16xf32, #tpu.memory_space<vmem>>, vector<8x16xf32>
    tpu.vector_store %arg17[%c0_133, %c0_134], %160 {strides = array<i32>} : memref<8x16xf32, #tpu.memory_space<vmem>>, vector<8x16xf32>,
    %cst_135 = arith.constant dense<0.000000e+00> : vector<8xf32>
    %163 = vector.multi_reduction <add>, %161, %cst_135 [1] : vector<8x8xf32> to vector<8xf32>
    %164 = vector.shape_cast %163 : vector<8xf32> to vector<8x1xf32>
    %c0_136 = arith.constant 0 : index
    %c0_137 = arith.constant 0 : index
    %165 = vector.load %arg18[%c0_136, %c0_137] : memref<8x1xf32, #tpu.memory_space<vmem>>, vector<8x1xf32>
    tpu.vector_store %arg18[%c0_136, %c0_137], %164 {strides = array<i32>} : memref<8x1xf32, #tpu.memory_space<vmem>>, vector<8x1xf32>,
    return
  }
  func.func @transform_0(%arg0: i32) -> (i32, i32) {
    %c0_i32 = arith.constant 0 : i32
    %c0_i32_0 = arith.constant 0 : i32
    return %arg0, %c0_i32 : i32, i32
  }
  func.func @transform_1(%arg0: i32) -> (i32, i32) {
    %c0_i32 = arith.constant 0 : i32
    %c0_i32_0 = arith.constant 0 : i32
    return %arg0, %c0_i32 : i32, i32
  }
  func.func @transform_2(%arg0: i32) -> (i32, i32) {
    %c0_i32 = arith.constant 0 : i32
    %c0_i32_0 = arith.constant 0 : i32
    %c0_i32_1 = arith.constant 0 : i32
    return %c0_i32, %c0_i32_0 : i32, i32
  }
  func.func @transform_3(%arg0: i32) -> (i32, i32) {
    %c0_i32 = arith.constant 0 : i32
    %c0_i32_0 = arith.constant 0 : i32
    %c0_i32_1 = arith.constant 0 : i32
    return %c0_i32, %c0_i32_0 : i32, i32
  }
  func.func @transform_4(%arg0: i32) -> (i32, i32) {
    %c0_i32 = arith.constant 0 : i32
    %c0_i32_0 = arith.constant 0 : i32
    %c0_i32_1 = arith.constant 0 : i32
    return %c0_i32, %c0_i32_0 : i32, i32
  }
  func.func @transform_5(%arg0: i32) -> (i32, i32) {
    %c0_i32 = arith.constant 0 : i32
    %c0_i32_0 = arith.constant 0 : i32
    %c0_i32_1 = arith.constant 0 : i32
    return %c0_i32, %c0_i32_0 : i32, i32
  }
  func.func @transform_6(%arg0: i32) -> (i32, i32) {
    %c0_i32 = arith.constant 0 : i32
    %c0_i32_0 = arith.constant 0 : i32
    %c0_i32_1 = arith.constant 0 : i32
    return %c0_i32, %c0_i32_0 : i32, i32
  }
  func.func @transform_7(%arg0: i32) -> (i32, i32) {
    %c0_i32 = arith.constant 0 : i32
    %c0_i32_0 = arith.constant 0 : i32
    %c0_i32_1 = arith.constant 0 : i32
    return %c0_i32, %c0_i32_0 : i32, i32
  }
  func.func @transform_8(%arg0: i32) -> (i32, i32) {
    %c0_i32 = arith.constant 0 : i32
    %c0_i32_0 = arith.constant 0 : i32
    %c0_i32_1 = arith.constant 0 : i32
    return %c0_i32, %c0_i32_0 : i32, i32
  }
  func.func @transform_9(%arg0: i32) -> (i32, i32, i32) {
    %c0_i32 = arith.constant 0 : i32
    %c0_i32_0 = arith.constant 0 : i32
    %c0_i32_1 = arith.constant 0 : i32
    %c0_i32_2 = arith.constant 0 : i32
    return %c0_i32, %c0_i32_0, %c0_i32_1 : i32, i32, i32
  }
  func.func @transform_10(%arg0: i32) -> (i32, i32, i32) {
    %c0_i32 = arith.constant 0 : i32
    %c0_i32_0 = arith.constant 0 : i32
    %c0_i32_1 = arith.constant 0 : i32
    %c0_i32_2 = arith.constant 0 : i32
    return %c0_i32, %c0_i32_0, %c0_i32_1 : i32, i32, i32
  }
  func.func @transform_11(%arg0: i32) -> (i32, i32, i32) {
    %c0_i32 = arith.constant 0 : i32
    %c0_i32_0 = arith.constant 0 : i32
    %c0_i32_1 = arith.constant 0 : i32
    %c0_i32_2 = arith.constant 0 : i32
    return %c0_i32, %c0_i32_0, %c0_i32_1 : i32, i32, i32
  }
  func.func @transform_12(%arg0: i32) -> (i32, i32, i32) {
    %c0_i32 = arith.constant 0 : i32
    %c0_i32_0 = arith.constant 0 : i32
    %c0_i32_1 = arith.constant 0 : i32
    %c0_i32_2 = arith.constant 0 : i32
    return %c0_i32, %c0_i32_0, %c0_i32_1 : i32, i32, i32
  }
  func.func @transform_13(%arg0: i32) -> (i32, i32, i32) {
    %c0_i32 = arith.constant 0 : i32
    %c0_i32_0 = arith.constant 0 : i32
    %c0_i32_1 = arith.constant 0 : i32
    %c0_i32_2 = arith.constant 0 : i32
    return %c0_i32, %c0_i32_0, %c0_i32_1 : i32, i32, i32
  }
  func.func @transform_14(%arg0: i32) -> (i32, i32, i32) {
    %c0_i32 = arith.constant 0 : i32
    %c0_i32_0 = arith.constant 0 : i32
    %c0_i32_1 = arith.constant 0 : i32
    %c0_i32_2 = arith.constant 0 : i32
    return %c0_i32, %c0_i32_0, %c0_i32_1 : i32, i32, i32
  }
  func.func @transform_15(%arg0: i32) -> (i32, i32, i32) {
    %c0_i32 = arith.constant 0 : i32
    %c0_i32_0 = arith.constant 0 : i32
    %c0_i32_1 = arith.constant 0 : i32
    %c0_i32_2 = arith.constant 0 : i32
    return %c0_i32, %c0_i32_0, %c0_i32_1 : i32, i32, i32
  }
  func.func @transform_16(%arg0: i32) -> (i32, i32) {
    %c0_i32 = arith.constant 0 : i32
    %c0_i32_0 = arith.constant 0 : i32
    return %arg0, %c0_i32 : i32, i32
  }
  func.func @transform_17(%arg0: i32) -> (i32, i32) {
    %c0_i32 = arith.constant 0 : i32
    %c0_i32_0 = arith.constant 0 : i32
    return %arg0, %c0_i32 : i32, i32
  }
}

</mosaic_0001>

<llo_original>
// kernel: normalizing_flow_forward.1
$region0: #{normalizing_flow_forward.1}
  #allocation0 [shape = 'u32[]', space=smem, size = 0x4, offset = 0x4, fixed_abs, tag = 'smem constant byte address 0x4 - core index']
  #allocation1 [shape = 'u32[144,128]{1,0:T(1,128)}', space=vmem, size = 0x12000, scoped, tag = 'internal scratch']
  %s0 = inlined_call_operand.hbm [shape: f32[8,16], index: 0, kind: input, shape index: {}]
  %s1 = inlined_call_operand.hbm [shape: f32[8,8], index: 1, kind: input, shape index: {}]
  %s2 = inlined_call_operand.hbm [shape: f32[8,8], index: 2, kind: input, shape index: {}]
  %s3 = inlined_call_operand.hbm [shape: f32[1,8], index: 3, kind: input, shape index: {}]
  %s4 = inlined_call_operand.vmem [shape: f32[8,8], index: 4, kind: input, shape index: {}]
  %s5 = inlined_call_operand.hbm [shape: f32[1,8], index: 5, kind: input, shape index: {}]
  %s6 = inlined_call_operand.hbm [shape: f32[16,8], index: 6, kind: input, shape index: {}]
  %s7 = inlined_call_operand.hbm [shape: f32[16,16], index: 7, kind: input, shape index: {}]
  %s8 = inlined_call_operand.vmem [shape: f32[8,16], index: 8, kind: input, shape index: {}]
  %s9 = inlined_call_operand.hbm [shape: f32[4,16,64], index: 9, kind: input, shape index: {}]
  %s10 = inlined_call_operand.hbm [shape: f32[4,8,64], index: 10, kind: input, shape index: {}]
  %s11 = inlined_call_operand.hbm [shape: f32[4,1,64], index: 11, kind: input, shape index: {}]
  %s12 = inlined_call_operand.hbm [shape: f32[4,64,8], index: 12, kind: input, shape index: {}]
  %s13 = inlined_call_operand.vmem [shape: f32[4,1,8], index: 13, kind: input, shape index: {}]
  %s14 = inlined_call_operand.hbm [shape: f32[4,64,8], index: 14, kind: input, shape index: {}]
  %s15 = inlined_call_operand.vmem [shape: f32[4,1,8], index: 15, kind: input, shape index: {}]
  %s16 = inlined_call_operand.hbm [shape: f32[8,16], index: 16, kind: output, shape index: {0}]
  %s17 = inlined_call_operand.vmem [shape: f32[8,1], index: 17, kind: output, shape index: {1}]
  %18 = xla_tuple %s16, %s17
  %s19 = sld [smem:[#allocation0]]
  $region130: #{normalizing_flow_forward.1} parent=0
    _
  %s21 = ssub.s32 1, %s19
  %s22 = scalar_select 0, %s21, %s19
  $region1: #{normalizing_flow_forward.1} parent=0
    #allocation2 [shape = 'u8[4096]{0}', space=vmem, size = 0x1000, scoped, tag = 'input window, operand 0, single buffered']
    #allocation3 [shape = 's32[1]{0}', space=sflag, size = 0x4, scoped, tag = 'scoped memory for normalizing_flow_forward.1']
    #allocation4 [shape = 's32[1]{0}', space=sflag, size = 0x4, scoped, tag = 'scoped memory for normalizing_flow_forward.1']
    #allocation5 [shape = 'u8[4096]{0}', space=vmem, size = 0x1000, scoped, tag = 'input window, operand 1, single buffered']
    #allocation6 [shape = 's32[1]{0}', space=sflag, size = 0x4, scoped, tag = 'scoped memory for normalizing_flow_forward.1']
    #allocation7 [shape = 'u8[4096]{0}', space=vmem, size = 0x1000, scoped, tag = 'input window, operand 2, single buffered']
    #allocation8 [shape = 'u8[512]{0}', space=vmem, size = 0x400, scoped, tag = 'input window, operand 3, single buffered']
    #allocation9 [shape = 's32[1]{0}', space=sflag, size = 0x4, scoped, tag = 'scoped memory for normalizing_flow_forward.1']
    #allocation10 [shape = 'u8[512]{0}', space=vmem, size = 0x400, scoped, tag = 'input window, operand 5, single buffered']
    #allocation11 [shape = 'u8[8192]{0}', space=vmem, size = 0x2000, scoped, tag = 'input window, operand 6, single buffered']
    #allocation12 [shape = 's32[1]{0}', space=sflag, size = 0x4, scoped, tag = 'scoped memory for normalizing_flow_forward.1']
    #allocation13 [shape = 'u8[8192]{0}', space=vmem, size = 0x2000, scoped, tag = 'input window, operand 7, single buffered']
    #allocation14 [shape = 'u8[32768]{0}', space=vmem, size = 0x8000, scoped, tag = 'input window, operand 9, single buffered']
    #allocation15 [shape = 's32[1]{0}', space=sflag, size = 0x4, scoped, tag = 'scoped memory for normalizing_flow_forward.1']
    #allocation16 [shape = 'u8[16384]{0}', space=vmem, size = 0x4000, scoped, tag = 'input window, operand 10, single buffered']
    #allocation17 [shape = 'u8[2048]{0}', space=vmem, size = 0x800, scoped, tag = 'input window, operand 11, single buffered']
    #allocation18 [shape = 's32[1]{0}', space=sflag, size = 0x4, scoped, tag = 'scoped memory for normalizing_flow_forward.1']
    #allocation19 [shape = 'u8[131072]{0}', space=vmem, size = 0x20000, scoped, tag = 'input window, operand 12, single buffered']
    #allocation20 [shape = 'u8[131072]{0}', space=vmem, size = 0x20000, scoped, tag = 'input window, operand 14, single buffered']
    #allocation21 [shape = 's32[1]{0}', space=sflag, size = 0x4, scoped, tag = 'scoped memory for normalizing_flow_forward.1']
    #allocation22 [shape = 'u8[4096]{0}', space=vmem, size = 0x1000, scoped, tag = 'output window, operand 0, single buffered']
    %23 = vsyncpa [#allocation3], 0
    %24 = vsyncpa [#allocation6], 0
    %25 = vsyncpa [#allocation9], 0
    %26 = vsyncpa [#allocation12], 0
    %27 = vsyncpa [#allocation15], 0
    %28 = vsyncpa [#allocation18], 0
    %29 = vsyncpa [#allocation21], 0
    %30 = vsyncpa [#allocation4], 0
    // Predicated region
    $region2: #{normalizing_flow_forward.1} parent=1 // pred_check
      _
    $region3: #{normalizing_flow_forward.1} parent=1 // pred_check_branch
      %32 = sbr.rel (0) target = $region5
    $region4: #{normalizing_flow_forward.1} parent=1 // pred_region
      %s34 = ssub.s32 128, 128
      %35 = vsyncadd [#allocation3], %s34
      %s37 = sshll.u32 [#allocation2], 4
      %s38 = int_to_ptr.vmem [resolvable:$true] %s37
      %40 = dma.hbm_to_vmem [thread:$0]  %s0, 128, %s38, [#allocation3]
    $region5: #{normalizing_flow_forward.1} parent=1 // pred_fallthru
      _
    // Predicated region
    $region6: #{normalizing_flow_forward.1} parent=1 // pred_check
      _
    $region7: #{normalizing_flow_forward.1} parent=1 // pred_check_branch
      %42 = sbr.rel (0) target = $region9
    $region8: #{normalizing_flow_forward.1} parent=1 // pred_region
      %s44 = ssub.s32 128, 128
      %45 = vsyncadd [#allocation6], %s44
      %s47 = sshll.u32 [#allocation5], 4
      %s48 = int_to_ptr.vmem [resolvable:$true] %s47
      %50 = dma.hbm_to_vmem [thread:$0]  %s1, 128, %s48, [#allocation6]
    $region9: #{normalizing_flow_forward.1} parent=1 // pred_fallthru
      _
    // Predicated region
    $region10: #{normalizing_flow_forward.1} parent=1 // pred_check
      _
    $region11: #{normalizing_flow_forward.1} parent=1 // pred_check_branch
      %52 = sbr.rel (0) target = $region13
    $region12: #{normalizing_flow_forward.1} parent=1 // pred_region
      %s54 = ssub.s32 128, 128
      %55 = vsyncadd [#allocation6], %s54
      %s57 = sshll.u32 [#allocation7], 4
      %s58 = int_to_ptr.vmem [resolvable:$true] %s57
      %60 = dma.hbm_to_vmem [thread:$0]  %s2, 128, %s58, [#allocation6]
    $region13: #{normalizing_flow_forward.1} parent=1 // pred_fallthru
      _
    // Predicated region
    $region14: #{normalizing_flow_forward.1} parent=1 // pred_check
      _
    $region15: #{normalizing_flow_forward.1} parent=1 // pred_check_branch
      %62 = sbr.rel (0) target = $region17
    $region16: #{normalizing_flow_forward.1} parent=1 // pred_region
      %s64 = ssub.s32 16, 16
      %65 = vsyncadd [#allocation9], %s64
      %s67 = sshll.u32 [#allocation8], 4
      %s68 = int_to_ptr.vmem [resolvable:$true] %s67
      %70 = dma.hbm_to_vmem [thread:$0]  %s3, 16, %s68, [#allocation9]
    $region17: #{normalizing_flow_forward.1} parent=1 // pred_fallthru
      _
    // Predicated region
    $region18: #{normalizing_flow_forward.1} parent=1 // pred_check
      _
    $region19: #{normalizing_flow_forward.1} parent=1 // pred_check_branch
      %72 = sbr.rel (0) target = $region21
    $region20: #{normalizing_flow_forward.1} parent=1 // pred_region
      _
    $region21: #{normalizing_flow_forward.1} parent=1 // pred_fallthru
      _
    // Predicated region
    $region22: #{normalizing_flow_forward.1} parent=1 // pred_check
      _
    $region23: #{normalizing_flow_forward.1} parent=1 // pred_check_branch
      %74 = sbr.rel (0) target = $region25
    $region24: #{normalizing_flow_forward.1} parent=1 // pred_region
      %s76 = ssub.s32 16, 16
      %77 = vsyncadd [#allocation9], %s76
      %s79 = sshll.u32 [#allocation10], 4
      %s80 = int_to_ptr.vmem [resolvable:$true] %s79
      %82 = dma.hbm_to_vmem [thread:$0]  %s5, 16, %s80, [#allocation9]
    $region25: #{normalizing_flow_forward.1} parent=1 // pred_fallthru
      _
    // Predicated region
    $region26: #{normalizing_flow_forward.1} parent=1 // pred_check
      _
    $region27: #{normalizing_flow_forward.1} parent=1 // pred_check_branch
      %84 = sbr.rel (0) target = $region29
    $region28: #{normalizing_flow_forward.1} parent=1 // pred_region
      %s86 = ssub.s32 256, 256
      %87 = vsyncadd [#allocation12], %s86
      %s88 = sshll.u32 [#allocation11], 4
      %s89 = int_to_ptr.vmem [resolvable:$true] %s88
      %94 = dma.hbm_to_vmem [thread:$0]  %s6, 256, %s89, [#allocation12], 128, 128, 8
    $region29: #{normalizing_flow_forward.1} parent=1 // pred_fallthru
      _
    // Predicated region
    $region30: #{normalizing_flow_forward.1} parent=1 // pred_check
      _
    $region31: #{normalizing_flow_forward.1} parent=1 // pred_check_branch
      %96 = sbr.rel (0) target = $region33
    $region32: #{normalizing_flow_forward.1} parent=1 // pred_region
      %s98 = ssub.s32 256, 256
      %99 = vsyncadd [#allocation12], %s98
      %s100 = sshll.u32 [#allocation13], 4
      %s101 = int_to_ptr.vmem [resolvable:$true] %s100
      %106 = dma.hbm_to_vmem [thread:$0]  %s7, 256, %s101, [#allocation12], 128, 128, 8
    $region33: #{normalizing_flow_forward.1} parent=1 // pred_fallthru
      _
    // Predicated region
    $region34: #{normalizing_flow_forward.1} parent=1 // pred_check
      _
    $region35: #{normalizing_flow_forward.1} parent=1 // pred_check_branch
      %108 = sbr.rel (0) target = $region37
    $region36: #{normalizing_flow_forward.1} parent=1 // pred_region
      _
    $region37: #{normalizing_flow_forward.1} parent=1 // pred_fallthru
      _
    // Predicated region
    $region38: #{normalizing_flow_forward.1} parent=1 // pred_check
      _
    $region39: #{normalizing_flow_forward.1} parent=1 // pred_check_branch
      %110 = sbr.rel (0) target = $region41
    $region40: #{normalizing_flow_forward.1} parent=1 // pred_region
      %s112 = ssub.s32 1024, 1024
      %113 = vsyncadd [#allocation15], %s112
      %s114 = sshll.u32 [#allocation14], 4
      %s115 = int_to_ptr.vmem [resolvable:$true] %s114
      %120 = dma.hbm_to_vmem [thread:$0]  %s9, 1024, %s115, [#allocation15], 128, 128, 8
    $region41: #{normalizing_flow_forward.1} parent=1 // pred_fallthru
      _
    // Predicated region
    $region42: #{normalizing_flow_forward.1} parent=1 // pred_check
      _
    $region43: #{normalizing_flow_forward.1} parent=1 // pred_check_branch
      %122 = sbr.rel (0) target = $region45
    $region44: #{normalizing_flow_forward.1} parent=1 // pred_region
      %s124 = ssub.s32 512, 512
      %125 = vsyncadd [#allocation15], %s124
      %s126 = sshll.u32 [#allocation16], 4
      %s127 = int_to_ptr.vmem [resolvable:$true] %s126
      %132 = dma.hbm_to_vmem [thread:$0]  %s10, 512, %s127, [#allocation15], 128, 128, 8
    $region45: #{normalizing_flow_forward.1} parent=1 // pred_fallthru
      _
    // Predicated region
    $region46: #{normalizing_flow_forward.1} parent=1 // pred_check
      _
    $region47: #{normalizing_flow_forward.1} parent=1 // pred_check_branch
      %134 = sbr.rel (0) target = $region49
    $region48: #{normalizing_flow_forward.1} parent=1 // pred_region
      %s136 = ssub.s32 64, 64
      %137 = vsyncadd [#allocation18], %s136
      %s138 = sshll.u32 [#allocation17], 4
      %s139 = int_to_ptr.vmem [resolvable:$true] %s138
      %144 = dma.hbm_to_vmem [thread:$0]  %s11, 64, %s139, [#allocation18], 16, 16, 1
    $region49: #{normalizing_flow_forward.1} parent=1 // pred_fallthru
      _
    // Predicated region
    $region50: #{normalizing_flow_forward.1} parent=1 // pred_check
      _
    $region51: #{normalizing_flow_forward.1} parent=1 // pred_check_branch
      %146 = sbr.rel (0) target = $region53
    $region52: #{normalizing_flow_forward.1} parent=1 // pred_region
      %s148 = ssub.s32 4096, 4096
      %149 = vsyncadd [#allocation18], %s148
      %s150 = sshll.u32 [#allocation19], 4
      %s151 = int_to_ptr.vmem [resolvable:$true] %s150
      %156 = dma.hbm_to_vmem [thread:$0]  %s12, 4096, %s151, [#allocation18], 128, 128, 8
    $region53: #{normalizing_flow_forward.1} parent=1 // pred_fallthru
      _
    // Predicated region
    $region54: #{normalizing_flow_forward.1} parent=1 // pred_check
      _
    $region55: #{normalizing_flow_forward.1} parent=1 // pred_check_branch
      %158 = sbr.rel (0) target = $region57
    $region56: #{normalizing_flow_forward.1} parent=1 // pred_region
      _
    $region57: #{normalizing_flow_forward.1} parent=1 // pred_fallthru
      _
    // Predicated region
    $region58: #{normalizing_flow_forward.1} parent=1 // pred_check
      _
    $region59: #{normalizing_flow_forward.1} parent=1 // pred_check_branch
      %160 = sbr.rel (0) target = $region61
    $region60: #{normalizing_flow_forward.1} parent=1 // pred_region
      %s162 = ssub.s32 4096, 4096
      %163 = vsyncadd [#allocation21], %s162
      %s164 = sshll.u32 [#allocation20], 4
      %s165 = int_to_ptr.vmem [resolvable:$true] %s164
      %170 = dma.hbm_to_vmem [thread:$0]  %s14, 4096, %s165, [#allocation21], 128, 128, 8
    $region61: #{normalizing_flow_forward.1} parent=1 // pred_fallthru
      _
    // Predicated region
    $region62: #{normalizing_flow_forward.1} parent=1 // pred_check
      _
    $region63: #{normalizing_flow_forward.1} parent=1 // pred_check_branch
      %172 = sbr.rel (0) target = $region65
    $region64: #{normalizing_flow_forward.1} parent=1 // pred_region
      _
    $region65: #{normalizing_flow_forward.1} parent=1 // pred_fallthru
      _
    // Predicated region
    $region66: #{normalizing_flow_forward.1} parent=1 // pred_check
      _
    $region67: #{normalizing_flow_forward.1} parent=1 // pred_check_branch
      %174 = sbr.rel (0) target = $region69
    $region68: #{normalizing_flow_forward.1} parent=1 // pred_region
      %175 = dma.done [#allocation3], 128
    $region69: #{normalizing_flow_forward.1} parent=1 // pred_fallthru
      _
    // Predicated region
    $region70: #{normalizing_flow_forward.1} parent=1 // pred_check
      _
    $region71: #{normalizing_flow_forward.1} parent=1 // pred_check_branch
      %177 = sbr.rel (0) target = $region73
    $region72: #{normalizing_flow_forward.1} parent=1 // pred_region
      %178 = dma.done [#allocation6], 128
    $region73: #{normalizing_flow_forward.1} parent=1 // pred_fallthru
      _
    // Predicated region
    $region74: #{normalizing_flow_forward.1} parent=1 // pred_check
      _
    $region75: #{normalizing_flow_forward.1} parent=1 // pred_check_branch
      %180 = sbr.rel (0) target = $region77
    $region76: #{normalizing_flow_forward.1} parent=1 // pred_region
      %181 = dma.done [#allocation6], 128
    $region77: #{normalizing_flow_forward.1} parent=1 // pred_fallthru
      _
    // Predicated region
    $region78: #{normalizing_flow_forward.1} parent=1 // pred_check
      _
    $region79: #{normalizing_flow_forward.1} parent=1 // pred_check_branch
      %183 = sbr.rel (0) target = $region81
    $region80: #{normalizing_flow_forward.1} parent=1 // pred_region
      %184 = dma.done [#allocation9], 16
    $region81: #{normalizing_flow_forward.1} parent=1 // pred_fallthru
      _
    // Predicated region
    $region82: #{normalizing_flow_forward.1} parent=1 // pred_check
      _
    $region83: #{normalizing_flow_forward.1} parent=1 // pred_check_branch
      %186 = sbr.rel (0) target = $region85
    $region84: #{normalizing_flow_forward.1} parent=1 // pred_region
      %187 = dma.done [#allocation9], 16
    $region85: #{normalizing_flow_forward.1} parent=1 // pred_fallthru
      _
    // Predicated region
    $region86: #{normalizing_flow_forward.1} parent=1 // pred_check
      _
    $region87: #{normalizing_flow_forward.1} parent=1 // pred_check_branch
      %189 = sbr.rel (0) target = $region89
    $region88: #{normalizing_flow_forward.1} parent=1 // pred_region
      %190 = dma.done [#allocation12], 256
    $region89: #{normalizing_flow_forward.1} parent=1 // pred_fallthru
      _
    // Predicated region
    $region90: #{normalizing_flow_forward.1} parent=1 // pred_check
      _
    $region91: #{normalizing_flow_forward.1} parent=1 // pred_check_branch
      %192 = sbr.rel (0) target = $region93
    $region92: #{normalizing_flow_forward.1} parent=1 // pred_region
      %193 = dma.done [#allocation12], 256
    $region93: #{normalizing_flow_forward.1} parent=1 // pred_fallthru
      _
    // Predicated region
    $region94: #{normalizing_flow_forward.1} parent=1 // pred_check
      _
    $region95: #{normalizing_flow_forward.1} parent=1 // pred_check_branch
      %195 = sbr.rel (0) target = $region97
    $region96: #{normalizing_flow_forward.1} parent=1 // pred_region
      %196 = dma.done [#allocation15], 1024
    $region97: #{normalizing_flow_forward.1} parent=1 // pred_fallthru
      _
    // Predicated region
    $region98: #{normalizing_flow_forward.1} parent=1 // pred_check
      _
    $region99: #{normalizing_flow_forward.1} parent=1 // pred_check_branch
      %198 = sbr.rel (0) target = $region101
    $region100: #{normalizing_flow_forward.1} parent=1 // pred_region
      %199 = dma.done [#allocation15], 512
    $region101: #{normalizing_flow_forward.1} parent=1 // pred_fallthru
      _
    // Predicated region
    $region102: #{normalizing_flow_forward.1} parent=1 // pred_check
      _
    $region103: #{normalizing_flow_forward.1} parent=1 // pred_check_branch
      %201 = sbr.rel (0) target = $region105
    $region104: #{normalizing_flow_forward.1} parent=1 // pred_region
      %202 = dma.done [#allocation18], 64
    $region105: #{normalizing_flow_forward.1} parent=1 // pred_fallthru
      _
    // Predicated region
    $region106: #{normalizing_flow_forward.1} parent=1 // pred_check
      _
    $region107: #{normalizing_flow_forward.1} parent=1 // pred_check_branch
      %204 = sbr.rel (0) target = $region109
    $region108: #{normalizing_flow_forward.1} parent=1 // pred_region
      %205 = dma.done [#allocation18], 4096
    $region109: #{normalizing_flow_forward.1} parent=1 // pred_fallthru
      _
    // Predicated region
    $region110: #{normalizing_flow_forward.1} parent=1 // pred_check
      _
    $region111: #{normalizing_flow_forward.1} parent=1 // pred_check_branch
      %207 = sbr.rel (0) target = $region113
    $region112: #{normalizing_flow_forward.1} parent=1 // pred_region
      %208 = dma.done [#allocation21], 4096
    $region113: #{normalizing_flow_forward.1} parent=1 // pred_fallthru
      _
    %v209 = vld [vmem:[#allocation5] sm:$0xff]
    %v210 = vld [vmem:[#allocation7] sm:$0xff]
    %v211 = vld [vmem:[#allocation8] sm:$0x1]
    %v213 = vlaneseq
    %v214 = vshrl.u32 %v213, 7
    %v215 = vsub.s32 0, %v214
    %v216 = vrot.slane %v211, %v215
    %vm218 = vcmask 64512
    %v220 = vsel %vm218, %v209, 0
    %222 = vmatprep.subr.mxu0 0.0
    %223 = vmatpush1.msra.mxu0 0.0
    %224 = vmatprep.subr.mxu0 0.0
    %225 = vmatpush1.msra.mxu0 0.0
    %226 = vmatprep.subr.mxu0 0.0
    %227 = vmatpush1.msra.mxu0 0.0
    %228 = vmatprep.subr.mxu0 0.0
    %229 = vmatpush1.msra.mxu0 0.0
    %230 = vmatprep.subr.mxu0 0.0
    %231 = vmatpush1.msra.mxu0 0.0
    %232 = vmatprep.subr.mxu0 0.0
    %233 = vmatpush1.msra.mxu0 0.0
    %234 = vmatprep.subr.mxu0 0.0
    %235 = vmatpush1.msra.mxu0 0.0
    %236 = vmatprep.subr.mxu0 0.0
    %237 = vmatpush1.msra.mxu0 0.0
    %238 = vmatprep.subr.mxu0 0.0
    %239 = vmatpush1.msra.mxu0 0.0
    %240 = vmatprep.subr.mxu0 0.0
    %241 = vmatpush1.msra.mxu0 0.0
    %242 = vmatprep.subr.mxu0 0.0
    %243 = vmatpush1.msra.mxu0 0.0
    %244 = vmatprep.subr.mxu0 0.0
    %245 = vmatpush1.msra.mxu0 0.0
    %246 = vmatprep.subr.mxu0 0.0
    %247 = vmatpush1.msra.mxu0 0.0
    %248 = vmatprep.subr.mxu0 0.0
    %249 = vmatpush1.msra.mxu0 0.0
    %250 = vmatprep.subr.mxu0 0.0
    %251 = vmatpush1.msra.mxu0 0.0
    %252 = vmatprep.subr.mxu0 0.0
    %253 = vmatpush1.msra.mxu0 %v210
    %254 = vmatprep.subr.mxu0 0.0
    %255 = vmatpush2.msra.mxu0 0.0
    %256 = vmatprep.subr.mxu0 0.0
    %257 = vmatpush2.msra.mxu0 0.0
    %258 = vmatprep.subr.mxu0 0.0
    %259 = vmatpush2.msra.mxu0 0.0
    %260 = vmatprep.subr.mxu0 0.0
    %261 = vmatpush2.msra.mxu0 0.0
    %262 = vmatprep.subr.mxu0 0.0
    %263 = vmatpush2.msra.mxu0 0.0
    %264 = vmatprep.subr.mxu0 0.0
    %265 = vmatpush2.msra.mxu0 0.0
    %266 = vmatprep.subr.mxu0 0.0
    %267 = vmatpush2.msra.mxu0 0.0
    %268 = vmatprep.subr.mxu0 0.0
    %269 = vmatpush2.msra.mxu0 0.0
    %270 = vmatprep.subr.mxu0 0.0
    %271 = vmatpush2.msra.mxu0 0.0
    %272 = vmatprep.subr.mxu0 0.0
    %273 = vmatpush2.msra.mxu0 0.0
    %274 = vmatprep.subr.mxu0 0.0
    %275 = vmatpush2.msra.mxu0 0.0
    %276 = vmatprep.subr.mxu0 0.0
    %277 = vmatpush2.msra.mxu0 0.0
    %278 = vmatprep.subr.mxu0 0.0
    %279 = vmatpush2.msra.mxu0 0.0
    %280 = vmatprep.subr.mxu0 0.0
    %281 = vmatpush2.msra.mxu0 0.0
    %282 = vmatprep.subr.mxu0 0.0
    %283 = vmatpush2.msra.mxu0 0.0
    %284 = vmatprep.subr.mxu0 0.0
    %285 = vmatpush2.msra.mxu0 0.0
    %286 = vmatprep.mubr.f32.mxu0 0.0
    %287 = vmatmul.mubr.f32.gmra.mxu0 %v220
    %v288 = vpop.f32.mrf.mxu0
    %v289 = vadd.f32 %v216, %v288
    %v290 = vpop.f32.mrf.mxu0
    %291 = vdwg.mxu0
    %v292 = vmax.f32 %v289, 0.0
    %v293 = vld [vmem:[%s4] sm:$0xff]
    %v294 = vld [vmem:[#allocation10] sm:$0x1]
    %v296 = vlaneseq
    %v297 = vshrl.u32 %v296, 7
    %v298 = vsub.s32 0, %v297
    %v299 = vrot.slane %v294, %v298
    %v302 = vsel %vm218, %v292, 0
    %304 = vmatprep.subr.mxu0 0.0
    %305 = vmatpush1.msra.mxu0 0.0
    %306 = vmatprep.subr.mxu0 0.0
    %307 = vmatpush1.msra.mxu0 0.0
    %308 = vmatprep.subr.mxu0 0.0
    %309 = vmatpush1.msra.mxu0 0.0
    %310 = vmatprep.subr.mxu0 0.0
    %311 = vmatpush1.msra.mxu0 0.0
    %312 = vmatprep.subr.mxu0 0.0
    %313 = vmatpush1.msra.mxu0 0.0
    %314 = vmatprep.subr.mxu0 0.0
    %315 = vmatpush1.msra.mxu0 0.0
    %316 = vmatprep.subr.mxu0 0.0
    %317 = vmatpush1.msra.mxu0 0.0
    %318 = vmatprep.subr.mxu0 0.0
    %319 = vmatpush1.msra.mxu0 0.0
    %320 = vmatprep.subr.mxu0 0.0
    %321 = vmatpush1.msra.mxu0 0.0
    %322 = vmatprep.subr.mxu0 0.0
    %323 = vmatpush1.msra.mxu0 0.0
    %324 = vmatprep.subr.mxu0 0.0
    %325 = vmatpush1.msra.mxu0 0.0
    %326 = vmatprep.subr.mxu0 0.0
    %327 = vmatpush1.msra.mxu0 0.0
    %328 = vmatprep.subr.mxu0 0.0
    %329 = vmatpush1.msra.mxu0 0.0
    %330 = vmatprep.subr.mxu0 0.0
    %331 = vmatpush1.msra.mxu0 0.0
    %332 = vmatprep.subr.mxu0 0.0
    %333 = vmatpush1.msra.mxu0 0.0
    %334 = vmatprep.subr.mxu0 0.0
    %335 = vmatpush1.msra.mxu0 %v293
    %336 = vmatprep.subr.mxu0 0.0
    %337 = vmatpush2.msra.mxu0 0.0
    %338 = vmatprep.subr.mxu0 0.0
    %339 = vmatpush2.msra.mxu0 0.0
    %340 = vmatprep.subr.mxu0 0.0
    %341 = vmatpush2.msra.mxu0 0.0
    %342 = vmatprep.subr.mxu0 0.0
    %343 = vmatpush2.msra.mxu0 0.0
    %344 = vmatprep.subr.mxu0 0.0
    %345 = vmatpush2.msra.mxu0 0.0
    %346 = vmatprep.subr.mxu0 0.0
    %347 = vmatpush2.msra.mxu0 0.0
    %348 = vmatprep.subr.mxu0 0.0
    %349 = vmatpush2.msra.mxu0 0.0
    %350 = vmatprep.subr.mxu0 0.0
    %351 = vmatpush2.msra.mxu0 0.0
    %352 = vmatprep.subr.mxu0 0.0
    %353 = vmatpush2.msra.mxu0 0.0
    %354 = vmatprep.subr.mxu0 0.0
    %355 = vmatpush2.msra.mxu0 0.0
    %356 = vmatprep.subr.mxu0 0.0
    %357 = vmatpush2.msra.mxu0 0.0
    %358 = vmatprep.subr.mxu0 0.0
    %359 = vmatpush2.msra.mxu0 0.0
    %360 = vmatprep.subr.mxu0 0.0
    %361 = vmatpush2.msra.mxu0 0.0
    %362 = vmatprep.subr.mxu0 0.0
    %363 = vmatpush2.msra.mxu0 0.0
    %364 = vmatprep.subr.mxu0 0.0
    %365 = vmatpush2.msra.mxu0 0.0
    %366 = vmatprep.subr.mxu0 0.0
    %367 = vmatpush2.msra.mxu0 0.0
    %368 = vmatprep.mubr.f32.mxu0 0.0
    %369 = vmatmul.mubr.f32.gmra.mxu0 %v302
    %v370 = vpop.f32.mrf.mxu0
    %v371 = vadd.f32 %v299, %v370
    %v372 = vpop.f32.mrf.mxu0
    %373 = vdwg.mxu0
    %v374 = vld [vmem:[#allocation11] sm:$0xff]
    %v375 = vld [vmem:[#allocation11 + $0x8] sm:$0xff]
    %v376 = vld [vmem:[#allocation13] sm:$0xff]
    %v377 = vld [vmem:[#allocation13 + $0x8] sm:$0xff]
    %v378 = vld [vmem:[%s8] sm:$0xff]
    %v379 = vld [vmem:[#allocation2] sm:$0xff]
    %vm380 = vcmask 130048
    %v382 = vsel %vm380, %v379, 0
    %384 = vmatprep.subr.mxu0 0.0
    %385 = vmatpush1.msra.mxu0 0.0
    %386 = vmatprep.subr.mxu0 0.0
    %387 = vmatpush1.msra.mxu0 0.0
    %388 = vmatprep.subr.mxu0 0.0
    %389 = vmatpush1.msra.mxu0 0.0
    %390 = vmatprep.subr.mxu0 0.0
    %391 = vmatpush1.msra.mxu0 0.0
    %392 = vmatprep.subr.mxu0 0.0
    %393 = vmatpush1.msra.mxu0 0.0
    %394 = vmatprep.subr.mxu0 0.0
    %395 = vmatpush1.msra.mxu0 0.0
    %396 = vmatprep.subr.mxu0 0.0
    %397 = vmatpush1.msra.mxu0 0.0
    %398 = vmatprep.subr.mxu0 0.0
    %399 = vmatpush1.msra.mxu0 0.0
    %400 = vmatprep.subr.mxu0 0.0
    %401 = vmatpush1.msra.mxu0 0.0
    %402 = vmatprep.subr.mxu0 0.0
    %403 = vmatpush1.msra.mxu0 0.0
    %404 = vmatprep.subr.mxu0 0.0
    %405 = vmatpush1.msra.mxu0 0.0
    %406 = vmatprep.subr.mxu0 0.0
    %407 = vmatpush1.msra.mxu0 0.0
    %408 = vmatprep.subr.mxu0 0.0
    %409 = vmatpush1.msra.mxu0 0.0
    %410 = vmatprep.subr.mxu0 0.0
    %411 = vmatpush1.msra.mxu0 0.0
    %412 = vmatprep.subr.mxu0 0.0
    %413 = vmatpush1.msra.mxu0 %v375
    %414 = vmatprep.subr.mxu0 0.0
    %415 = vmatpush1.msra.mxu0 %v374
    %416 = vmatprep.subr.mxu0 0.0
    %417 = vmatpush2.msra.mxu0 0.0
    %418 = vmatprep.subr.mxu0 0.0
    %419 = vmatpush2.msra.mxu0 0.0
    %420 = vmatprep.subr.mxu0 0.0
    %421 = vmatpush2.msra.mxu0 0.0
    %422 = vmatprep.subr.mxu0 0.0
    %423 = vmatpush2.msra.mxu0 0.0
    %424 = vmatprep.subr.mxu0 0.0
    %425 = vmatpush2.msra.mxu0 0.0
    %426 = vmatprep.subr.mxu0 0.0
    %427 = vmatpush2.msra.mxu0 0.0
    %428 = vmatprep.subr.mxu0 0.0
    %429 = vmatpush2.msra.mxu0 0.0
    %430 = vmatprep.subr.mxu0 0.0
    %431 = vmatpush2.msra.mxu0 0.0
    %432 = vmatprep.subr.mxu0 0.0
    %433 = vmatpush2.msra.mxu0 0.0
    %434 = vmatprep.subr.mxu0 0.0
    %435 = vmatpush2.msra.mxu0 0.0
    %436 = vmatprep.subr.mxu0 0.0
    %437 = vmatpush2.msra.mxu0 0.0
    %438 = vmatprep.subr.mxu0 0.0
    %439 = vmatpush2.msra.mxu0 0.0
    %440 = vmatprep.subr.mxu0 0.0
    %441 = vmatpush2.msra.mxu0 0.0
    %442 = vmatprep.subr.mxu0 0.0
    %443 = vmatpush2.msra.mxu0 0.0
    %444 = vmatprep.subr.mxu0 0.0
    %445 = vmatpush2.msra.mxu0 0.0
    %446 = vmatprep.subr.mxu0 0.0
    %447 = vmatpush2.msra.mxu0 0.0
    %448 = vmatprep.mubr.f32.mxu0 0.0
    %449 = vmatmul.mubr.f32.gmra.mxu0 %v382
    %v450 = vpop.f32.mrf.mxu0
    %v451 = vadd.f32 0.0, %v450
    %v452 = vpop.f32.mrf.mxu0
    %453 = vdwg.mxu0
    %v454 = vld [vmem:[#allocation14] sm:$0xff]
    %v455 = vld [vmem:[#allocation14 + $0x8] sm:$0xff]
    %v456 = vld [vmem:[#allocation16] sm:$0xff]
    %v458 = vsel %vm218, %v371, 0
    %460 = vmatprep.subr.mxu0 0.0
    %461 = vmatpush1.msra.mxu0 0.0
    %462 = vmatprep.subr.mxu0 0.0
    %463 = vmatpush1.msra.mxu0 0.0
    %464 = vmatprep.subr.mxu0 0.0
    %465 = vmatpush1.msra.mxu0 0.0
    %466 = vmatprep.subr.mxu0 0.0
    %467 = vmatpush1.msra.mxu0 0.0
    %468 = vmatprep.subr.mxu0 0.0
    %469 = vmatpush1.msra.mxu0 0.0
    %470 = vmatprep.subr.mxu0 0.0
    %471 = vmatpush1.msra.mxu0 0.0
    %472 = vmatprep.subr.mxu0 0.0
    %473 = vmatpush1.msra.mxu0 0.0
    %474 = vmatprep.subr.mxu0 0.0
    %475 = vmatpush1.msra.mxu0 0.0
    %476 = vmatprep.subr.mxu0 0.0
    %477 = vmatpush1.msra.mxu0 0.0
    %478 = vmatprep.subr.mxu0 0.0
    %479 = vmatpush1.msra.mxu0 0.0
    %480 = vmatprep.subr.mxu0 0.0
    %481 = vmatpush1.msra.mxu0 0.0
    %482 = vmatprep.subr.mxu0 0.0
    %483 = vmatpush1.msra.mxu0 0.0
    %484 = vmatprep.subr.mxu0 0.0
    %485 = vmatpush1.msra.mxu0 0.0
    %486 = vmatprep.subr.mxu0 0.0
    %487 = vmatpush1.msra.mxu0 0.0
    %488 = vmatprep.subr.mxu0 0.0
    %489 = vmatpush1.msra.mxu0 0.0
    %490 = vmatprep.subr.mxu0 0.0
    %491 = vmatpush1.msra.mxu0 %v456
    %492 = vmatprep.subr.mxu0 0.0
    %493 = vmatpush2.msra.mxu0 0.0
    %494 = vmatprep.subr.mxu0 0.0
    %495 = vmatpush2.msra.mxu0 0.0
    %496 = vmatprep.subr.mxu0 0.0
    %497 = vmatpush2.msra.mxu0 0.0
    %498 = vmatprep.subr.mxu0 0.0
    %499 = vmatpush2.msra.mxu0 0.0
    %500 = vmatprep.subr.mxu0 0.0
    %501 = vmatpush2.msra.mxu0 0.0
    %502 = vmatprep.subr.mxu0 0.0
    %503 = vmatpush2.msra.mxu0 0.0
    %504 = vmatprep.subr.mxu0 0.0
    %505 = vmatpush2.msra.mxu0 0.0
    %506 = vmatprep.subr.mxu0 0.0
    %507 = vmatpush2.msra.mxu0 0.0
    %508 = vmatprep.subr.mxu0 0.0
    %509 = vmatpush2.msra.mxu0 0.0
    %510 = vmatprep.subr.mxu0 0.0
    %511 = vmatpush2.msra.mxu0 0.0
    %512 = vmatprep.subr.mxu0 0.0
    %513 = vmatpush2.msra.mxu0 0.0
    %514 = vmatprep.subr.mxu0 0.0
    %515 = vmatpush2.msra.mxu0 0.0
    %516 = vmatprep.subr.mxu0 0.0
    %517 = vmatpush2.msra.mxu0 0.0
    %518 = vmatprep.subr.mxu0 0.0
    %519 = vmatpush2.msra.mxu0 0.0
    %520 = vmatprep.subr.mxu0 0.0
    %521 = vmatpush2.msra.mxu0 0.0
    %522 = vmatprep.subr.mxu0 0.0
    %523 = vmatpush2.msra.mxu0 0.0
    %524 = vmatprep.mubr.f32.mxu0 0.0
    %525 = vmatmul.mubr.f32.gmra.mxu0 %v458
    %v526 = vpop.f32.mrf.mxu0
    %v527 = vadd.f32 0.0, %v526
    %v528 = vpop.f32.mrf.mxu0
    %529 = vdwg.mxu0
    %530 = vmatprep.subr.mxu0 0.0
    %531 = vmatpush1.msra.mxu0 0.0
    %532 = vmatprep.subr.mxu0 0.0
    %533 = vmatpush1.msra.mxu0 0.0
    %534 = vmatprep.subr.mxu0 0.0
    %535 = vmatpush1.msra.mxu0 0.0
    %536 = vmatprep.subr.mxu0 0.0
    %537 = vmatpush1.msra.mxu0 0.0
    %538 = vmatprep.subr.mxu0 0.0
    %539 = vmatpush1.msra.mxu0 0.0
    %540 = vmatprep.subr.mxu0 0.0
    %541 = vmatpush1.msra.mxu0 0.0
    %542 = vmatprep.subr.mxu0 0.0
    %543 = vmatpush1.msra.mxu0 0.0
    %544 = vmatprep.subr.mxu0 0.0
    %545 = vmatpush1.msra.mxu0 0.0
    %546 = vmatprep.subr.mxu0 0.0
    %547 = vmatpush1.msra.mxu0 0.0
    %548 = vmatprep.subr.mxu0 0.0
    %549 = vmatpush1.msra.mxu0 0.0
    %550 = vmatprep.subr.mxu0 0.0
    %551 = vmatpush1.msra.mxu0 0.0
    %552 = vmatprep.subr.mxu0 0.0
    %553 = vmatpush1.msra.mxu0 0.0
    %554 = vmatprep.subr.mxu0 0.0
    %555 = vmatpush1.msra.mxu0 0.0
    %556 = vmatprep.subr.mxu0 0.0
    %557 = vmatpush1.msra.mxu0 0.0
    %558 = vmatprep.subr.mxu0 0.0
    %559 = vmatpush1.msra.mxu0 %v455
    %560 = vmatprep.subr.mxu0 0.0
    %561 = vmatpush1.msra.mxu0 %v454
    %562 = vmatprep.subr.mxu0 0.0
    %563 = vmatpush2.msra.mxu0 0.0
    %564 = vmatprep.subr.mxu0 0.0
    %565 = vmatpush2.msra.mxu0 0.0
    %566 = vmatprep.subr.mxu0 0.0
    %567 = vmatpush2.msra.mxu0 0.0
    %568 = vmatprep.subr.mxu0 0.0
    %569 = vmatpush2.msra.mxu0 0.0
    %570 = vmatprep.subr.mxu0 0.0
    %571 = vmatpush2.msra.mxu0 0.0
    %572 = vmatprep.subr.mxu0 0.0
    %573 = vmatpush2.msra.mxu0 0.0
    %574 = vmatprep.subr.mxu0 0.0
    %575 = vmatpush2.msra.mxu0 0.0
    %576 = vmatprep.subr.mxu0 0.0
    %577 = vmatpush2.msra.mxu0 0.0
    %578 = vmatprep.subr.mxu0 0.0
    %579 = vmatpush2.msra.mxu0 0.0
    %580 = vmatprep.subr.mxu0 0.0
    %581 = vmatpush2.msra.mxu0 0.0
    %582 = vmatprep.subr.mxu0 0.0
    %583 = vmatpush2.msra.mxu0 0.0
    %584 = vmatprep.subr.mxu0 0.0
    %585 = vmatpush2.msra.mxu0 0.0
    %586 = vmatprep.subr.mxu0 0.0
    %587 = vmatpush2.msra.mxu0 0.0
    %588 = vmatprep.subr.mxu0 0.0
    %589 = vmatpush2.msra.mxu0 0.0
    %590 = vmatprep.subr.mxu0 0.0
    %591 = vmatpush2.msra.mxu0 0.0
    %592 = vmatprep.subr.mxu0 0.0
    %593 = vmatpush2.msra.mxu0 0.0
    %594 = vmatprep.mubr.f32.mxu0 0.0
    %595 = vmatmul.mubr.f32.gmra.mxu0 %v382
    %v596 = vpop.f32.mrf.mxu0
    %v597 = vadd.f32 %v527, %v596
    %v598 = vpop.f32.mrf.mxu0
    %599 = vdwg.mxu0
    %v600 = vld [vmem:[#allocation17] sm:$0x1]
    %v602 = vlaneseq
    %v603 = vshrl.u32 %v602, 7
    %v604 = vsub.s32 0, %v603
    %v605 = vrot.slane %v600, %v604
    %v607 = vadd.f32 %v597, %v605
    %v608 = vmax.f32 %v607, 0.0
    %v609 = vld [vmem:[#allocation19] sm:$0xff]
    %v610 = vld [vmem:[#allocation19 + $0x8] sm:$0xff]
    %v611 = vld [vmem:[#allocation19 + $0x10] sm:$0xff]
    %v612 = vld [vmem:[#allocation19 + $0x18] sm:$0xff]
    %v613 = vld [vmem:[#allocation19 + $0x20] sm:$0xff]
    %v614 = vld [vmem:[#allocation19 + $0x28] sm:$0xff]
    %v615 = vld [vmem:[#allocation19 + $0x30] sm:$0xff]
    %v616 = vld [vmem:[#allocation19 + $0x38] sm:$0xff]
    %v617 = vld [vmem:[%s13] sm:$0x1]
    %v619 = vlaneseq
    %v620 = vshrl.u32 %v619, 7
    %v621 = vsub.s32 0, %v620
    %v622 = vrot.slane %v617, %v621
    %vm624 = vcmask 523264
    %v626 = vsel %vm624, %v608, 0
    %628 = vmatprep.subr.mxu0 0.0
    %629 = vmatpush1.msra.mxu0 0.0
    %630 = vmatprep.subr.mxu0 0.0
    %631 = vmatpush1.msra.mxu0 0.0
    %632 = vmatprep.subr.mxu0 0.0
    %633 = vmatpush1.msra.mxu0 0.0
    %634 = vmatprep.subr.mxu0 0.0
    %635 = vmatpush1.msra.mxu0 0.0
    %636 = vmatprep.subr.mxu0 0.0
    %637 = vmatpush1.msra.mxu0 0.0
    %638 = vmatprep.subr.mxu0 0.0
    %639 = vmatpush1.msra.mxu0 0.0
    %640 = vmatprep.subr.mxu0 0.0
    %641 = vmatpush1.msra.mxu0 0.0
    %642 = vmatprep.subr.mxu0 0.0
    %643 = vmatpush1.msra.mxu0 0.0
    %644 = vmatprep.subr.mxu0 0.0
    %645 = vmatpush1.msra.mxu0 %v616
    %646 = vmatprep.subr.mxu0 0.0
    %647 = vmatpush1.msra.mxu0 %v615
    %648 = vmatprep.subr.mxu0 0.0
    %649 = vmatpush1.msra.mxu0 %v614
    %650 = vmatprep.subr.mxu0 0.0
    %651 = vmatpush1.msra.mxu0 %v613
    %652 = vmatprep.subr.mxu0 0.0
    %653 = vmatpush1.msra.mxu0 %v612
    %654 = vmatprep.subr.mxu0 0.0
    %655 = vmatpush1.msra.mxu0 %v611
    %656 = vmatprep.subr.mxu0 0.0
    %657 = vmatpush1.msra.mxu0 %v610
    %658 = vmatprep.subr.mxu0 0.0
    %659 = vmatpush1.msra.mxu0 %v609
    %660 = vmatprep.subr.mxu0 0.0
    %661 = vmatpush2.msra.mxu0 0.0
    %662 = vmatprep.subr.mxu0 0.0
    %663 = vmatpush2.msra.mxu0 0.0
    %664 = vmatprep.subr.mxu0 0.0
    %665 = vmatpush2.msra.mxu0 0.0
    %666 = vmatprep.subr.mxu0 0.0
    %667 = vmatpush2.msra.mxu0 0.0
    %668 = vmatprep.subr.mxu0 0.0
    %669 = vmatpush2.msra.mxu0 0.0
    %670 = vmatprep.subr.mxu0 0.0
    %671 = vmatpush2.msra.mxu0 0.0
    %672 = vmatprep.subr.mxu0 0.0
    %673 = vmatpush2.msra.mxu0 0.0
    %674 = vmatprep.subr.mxu0 0.0
    %675 = vmatpush2.msra.mxu0 0.0
    %676 = vmatprep.subr.mxu0 0.0
    %677 = vmatpush2.msra.mxu0 0.0
    %678 = vmatprep.subr.mxu0 0.0
    %679 = vmatpush2.msra.mxu0 0.0
    %680 = vmatprep.subr.mxu0 0.0
    %681 = vmatpush2.msra.mxu0 0.0
    %682 = vmatprep.subr.mxu0 0.0
    %683 = vmatpush2.msra.mxu0 0.0
    %684 = vmatprep.subr.mxu0 0.0
    %685 = vmatpush2.msra.mxu0 0.0
    %686 = vmatprep.subr.mxu0 0.0
    %687 = vmatpush2.msra.mxu0 0.0
    %688 = vmatprep.subr.mxu0 0.0
    %689 = vmatpush2.msra.mxu0 0.0
    %690 = vmatprep.subr.mxu0 0.0
    %691 = vmatpush2.msra.mxu0 0.0
    %692 = vmatprep.mubr.f32.mxu0 0.0
    %693 = vmatmul.mubr.f32.gmra.mxu0 %v626
    %v694 = vpop.f32.mrf.mxu0
    %v695 = vadd.f32 %v622, %v694
    %v696 = vpop.f32.mrf.mxu0
    %697 = vdwg.mxu0
    %v698 = vtanh.pop %v695
    %v699 = vld [vmem:[#allocation20] sm:$0xff]
    %v700 = vld [vmem:[#allocation20 + $0x8] sm:$0xff]
    %v701 = vld [vmem:[#allocation20 + $0x10] sm:$0xff]
    %v702 = vld [vmem:[#allocation20 + $0x18] sm:$0xff]
    %v703 = vld [vmem:[#allocation20 + $0x20] sm:$0xff]
    %v704 = vld [vmem:[#allocation20 + $0x28] sm:$0xff]
    %v705 = vld [vmem:[#allocation20 + $0x30] sm:$0xff]
    %v706 = vld [vmem:[#allocation20 + $0x38] sm:$0xff]
    %v707 = vld [vmem:[%s15] sm:$0x1]
    %v709 = vlaneseq
    %v710 = vshrl.u32 %v709, 7
    %v711 = vsub.s32 0, %v710
    %v712 = vrot.slane %v707, %v711
    %714 = vmatprep.subr.mxu0 0.0
    %715 = vmatpush1.msra.mxu0 0.0
    %716 = vmatprep.subr.mxu0 0.0
    %717 = vmatpush1.msra.mxu0 0.0
    %718 = vmatprep.subr.mxu0 0.0
    %719 = vmatpush1.msra.mxu0 0.0
    %720 = vmatprep.subr.mxu0 0.0
    %721 = vmatpush1.msra.mxu0 0.0
    %722 = vmatprep.subr.mxu0 0.0
    %723 = vmatpush1.msra.mxu0 0.0
    %724 = vmatprep.subr.mxu0 0.0
    %725 = vmatpush1.msra.mxu0 0.0
    %726 = vmatprep.subr.mxu0 0.0
    %727 = vmatpush1.msra.mxu0 0.0
    %728 = vmatprep.subr.mxu0 0.0
    %729 = vmatpush1.msra.mxu0 0.0
    %730 = vmatprep.subr.mxu0 0.0
    %731 = vmatpush1.msra.mxu0 %v706
    %732 = vmatprep.subr.mxu0 0.0
    %733 = vmatpush1.msra.mxu0 %v705
    %734 = vmatprep.subr.mxu0 0.0
    %735 = vmatpush1.msra.mxu0 %v704
    %736 = vmatprep.subr.mxu0 0.0
    %737 = vmatpush1.msra.mxu0 %v703
    %738 = vmatprep.subr.mxu0 0.0
    %739 = vmatpush1.msra.mxu0 %v702
    %740 = vmatprep.subr.mxu0 0.0
    %741 = vmatpush1.msra.mxu0 %v701
    %742 = vmatprep.subr.mxu0 0.0
    %743 = vmatpush1.msra.mxu0 %v700
    %744 = vmatprep.subr.mxu0 0.0
    %745 = vmatpush1.msra.mxu0 %v699
    %746 = vmatprep.subr.mxu0 0.0
    %747 = vmatpush2.msra.mxu0 0.0
    %748 = vmatprep.subr.mxu0 0.0
    %749 = vmatpush2.msra.mxu0 0.0
    %750 = vmatprep.subr.mxu0 0.0
    %751 = vmatpush2.msra.mxu0 0.0
    %752 = vmatprep.subr.mxu0 0.0
    %753 = vmatpush2.msra.mxu0 0.0
    %754 = vmatprep.subr.mxu0 0.0
    %755 = vmatpush2.msra.mxu0 0.0
    %756 = vmatprep.subr.mxu0 0.0
    %757 = vmatpush2.msra.mxu0 0.0
    %758 = vmatprep.subr.mxu0 0.0
    %759 = vmatpush2.msra.mxu0 0.0
    %760 = vmatprep.subr.mxu0 0.0
    %761 = vmatpush2.msra.mxu0 0.0
    %762 = vmatprep.subr.mxu0 0.0
    %763 = vmatpush2.msra.mxu0 0.0
    %764 = vmatprep.subr.mxu0 0.0
    %765 = vmatpush2.msra.mxu0 0.0
    %766 = vmatprep.subr.mxu0 0.0
    %767 = vmatpush2.msra.mxu0 0.0
    %768 = vmatprep.subr.mxu0 0.0
    %769 = vmatpush2.msra.mxu0 0.0
    %770 = vmatprep.subr.mxu0 0.0
    %771 = vmatpush2.msra.mxu0 0.0
    %772 = vmatprep.subr.mxu0 0.0
    %773 = vmatpush2.msra.mxu0 0.0
    %774 = vmatprep.subr.mxu0 0.0
    %775 = vmatpush2.msra.mxu0 0.0
    %776 = vmatprep.subr.mxu0 0.0
    %777 = vmatpush2.msra.mxu0 0.0
    %778 = vmatprep.mubr.f32.mxu0 0.0
    %779 = vmatmul.mubr.f32.gmra.mxu0 %v626
    %v780 = vpop.f32.mrf.mxu0
    %v781 = vadd.f32 %v712, %v780
    %v782 = vpop.f32.mrf.mxu0
    %783 = vdwg.mxu0
    %v784 = vmul.f32 %v698, 1.442695
    %v785 = vpow.pop %v784
    %v786 = vmul.f32 %v451, %v785
    %v787 = vadd.f32 %v786, %v781
    %v789 = vsel %vm218, %v787, 0
    %791 = vmatprep.subr.mxu0 0.0
    %792 = vmatpush1.msra.mxu0 0.0
    %793 = vmatprep.subr.mxu0 0.0
    %794 = vmatpush1.msra.mxu0 0.0
    %795 = vmatprep.subr.mxu0 0.0
    %796 = vmatpush1.msra.mxu0 0.0
    %797 = vmatprep.subr.mxu0 0.0
    %798 = vmatpush1.msra.mxu0 0.0
    %799 = vmatprep.subr.mxu0 0.0
    %800 = vmatpush1.msra.mxu0 0.0
    %801 = vmatprep.subr.mxu0 0.0
    %802 = vmatpush1.msra.mxu0 0.0
    %803 = vmatprep.subr.mxu0 0.0
    %804 = vmatpush1.msra.mxu0 0.0
    %805 = vmatprep.subr.mxu0 0.0
    %806 = vmatpush1.msra.mxu0 0.0
    %807 = vmatprep.subr.mxu0 0.0
    %808 = vmatpush1.msra.mxu0 0.0
    %809 = vmatprep.subr.mxu0 0.0
    %810 = vmatpush1.msra.mxu0 0.0
    %811 = vmatprep.subr.mxu0 0.0
    %812 = vmatpush1.msra.mxu0 0.0
    %813 = vmatprep.subr.mxu0 0.0
    %814 = vmatpush1.msra.mxu0 0.0
    %815 = vmatprep.subr.mxu0 0.0
    %816 = vmatpush1.msra.mxu0 0.0
    %817 = vmatprep.subr.mxu0 0.0
    %818 = vmatpush1.msra.mxu0 0.0
    %819 = vmatprep.subr.mxu0 0.0
    %820 = vmatpush1.msra.mxu0 0.0
    %821 = vmatprep.subr.mxu0 0.0
    %822 = vmatpush1.msra.mxu0 %v378
    %823 = vmatprep.subr.mxu0 0.0
    %824 = vmatpush2.msra.mxu0 0.0
    %825 = vmatprep.subr.mxu0 0.0
    %826 = vmatpush2.msra.mxu0 0.0
    %827 = vmatprep.subr.mxu0 0.0
    %828 = vmatpush2.msra.mxu0 0.0
    %829 = vmatprep.subr.mxu0 0.0
    %830 = vmatpush2.msra.mxu0 0.0
    %831 = vmatprep.subr.mxu0 0.0
    %832 = vmatpush2.msra.mxu0 0.0
    %833 = vmatprep.subr.mxu0 0.0
    %834 = vmatpush2.msra.mxu0 0.0
    %835 = vmatprep.subr.mxu0 0.0
    %836 = vmatpush2.msra.mxu0 0.0
    %837 = vmatprep.subr.mxu0 0.0
    %838 = vmatpush2.msra.mxu0 0.0
    %839 = vmatprep.subr.mxu0 0.0
    %840 = vmatpush2.msra.mxu0 0.0
    %841 = vmatprep.subr.mxu0 0.0
    %842 = vmatpush2.msra.mxu0 0.0
    %843 = vmatprep.subr.mxu0 0.0
    %844 = vmatpush2.msra.mxu0 0.0
    %845 = vmatprep.subr.mxu0 0.0
    %846 = vmatpush2.msra.mxu0 0.0
    %847 = vmatprep.subr.mxu0 0.0
    %848 = vmatpush2.msra.mxu0 0.0
    %849 = vmatprep.subr.mxu0 0.0
    %850 = vmatpush2.msra.mxu0 0.0
    %851 = vmatprep.subr.mxu0 0.0
    %852 = vmatpush2.msra.mxu0 0.0
    %853 = vmatprep.subr.mxu0 0.0
    %854 = vmatpush2.msra.mxu0 0.0
    %855 = vmatprep.mubr.f32.mxu0 0.0
    %856 = vmatmul.mubr.f32.gmra.mxu0 %v789
    %v857 = vpop.f32.mrf.mxu0
    %v858 = vadd.f32 0.0, %v857
    %v859 = vpop.f32.mrf.mxu0
    %860 = vdwg.mxu0
    %861 = vmatprep.subr.mxu0 0.0
    %862 = vmatpush1.msra.mxu0 0.0
    %863 = vmatprep.subr.mxu0 0.0
    %864 = vmatpush1.msra.mxu0 0.0
    %865 = vmatprep.subr.mxu0 0.0
    %866 = vmatpush1.msra.mxu0 0.0
    %867 = vmatprep.subr.mxu0 0.0
    %868 = vmatpush1.msra.mxu0 0.0
    %869 = vmatprep.subr.mxu0 0.0
    %870 = vmatpush1.msra.mxu0 0.0
    %871 = vmatprep.subr.mxu0 0.0
    %872 = vmatpush1.msra.mxu0 0.0
    %873 = vmatprep.subr.mxu0 0.0
    %874 = vmatpush1.msra.mxu0 0.0
    %875 = vmatprep.subr.mxu0 0.0
    %876 = vmatpush1.msra.mxu0 0.0
    %877 = vmatprep.subr.mxu0 0.0
    %878 = vmatpush1.msra.mxu0 0.0
    %879 = vmatprep.subr.mxu0 0.0
    %880 = vmatpush1.msra.mxu0 0.0
    %881 = vmatprep.subr.mxu0 0.0
    %882 = vmatpush1.msra.mxu0 0.0
    %883 = vmatprep.subr.mxu0 0.0
    %884 = vmatpush1.msra.mxu0 0.0
    %885 = vmatprep.subr.mxu0 0.0
    %886 = vmatpush1.msra.mxu0 0.0
    %887 = vmatprep.subr.mxu0 0.0
    %888 = vmatpush1.msra.mxu0 0.0
    %889 = vmatprep.subr.mxu0 0.0
    %890 = vmatpush1.msra.mxu0 %v377
    %891 = vmatprep.subr.mxu0 0.0
    %892 = vmatpush1.msra.mxu0 %v376
    %893 = vmatprep.subr.mxu0 0.0
    %894 = vmatpush2.msra.mxu0 0.0
    %895 = vmatprep.subr.mxu0 0.0
    %896 = vmatpush2.msra.mxu0 0.0
    %897 = vmatprep.subr.mxu0 0.0
    %898 = vmatpush2.msra.mxu0 0.0
    %899 = vmatprep.subr.mxu0 0.0
    %900 = vmatpush2.msra.mxu0 0.0
    %901 = vmatprep.subr.mxu0 0.0
    %902 = vmatpush2.msra.mxu0 0.0
    %903 = vmatprep.subr.mxu0 0.0
    %904 = vmatpush2.msra.mxu0 0.0
    %905 = vmatprep.subr.mxu0 0.0
    %906 = vmatpush2.msra.mxu0 0.0
    %907 = vmatprep.subr.mxu0 0.0
    %908 = vmatpush2.msra.mxu0 0.0
    %909 = vmatprep.subr.mxu0 0.0
    %910 = vmatpush2.msra.mxu0 0.0
    %911 = vmatprep.subr.mxu0 0.0
    %912 = vmatpush2.msra.mxu0 0.0
    %913 = vmatprep.subr.mxu0 0.0
    %914 = vmatpush2.msra.mxu0 0.0
    %915 = vmatprep.subr.mxu0 0.0
    %916 = vmatpush2.msra.mxu0 0.0
    %917 = vmatprep.subr.mxu0 0.0
    %918 = vmatpush2.msra.mxu0 0.0
    %919 = vmatprep.subr.mxu0 0.0
    %920 = vmatpush2.msra.mxu0 0.0
    %921 = vmatprep.subr.mxu0 0.0
    %922 = vmatpush2.msra.mxu0 0.0
    %923 = vmatprep.subr.mxu0 0.0
    %924 = vmatpush2.msra.mxu0 0.0
    %925 = vmatprep.mubr.f32.mxu0 0.0
    %926 = vmatmul.mubr.f32.gmra.mxu0 %v382
    %v927 = vpop.f32.mrf.mxu0
    %v928 = vadd.f32 %v858, %v927
    %v929 = vpop.f32.mrf.mxu0
    %930 = vdwg.mxu0
    %v931 = vadd.f32 %v698, 0.0
    %v933 = vsel %vm380, %v928, 0
    %935 = vmatprep.subr.mxu0 0.0
    %936 = vmatpush1.msra.mxu0 0.0
    %937 = vmatprep.subr.mxu0 0.0
    %938 = vmatpush1.msra.mxu0 0.0
    %939 = vmatprep.subr.mxu0 0.0
    %940 = vmatpush1.msra.mxu0 0.0
    %941 = vmatprep.subr.mxu0 0.0
    %942 = vmatpush1.msra.mxu0 0.0
    %943 = vmatprep.subr.mxu0 0.0
    %944 = vmatpush1.msra.mxu0 0.0
    %945 = vmatprep.subr.mxu0 0.0
    %946 = vmatpush1.msra.mxu0 0.0
    %947 = vmatprep.subr.mxu0 0.0
    %948 = vmatpush1.msra.mxu0 0.0
    %949 = vmatprep.subr.mxu0 0.0
    %950 = vmatpush1.msra.mxu0 0.0
    %951 = vmatprep.subr.mxu0 0.0
    %952 = vmatpush1.msra.mxu0 0.0
    %953 = vmatprep.subr.mxu0 0.0
    %954 = vmatpush1.msra.mxu0 0.0
    %955 = vmatprep.subr.mxu0 0.0
    %956 = vmatpush1.msra.mxu0 0.0
    %957 = vmatprep.subr.mxu0 0.0
    %958 = vmatpush1.msra.mxu0 0.0
    %959 = vmatprep.subr.mxu0 0.0
    %960 = vmatpush1.msra.mxu0 0.0
    %961 = vmatprep.subr.mxu0 0.0
    %962 = vmatpush1.msra.mxu0 0.0
    %963 = vmatprep.subr.mxu0 0.0
    %964 = vmatpush1.msra.mxu0 %v375
    %965 = vmatprep.subr.mxu0 0.0
    %966 = vmatpush1.msra.mxu0 %v374
    %967 = vmatprep.subr.mxu0 0.0
    %968 = vmatpush2.msra.mxu0 0.0
    %969 = vmatprep.subr.mxu0 0.0
    %970 = vmatpush2.msra.mxu0 0.0
    %971 = vmatprep.subr.mxu0 0.0
    %972 = vmatpush2.msra.mxu0 0.0
    %973 = vmatprep.subr.mxu0 0.0
    %974 = vmatpush2.msra.mxu0 0.0
    %975 = vmatprep.subr.mxu0 0.0
    %976 = vmatpush2.msra.mxu0 0.0
    %977 = vmatprep.subr.mxu0 0.0
    %978 = vmatpush2.msra.mxu0 0.0
    %979 = vmatprep.subr.mxu0 0.0
    %980 = vmatpush2.msra.mxu0 0.0
    %981 = vmatprep.subr.mxu0 0.0
    %982 = vmatpush2.msra.mxu0 0.0
    %983 = vmatprep.subr.mxu0 0.0
    %984 = vmatpush2.msra.mxu0 0.0
    %985 = vmatprep.subr.mxu0 0.0
    %986 = vmatpush2.msra.mxu0 0.0
    %987 = vmatprep.subr.mxu0 0.0
    %988 = vmatpush2.msra.mxu0 0.0
    %989 = vmatprep.subr.mxu0 0.0
    %990 = vmatpush2.msra.mxu0 0.0
    %991 = vmatprep.subr.mxu0 0.0
    %992 = vmatpush2.msra.mxu0 0.0
    %993 = vmatprep.subr.mxu0 0.0
    %994 = vmatpush2.msra.mxu0 0.0
    %995 = vmatprep.subr.mxu0 0.0
    %996 = vmatpush2.msra.mxu0 0.0
    %997 = vmatprep.subr.mxu0 0.0
    %998 = vmatpush2.msra.mxu0 0.0
    %999 = vmatprep.mubr.f32.mxu0 0.0
    %1000 = vmatmul.mubr.f32.gmra.mxu0 %v933
    %v1001 = vpop.f32.mrf.mxu0
    %v1002 = vadd.f32 0.0, %v1001
    %v1003 = vpop.f32.mrf.mxu0
    %1004 = vdwg.mxu0
    %s1005 = scalar_lea.vmem [#allocation14], 16
    %v1006 = vld [vmem:[%s1005] sm:$0xff]
    %v1007 = vld [vmem:[%s1005 + $0x8] sm:$0xff]
    %s1008 = scalar_lea.vmem [#allocation16], 8
    %v1009 = vld [vmem:[%s1008] sm:$0xff]
    %1010 = vmatprep.subr.mxu0 0.0
    %1011 = vmatpush1.msra.mxu0 0.0
    %1012 = vmatprep.subr.mxu0 0.0
    %1013 = vmatpush1.msra.mxu0 0.0
    %1014 = vmatprep.subr.mxu0 0.0
    %1015 = vmatpush1.msra.mxu0 0.0
    %1016 = vmatprep.subr.mxu0 0.0
    %1017 = vmatpush1.msra.mxu0 0.0
    %1018 = vmatprep.subr.mxu0 0.0
    %1019 = vmatpush1.msra.mxu0 0.0
    %1020 = vmatprep.subr.mxu0 0.0
    %1021 = vmatpush1.msra.mxu0 0.0
    %1022 = vmatprep.subr.mxu0 0.0
    %1023 = vmatpush1.msra.mxu0 0.0
    %1024 = vmatprep.subr.mxu0 0.0
    %1025 = vmatpush1.msra.mxu0 0.0
    %1026 = vmatprep.subr.mxu0 0.0
    %1027 = vmatpush1.msra.mxu0 0.0
    %1028 = vmatprep.subr.mxu0 0.0
    %1029 = vmatpush1.msra.mxu0 0.0
    %1030 = vmatprep.subr.mxu0 0.0
    %1031 = vmatpush1.msra.mxu0 0.0
    %1032 = vmatprep.subr.mxu0 0.0
    %1033 = vmatpush1.msra.mxu0 0.0
    %1034 = vmatprep.subr.mxu0 0.0
    %1035 = vmatpush1.msra.mxu0 0.0
    %1036 = vmatprep.subr.mxu0 0.0
    %1037 = vmatpush1.msra.mxu0 0.0
    %1038 = vmatprep.subr.mxu0 0.0
    %1039 = vmatpush1.msra.mxu0 0.0
    %1040 = vmatprep.subr.mxu0 0.0
    %1041 = vmatpush1.msra.mxu0 %v1009
    %1042 = vmatprep.subr.mxu0 0.0
    %1043 = vmatpush2.msra.mxu0 0.0
    %1044 = vmatprep.subr.mxu0 0.0
    %1045 = vmatpush2.msra.mxu0 0.0
    %1046 = vmatprep.subr.mxu0 0.0
    %1047 = vmatpush2.msra.mxu0 0.0
    %1048 = vmatprep.subr.mxu0 0.0
    %1049 = vmatpush2.msra.mxu0 0.0
    %1050 = vmatprep.subr.mxu0 0.0
    %1051 = vmatpush2.msra.mxu0 0.0
    %1052 = vmatprep.subr.mxu0 0.0
    %1053 = vmatpush2.msra.mxu0 0.0
    %1054 = vmatprep.subr.mxu0 0.0
    %1055 = vmatpush2.msra.mxu0 0.0
    %1056 = vmatprep.subr.mxu0 0.0
    %1057 = vmatpush2.msra.mxu0 0.0
    %1058 = vmatprep.subr.mxu0 0.0
    %1059 = vmatpush2.msra.mxu0 0.0
    %1060 = vmatprep.subr.mxu0 0.0
    %1061 = vmatpush2.msra.mxu0 0.0
    %1062 = vmatprep.subr.mxu0 0.0
    %1063 = vmatpush2.msra.mxu0 0.0
    %1064 = vmatprep.subr.mxu0 0.0
    %1065 = vmatpush2.msra.mxu0 0.0
    %1066 = vmatprep.subr.mxu0 0.0
    %1067 = vmatpush2.msra.mxu0 0.0
    %1068 = vmatprep.subr.mxu0 0.0
    %1069 = vmatpush2.msra.mxu0 0.0
    %1070 = vmatprep.subr.mxu0 0.0
    %1071 = vmatpush2.msra.mxu0 0.0
    %1072 = vmatprep.subr.mxu0 0.0
    %1073 = vmatpush2.msra.mxu0 0.0
    %1074 = vmatprep.mubr.f32.mxu0 0.0
    %1075 = vmatmul.mubr.f32.gmra.mxu0 %v458
    %v1076 = vpop.f32.mrf.mxu0
    %v1077 = vadd.f32 0.0, %v1076
    %v1078 = vpop.f32.mrf.mxu0
    %1079 = vdwg.mxu0
    %1080 = vmatprep.subr.mxu0 0.0
    %1081 = vmatpush1.msra.mxu0 0.0
    %1082 = vmatprep.subr.mxu0 0.0
    %1083 = vmatpush1.msra.mxu0 0.0
    %1084 = vmatprep.subr.mxu0 0.0
    %1085 = vmatpush1.msra.mxu0 0.0
    %1086 = vmatprep.subr.mxu0 0.0
    %1087 = vmatpush1.msra.mxu0 0.0
    %1088 = vmatprep.subr.mxu0 0.0
    %1089 = vmatpush1.msra.mxu0 0.0
    %1090 = vmatprep.subr.mxu0 0.0
    %1091 = vmatpush1.msra.mxu0 0.0
    %1092 = vmatprep.subr.mxu0 0.0
    %1093 = vmatpush1.msra.mxu0 0.0
    %1094 = vmatprep.subr.mxu0 0.0
    %1095 = vmatpush1.msra.mxu0 0.0
    %1096 = vmatprep.subr.mxu0 0.0
    %1097 = vmatpush1.msra.mxu0 0.0
    %1098 = vmatprep.subr.mxu0 0.0
    %1099 = vmatpush1.msra.mxu0 0.0
    %1100 = vmatprep.subr.mxu0 0.0
    %1101 = vmatpush1.msra.mxu0 0.0
    %1102 = vmatprep.subr.mxu0 0.0
    %1103 = vmatpush1.msra.mxu0 0.0
    %1104 = vmatprep.subr.mxu0 0.0
    %1105 = vmatpush1.msra.mxu0 0.0
    %1106 = vmatprep.subr.mxu0 0.0
    %1107 = vmatpush1.msra.mxu0 0.0
    %1108 = vmatprep.subr.mxu0 0.0
    %1109 = vmatpush1.msra.mxu0 %v1007
    %1110 = vmatprep.subr.mxu0 0.0
    %1111 = vmatpush1.msra.mxu0 %v1006
    %1112 = vmatprep.subr.mxu0 0.0
    %1113 = vmatpush2.msra.mxu0 0.0
    %1114 = vmatprep.subr.mxu0 0.0
    %1115 = vmatpush2.msra.mxu0 0.0
    %1116 = vmatprep.subr.mxu0 0.0
    %1117 = vmatpush2.msra.mxu0 0.0
    %1118 = vmatprep.subr.mxu0 0.0
    %1119 = vmatpush2.msra.mxu0 0.0
    %1120 = vmatprep.subr.mxu0 0.0
    %1121 = vmatpush2.msra.mxu0 0.0
    %1122 = vmatprep.subr.mxu0 0.0
    %1123 = vmatpush2.msra.mxu0 0.0
    %1124 = vmatprep.subr.mxu0 0.0
    %1125 = vmatpush2.msra.mxu0 0.0
    %1126 = vmatprep.subr.mxu0 0.0
    %1127 = vmatpush2.msra.mxu0 0.0
    %1128 = vmatprep.subr.mxu0 0.0
    %1129 = vmatpush2.msra.mxu0 0.0
    %1130 = vmatprep.subr.mxu0 0.0
    %1131 = vmatpush2.msra.mxu0 0.0
    %1132 = vmatprep.subr.mxu0 0.0
    %1133 = vmatpush2.msra.mxu0 0.0
    %1134 = vmatprep.subr.mxu0 0.0
    %1135 = vmatpush2.msra.mxu0 0.0
    %1136 = vmatprep.subr.mxu0 0.0
    %1137 = vmatpush2.msra.mxu0 0.0
    %1138 = vmatprep.subr.mxu0 0.0
    %1139 = vmatpush2.msra.mxu0 0.0
    %1140 = vmatprep.subr.mxu0 0.0
    %1141 = vmatpush2.msra.mxu0 0.0
    %1142 = vmatprep.subr.mxu0 0.0
    %1143 = vmatpush2.msra.mxu0 0.0
    %1144 = vmatprep.mubr.f32.mxu0 0.0
    %1145 = vmatmul.mubr.f32.gmra.mxu0 %v933
    %v1146 = vpop.f32.mrf.mxu0
    %v1147 = vadd.f32 %v1077, %v1146
    %v1148 = vpop.f32.mrf.mxu0
    %1149 = vdwg.mxu0
    %s1150 = scalar_lea.vmem [#allocation17], 1
    %v1151 = vld [vmem:[%s1150] sm:$0x1]
    %v1153 = vlaneseq
    %v1154 = vshrl.u32 %v1153, 7
    %v1155 = vsub.s32 0, %v1154
    %v1156 = vrot.slane %v1151, %v1155
    %v1158 = vadd.f32 %v1147, %v1156
    %v1159 = vmax.f32 %v1158, 0.0
    %s1160 = scalar_lea.vmem [#allocation19], 64
    %v1161 = vld [vmem:[%s1160] sm:$0xff]
    %v1162 = vld [vmem:[%s1160 + $0x8] sm:$0xff]
    %v1163 = vld [vmem:[%s1160 + $0x10] sm:$0xff]
    %v1164 = vld [vmem:[%s1160 + $0x18] sm:$0xff]
    %v1165 = vld [vmem:[%s1160 + $0x20] sm:$0xff]
    %v1166 = vld [vmem:[%s1160 + $0x28] sm:$0xff]
    %v1167 = vld [vmem:[%s1160 + $0x30] sm:$0xff]
    %v1168 = vld [vmem:[%s1160 + $0x38] sm:$0xff]
    %s1169 = scalar_lea.vmem %s13, 1
    %v1170 = vld [vmem:[%s1169] sm:$0x1]
    %v1172 = vlaneseq
    %v1173 = vshrl.u32 %v1172, 7
    %v1174 = vsub.s32 0, %v1173
    %v1175 = vrot.slane %v1170, %v1174
    %v1178 = vsel %vm624, %v1159, 0
    %1180 = vmatprep.subr.mxu0 0.0
    %1181 = vmatpush1.msra.mxu0 0.0
    %1182 = vmatprep.subr.mxu0 0.0
    %1183 = vmatpush1.msra.mxu0 0.0
    %1184 = vmatprep.subr.mxu0 0.0
    %1185 = vmatpush1.msra.mxu0 0.0
    %1186 = vmatprep.subr.mxu0 0.0
    %1187 = vmatpush1.msra.mxu0 0.0
    %1188 = vmatprep.subr.mxu0 0.0
    %1189 = vmatpush1.msra.mxu0 0.0
    %1190 = vmatprep.subr.mxu0 0.0
    %1191 = vmatpush1.msra.mxu0 0.0
    %1192 = vmatprep.subr.mxu0 0.0
    %1193 = vmatpush1.msra.mxu0 0.0
    %1194 = vmatprep.subr.mxu0 0.0
    %1195 = vmatpush1.msra.mxu0 0.0
    %1196 = vmatprep.subr.mxu0 0.0
    %1197 = vmatpush1.msra.mxu0 %v1168
    %1198 = vmatprep.subr.mxu0 0.0
    %1199 = vmatpush1.msra.mxu0 %v1167
    %1200 = vmatprep.subr.mxu0 0.0
    %1201 = vmatpush1.msra.mxu0 %v1166
    %1202 = vmatprep.subr.mxu0 0.0
    %1203 = vmatpush1.msra.mxu0 %v1165
    %1204 = vmatprep.subr.mxu0 0.0
    %1205 = vmatpush1.msra.mxu0 %v1164
    %1206 = vmatprep.subr.mxu0 0.0
    %1207 = vmatpush1.msra.mxu0 %v1163
    %1208 = vmatprep.subr.mxu0 0.0
    %1209 = vmatpush1.msra.mxu0 %v1162
    %1210 = vmatprep.subr.mxu0 0.0
    %1211 = vmatpush1.msra.mxu0 %v1161
    %1212 = vmatprep.subr.mxu0 0.0
    %1213 = vmatpush2.msra.mxu0 0.0
    %1214 = vmatprep.subr.mxu0 0.0
    %1215 = vmatpush2.msra.mxu0 0.0
    %1216 = vmatprep.subr.mxu0 0.0
    %1217 = vmatpush2.msra.mxu0 0.0
    %1218 = vmatprep.subr.mxu0 0.0
    %1219 = vmatpush2.msra.mxu0 0.0
    %1220 = vmatprep.subr.mxu0 0.0
    %1221 = vmatpush2.msra.mxu0 0.0
    %1222 = vmatprep.subr.mxu0 0.0
    %1223 = vmatpush2.msra.mxu0 0.0
    %1224 = vmatprep.subr.mxu0 0.0
    %1225 = vmatpush2.msra.mxu0 0.0
    %1226 = vmatprep.subr.mxu0 0.0
    %1227 = vmatpush2.msra.mxu0 0.0
    %1228 = vmatprep.subr.mxu0 0.0
    %1229 = vmatpush2.msra.mxu0 0.0
    %1230 = vmatprep.subr.mxu0 0.0
    %1231 = vmatpush2.msra.mxu0 0.0
    %1232 = vmatprep.subr.mxu0 0.0
    %1233 = vmatpush2.msra.mxu0 0.0
    %1234 = vmatprep.subr.mxu0 0.0
    %1235 = vmatpush2.msra.mxu0 0.0
    %1236 = vmatprep.subr.mxu0 0.0
    %1237 = vmatpush2.msra.mxu0 0.0
    %1238 = vmatprep.subr.mxu0 0.0
    %1239 = vmatpush2.msra.mxu0 0.0
    %1240 = vmatprep.subr.mxu0 0.0
    %1241 = vmatpush2.msra.mxu0 0.0
    %1242 = vmatprep.subr.mxu0 0.0
    %1243 = vmatpush2.msra.mxu0 0.0
    %1244 = vmatprep.mubr.f32.mxu0 0.0
    %1245 = vmatmul.mubr.f32.gmra.mxu0 %v1178
    %v1246 = vpop.f32.mrf.mxu0
    %v1247 = vadd.f32 %v1175, %v1246
    %v1248 = vpop.f32.mrf.mxu0
    %1249 = vdwg.mxu0
    %v1250 = vtanh.pop %v1247
    %s1251 = scalar_lea.vmem [#allocation20], 64
    %v1252 = vld [vmem:[%s1251] sm:$0xff]
    %v1253 = vld [vmem:[%s1251 + $0x8] sm:$0xff]
    %v1254 = vld [vmem:[%s1251 + $0x10] sm:$0xff]
    %v1255 = vld [vmem:[%s1251 + $0x18] sm:$0xff]
    %v1256 = vld [vmem:[%s1251 + $0x20] sm:$0xff]
    %v1257 = vld [vmem:[%s1251 + $0x28] sm:$0xff]
    %v1258 = vld [vmem:[%s1251 + $0x30] sm:$0xff]
    %v1259 = vld [vmem:[%s1251 + $0x38] sm:$0xff]
    %s1260 = scalar_lea.vmem %s15, 1
    %v1261 = vld [vmem:[%s1260] sm:$0x1]
    %v1263 = vlaneseq
    %v1264 = vshrl.u32 %v1263, 7
    %v1265 = vsub.s32 0, %v1264
    %v1266 = vrot.slane %v1261, %v1265
    %1268 = vmatprep.subr.mxu0 0.0
    %1269 = vmatpush1.msra.mxu0 0.0
    %1270 = vmatprep.subr.mxu0 0.0
    %1271 = vmatpush1.msra.mxu0 0.0
    %1272 = vmatprep.subr.mxu0 0.0
    %1273 = vmatpush1.msra.mxu0 0.0
    %1274 = vmatprep.subr.mxu0 0.0
    %1275 = vmatpush1.msra.mxu0 0.0
    %1276 = vmatprep.subr.mxu0 0.0
    %1277 = vmatpush1.msra.mxu0 0.0
    %1278 = vmatprep.subr.mxu0 0.0
    %1279 = vmatpush1.msra.mxu0 0.0
    %1280 = vmatprep.subr.mxu0 0.0
    %1281 = vmatpush1.msra.mxu0 0.0
    %1282 = vmatprep.subr.mxu0 0.0
    %1283 = vmatpush1.msra.mxu0 0.0
    %1284 = vmatprep.subr.mxu0 0.0
    %1285 = vmatpush1.msra.mxu0 %v1259
    %1286 = vmatprep.subr.mxu0 0.0
    %1287 = vmatpush1.msra.mxu0 %v1258
    %1288 = vmatprep.subr.mxu0 0.0
    %1289 = vmatpush1.msra.mxu0 %v1257
    %1290 = vmatprep.subr.mxu0 0.0
    %1291 = vmatpush1.msra.mxu0 %v1256
    %1292 = vmatprep.subr.mxu0 0.0
    %1293 = vmatpush1.msra.mxu0 %v1255
    %1294 = vmatprep.subr.mxu0 0.0
    %1295 = vmatpush1.msra.mxu0 %v1254
    %1296 = vmatprep.subr.mxu0 0.0
    %1297 = vmatpush1.msra.mxu0 %v1253
    %1298 = vmatprep.subr.mxu0 0.0
    %1299 = vmatpush1.msra.mxu0 %v1252
    %1300 = vmatprep.subr.mxu0 0.0
    %1301 = vmatpush2.msra.mxu0 0.0
    %1302 = vmatprep.subr.mxu0 0.0
    %1303 = vmatpush2.msra.mxu0 0.0
    %1304 = vmatprep.subr.mxu0 0.0
    %1305 = vmatpush2.msra.mxu0 0.0
    %1306 = vmatprep.subr.mxu0 0.0
    %1307 = vmatpush2.msra.mxu0 0.0
    %1308 = vmatprep.subr.mxu0 0.0
    %1309 = vmatpush2.msra.mxu0 0.0
    %1310 = vmatprep.subr.mxu0 0.0
    %1311 = vmatpush2.msra.mxu0 0.0
    %1312 = vmatprep.subr.mxu0 0.0
    %1313 = vmatpush2.msra.mxu0 0.0
    %1314 = vmatprep.subr.mxu0 0.0
    %1315 = vmatpush2.msra.mxu0 0.0
    %1316 = vmatprep.subr.mxu0 0.0
    %1317 = vmatpush2.msra.mxu0 0.0
    %1318 = vmatprep.subr.mxu0 0.0
    %1319 = vmatpush2.msra.mxu0 0.0
    %1320 = vmatprep.subr.mxu0 0.0
    %1321 = vmatpush2.msra.mxu0 0.0
    %1322 = vmatprep.subr.mxu0 0.0
    %1323 = vmatpush2.msra.mxu0 0.0
    %1324 = vmatprep.subr.mxu0 0.0
    %1325 = vmatpush2.msra.mxu0 0.0
    %1326 = vmatprep.subr.mxu0 0.0
    %1327 = vmatpush2.msra.mxu0 0.0
    %1328 = vmatprep.subr.mxu0 0.0
    %1329 = vmatpush2.msra.mxu0 0.0
    %1330 = vmatprep.subr.mxu0 0.0
    %1331 = vmatpush2.msra.mxu0 0.0
    %1332 = vmatprep.mubr.f32.mxu0 0.0
    %1333 = vmatmul.mubr.f32.gmra.mxu0 %v1178
    %v1334 = vpop.f32.mrf.mxu0
    %v1335 = vadd.f32 %v1266, %v1334
    %v1336 = vpop.f32.mrf.mxu0
    %1337 = vdwg.mxu0
    %v1338 = vmul.f32 %v1250, 1.442695
    %v1339 = vpow.pop %v1338
    %v1340 = vmul.f32 %v1002, %v1339
    %v1341 = vadd.f32 %v1340, %v1335
    %v1343 = vsel %vm218, %v1341, 0
    %1345 = vmatprep.subr.mxu0 0.0
    %1346 = vmatpush1.msra.mxu0 0.0
    %1347 = vmatprep.subr.mxu0 0.0
    %1348 = vmatpush1.msra.mxu0 0.0
    %1349 = vmatprep.subr.mxu0 0.0
    %1350 = vmatpush1.msra.mxu0 0.0
    %1351 = vmatprep.subr.mxu0 0.0
    %1352 = vmatpush1.msra.mxu0 0.0
    %1353 = vmatprep.subr.mxu0 0.0
    %1354 = vmatpush1.msra.mxu0 0.0
    %1355 = vmatprep.subr.mxu0 0.0
    %1356 = vmatpush1.msra.mxu0 0.0
    %1357 = vmatprep.subr.mxu0 0.0
    %1358 = vmatpush1.msra.mxu0 0.0
    %1359 = vmatprep.subr.mxu0 0.0
    %1360 = vmatpush1.msra.mxu0 0.0
    %1361 = vmatprep.subr.mxu0 0.0
    %1362 = vmatpush1.msra.mxu0 0.0
    %1363 = vmatprep.subr.mxu0 0.0
    %1364 = vmatpush1.msra.mxu0 0.0
    %1365 = vmatprep.subr.mxu0 0.0
    %1366 = vmatpush1.msra.mxu0 0.0
    %1367 = vmatprep.subr.mxu0 0.0
    %1368 = vmatpush1.msra.mxu0 0.0
    %1369 = vmatprep.subr.mxu0 0.0
    %1370 = vmatpush1.msra.mxu0 0.0
    %1371 = vmatprep.subr.mxu0 0.0
    %1372 = vmatpush1.msra.mxu0 0.0
    %1373 = vmatprep.subr.mxu0 0.0
    %1374 = vmatpush1.msra.mxu0 0.0
    %1375 = vmatprep.subr.mxu0 0.0
    %1376 = vmatpush1.msra.mxu0 %v378
    %1377 = vmatprep.subr.mxu0 0.0
    %1378 = vmatpush2.msra.mxu0 0.0
    %1379 = vmatprep.subr.mxu0 0.0
    %1380 = vmatpush2.msra.mxu0 0.0
    %1381 = vmatprep.subr.mxu0 0.0
    %1382 = vmatpush2.msra.mxu0 0.0
    %1383 = vmatprep.subr.mxu0 0.0
    %1384 = vmatpush2.msra.mxu0 0.0
    %1385 = vmatprep.subr.mxu0 0.0
    %1386 = vmatpush2.msra.mxu0 0.0
    %1387 = vmatprep.subr.mxu0 0.0
    %1388 = vmatpush2.msra.mxu0 0.0
    %1389 = vmatprep.subr.mxu0 0.0
    %1390 = vmatpush2.msra.mxu0 0.0
    %1391 = vmatprep.subr.mxu0 0.0
    %1392 = vmatpush2.msra.mxu0 0.0
    %1393 = vmatprep.subr.mxu0 0.0
    %1394 = vmatpush2.msra.mxu0 0.0
    %1395 = vmatprep.subr.mxu0 0.0
    %1396 = vmatpush2.msra.mxu0 0.0
    %1397 = vmatprep.subr.mxu0 0.0
    %1398 = vmatpush2.msra.mxu0 0.0
    %1399 = vmatprep.subr.mxu0 0.0
    %1400 = vmatpush2.msra.mxu0 0.0
    %1401 = vmatprep.subr.mxu0 0.0
    %1402 = vmatpush2.msra.mxu0 0.0
    %1403 = vmatprep.subr.mxu0 0.0
    %1404 = vmatpush2.msra.mxu0 0.0
    %1405 = vmatprep.subr.mxu0 0.0
    %1406 = vmatpush2.msra.mxu0 0.0
    %1407 = vmatprep.subr.mxu0 0.0
    %1408 = vmatpush2.msra.mxu0 0.0
    %1409 = vmatprep.mubr.f32.mxu0 0.0
    %1410 = vmatmul.mubr.f32.gmra.mxu0 %v1343
    %v1411 = vpop.f32.mrf.mxu0
    %v1412 = vadd.f32 0.0, %v1411
    %v1413 = vpop.f32.mrf.mxu0
    %1414 = vdwg.mxu0
    %1415 = vmatprep.subr.mxu0 0.0
    %1416 = vmatpush1.msra.mxu0 0.0
    %1417 = vmatprep.subr.mxu0 0.0
    %1418 = vmatpush1.msra.mxu0 0.0
    %1419 = vmatprep.subr.mxu0 0.0
    %1420 = vmatpush1.msra.mxu0 0.0
    %1421 = vmatprep.subr.mxu0 0.0
    %1422 = vmatpush1.msra.mxu0 0.0
    %1423 = vmatprep.subr.mxu0 0.0
    %1424 = vmatpush1.msra.mxu0 0.0
    %1425 = vmatprep.subr.mxu0 0.0
    %1426 = vmatpush1.msra.mxu0 0.0
    %1427 = vmatprep.subr.mxu0 0.0
    %1428 = vmatpush1.msra.mxu0 0.0
    %1429 = vmatprep.subr.mxu0 0.0
    %1430 = vmatpush1.msra.mxu0 0.0
    %1431 = vmatprep.subr.mxu0 0.0
    %1432 = vmatpush1.msra.mxu0 0.0
    %1433 = vmatprep.subr.mxu0 0.0
    %1434 = vmatpush1.msra.mxu0 0.0
    %1435 = vmatprep.subr.mxu0 0.0
    %1436 = vmatpush1.msra.mxu0 0.0
    %1437 = vmatprep.subr.mxu0 0.0
    %1438 = vmatpush1.msra.mxu0 0.0
    %1439 = vmatprep.subr.mxu0 0.0
    %1440 = vmatpush1.msra.mxu0 0.0
    %1441 = vmatprep.subr.mxu0 0.0
    %1442 = vmatpush1.msra.mxu0 0.0
    %1443 = vmatprep.subr.mxu0 0.0
    %1444 = vmatpush1.msra.mxu0 %v377
    %1445 = vmatprep.subr.mxu0 0.0
    %1446 = vmatpush1.msra.mxu0 %v376
    %1447 = vmatprep.subr.mxu0 0.0
    %1448 = vmatpush2.msra.mxu0 0.0
    %1449 = vmatprep.subr.mxu0 0.0
    %1450 = vmatpush2.msra.mxu0 0.0
    %1451 = vmatprep.subr.mxu0 0.0
    %1452 = vmatpush2.msra.mxu0 0.0
    %1453 = vmatprep.subr.mxu0 0.0
    %1454 = vmatpush2.msra.mxu0 0.0
    %1455 = vmatprep.subr.mxu0 0.0
    %1456 = vmatpush2.msra.mxu0 0.0
    %1457 = vmatprep.subr.mxu0 0.0
    %1458 = vmatpush2.msra.mxu0 0.0
    %1459 = vmatprep.subr.mxu0 0.0
    %1460 = vmatpush2.msra.mxu0 0.0
    %1461 = vmatprep.subr.mxu0 0.0
    %1462 = vmatpush2.msra.mxu0 0.0
    %1463 = vmatprep.subr.mxu0 0.0
    %1464 = vmatpush2.msra.mxu0 0.0
    %1465 = vmatprep.subr.mxu0 0.0
    %1466 = vmatpush2.msra.mxu0 0.0
    %1467 = vmatprep.subr.mxu0 0.0
    %1468 = vmatpush2.msra.mxu0 0.0
    %1469 = vmatprep.subr.mxu0 0.0
    %1470 = vmatpush2.msra.mxu0 0.0
    %1471 = vmatprep.subr.mxu0 0.0
    %1472 = vmatpush2.msra.mxu0 0.0
    %1473 = vmatprep.subr.mxu0 0.0
    %1474 = vmatpush2.msra.mxu0 0.0
    %1475 = vmatprep.subr.mxu0 0.0
    %1476 = vmatpush2.msra.mxu0 0.0
    %1477 = vmatprep.subr.mxu0 0.0
    %1478 = vmatpush2.msra.mxu0 0.0
    %1479 = vmatprep.mubr.f32.mxu0 0.0
    %1480 = vmatmul.mubr.f32.gmra.mxu0 %v933
    %v1481 = vpop.f32.mrf.mxu0
    %v1482 = vadd.f32 %v1412, %v1481
    %v1483 = vpop.f32.mrf.mxu0
    %1484 = vdwg.mxu0
    %v1485 = vadd.f32 %v931, %v1250
    %v1487 = vsel %vm380, %v1482, 0
    %1489 = vmatprep.subr.mxu0 0.0
    %1490 = vmatpush1.msra.mxu0 0.0
    %1491 = vmatprep.subr.mxu0 0.0
    %1492 = vmatpush1.msra.mxu0 0.0
    %1493 = vmatprep.subr.mxu0 0.0
    %1494 = vmatpush1.msra.mxu0 0.0
    %1495 = vmatprep.subr.mxu0 0.0
    %1496 = vmatpush1.msra.mxu0 0.0
    %1497 = vmatprep.subr.mxu0 0.0
    %1498 = vmatpush1.msra.mxu0 0.0
    %1499 = vmatprep.subr.mxu0 0.0
    %1500 = vmatpush1.msra.mxu0 0.0
    %1501 = vmatprep.subr.mxu0 0.0
    %1502 = vmatpush1.msra.mxu0 0.0
    %1503 = vmatprep.subr.mxu0 0.0
    %1504 = vmatpush1.msra.mxu0 0.0
    %1505 = vmatprep.subr.mxu0 0.0
    %1506 = vmatpush1.msra.mxu0 0.0
    %1507 = vmatprep.subr.mxu0 0.0
    %1508 = vmatpush1.msra.mxu0 0.0
    %1509 = vmatprep.subr.mxu0 0.0
    %1510 = vmatpush1.msra.mxu0 0.0
    %1511 = vmatprep.subr.mxu0 0.0
    %1512 = vmatpush1.msra.mxu0 0.0
    %1513 = vmatprep.subr.mxu0 0.0
    %1514 = vmatpush1.msra.mxu0 0.0
    %1515 = vmatprep.subr.mxu0 0.0
    %1516 = vmatpush1.msra.mxu0 0.0
    %1517 = vmatprep.subr.mxu0 0.0
    %1518 = vmatpush1.msra.mxu0 %v375
    %1519 = vmatprep.subr.mxu0 0.0
    %1520 = vmatpush1.msra.mxu0 %v374
    %1521 = vmatprep.subr.mxu0 0.0
    %1522 = vmatpush2.msra.mxu0 0.0
    %1523 = vmatprep.subr.mxu0 0.0
    %1524 = vmatpush2.msra.mxu0 0.0
    %1525 = vmatprep.subr.mxu0 0.0
    %1526 = vmatpush2.msra.mxu0 0.0
    %1527 = vmatprep.subr.mxu0 0.0
    %1528 = vmatpush2.msra.mxu0 0.0
    %1529 = vmatprep.subr.mxu0 0.0
    %1530 = vmatpush2.msra.mxu0 0.0
    %1531 = vmatprep.subr.mxu0 0.0
    %1532 = vmatpush2.msra.mxu0 0.0
    %1533 = vmatprep.subr.mxu0 0.0
    %1534 = vmatpush2.msra.mxu0 0.0
    %1535 = vmatprep.subr.mxu0 0.0
    %1536 = vmatpush2.msra.mxu0 0.0
    %1537 = vmatprep.subr.mxu0 0.0
    %1538 = vmatpush2.msra.mxu0 0.0
    %1539 = vmatprep.subr.mxu0 0.0
    %1540 = vmatpush2.msra.mxu0 0.0
    %1541 = vmatprep.subr.mxu0 0.0
    %1542 = vmatpush2.msra.mxu0 0.0
    %1543 = vmatprep.subr.mxu0 0.0
    %1544 = vmatpush2.msra.mxu0 0.0
    %1545 = vmatprep.subr.mxu0 0.0
    %1546 = vmatpush2.msra.mxu0 0.0
    %1547 = vmatprep.subr.mxu0 0.0
    %1548 = vmatpush2.msra.mxu0 0.0
    %1549 = vmatprep.subr.mxu0 0.0
    %1550 = vmatpush2.msra.mxu0 0.0
    %1551 = vmatprep.subr.mxu0 0.0
    %1552 = vmatpush2.msra.mxu0 0.0
    %1553 = vmatprep.mubr.f32.mxu0 0.0
    %1554 = vmatmul.mubr.f32.gmra.mxu0 %v1487
    %v1555 = vpop.f32.mrf.mxu0
    %v1556 = vadd.f32 0.0, %v1555
    %v1557 = vpop.f32.mrf.mxu0
    %1558 = vdwg.mxu0
    %s1559 = scalar_lea.vmem [#allocation14], 32
    %v1560 = vld [vmem:[%s1559] sm:$0xff]
    %v1561 = vld [vmem:[%s1559 + $0x8] sm:$0xff]
    %s1562 = scalar_lea.vmem [#allocation16], 16
    %v1563 = vld [vmem:[%s1562] sm:$0xff]
    %1564 = vmatprep.subr.mxu0 0.0
    %1565 = vmatpush1.msra.mxu0 0.0
    %1566 = vmatprep.subr.mxu0 0.0
    %1567 = vmatpush1.msra.mxu0 0.0
    %1568 = vmatprep.subr.mxu0 0.0
    %1569 = vmatpush1.msra.mxu0 0.0
    %1570 = vmatprep.subr.mxu0 0.0
    %1571 = vmatpush1.msra.mxu0 0.0
    %1572 = vmatprep.subr.mxu0 0.0
    %1573 = vmatpush1.msra.mxu0 0.0
    %1574 = vmatprep.subr.mxu0 0.0
    %1575 = vmatpush1.msra.mxu0 0.0
    %1576 = vmatprep.subr.mxu0 0.0
    %1577 = vmatpush1.msra.mxu0 0.0
    %1578 = vmatprep.subr.mxu0 0.0
    %1579 = vmatpush1.msra.mxu0 0.0
    %1580 = vmatprep.subr.mxu0 0.0
    %1581 = vmatpush1.msra.mxu0 0.0
    %1582 = vmatprep.subr.mxu0 0.0
    %1583 = vmatpush1.msra.mxu0 0.0
    %1584 = vmatprep.subr.mxu0 0.0
    %1585 = vmatpush1.msra.mxu0 0.0
    %1586 = vmatprep.subr.mxu0 0.0
    %1587 = vmatpush1.msra.mxu0 0.0
    %1588 = vmatprep.subr.mxu0 0.0
    %1589 = vmatpush1.msra.mxu0 0.0
    %1590 = vmatprep.subr.mxu0 0.0
    %1591 = vmatpush1.msra.mxu0 0.0
    %1592 = vmatprep.subr.mxu0 0.0
    %1593 = vmatpush1.msra.mxu0 0.0
    %1594 = vmatprep.subr.mxu0 0.0
    %1595 = vmatpush1.msra.mxu0 %v1563
    %1596 = vmatprep.subr.mxu0 0.0
    %1597 = vmatpush2.msra.mxu0 0.0
    %1598 = vmatprep.subr.mxu0 0.0
    %1599 = vmatpush2.msra.mxu0 0.0
    %1600 = vmatprep.subr.mxu0 0.0
    %1601 = vmatpush2.msra.mxu0 0.0
    %1602 = vmatprep.subr.mxu0 0.0
    %1603 = vmatpush2.msra.mxu0 0.0
    %1604 = vmatprep.subr.mxu0 0.0
    %1605 = vmatpush2.msra.mxu0 0.0
    %1606 = vmatprep.subr.mxu0 0.0
    %1607 = vmatpush2.msra.mxu0 0.0
    %1608 = vmatprep.subr.mxu0 0.0
    %1609 = vmatpush2.msra.mxu0 0.0
    %1610 = vmatprep.subr.mxu0 0.0
    %1611 = vmatpush2.msra.mxu0 0.0
    %1612 = vmatprep.subr.mxu0 0.0
    %1613 = vmatpush2.msra.mxu0 0.0
    %1614 = vmatprep.subr.mxu0 0.0
    %1615 = vmatpush2.msra.mxu0 0.0
    %1616 = vmatprep.subr.mxu0 0.0
    %1617 = vmatpush2.msra.mxu0 0.0
    %1618 = vmatprep.subr.mxu0 0.0
    %1619 = vmatpush2.msra.mxu0 0.0
    %1620 = vmatprep.subr.mxu0 0.0
    %1621 = vmatpush2.msra.mxu0 0.0
    %1622 = vmatprep.subr.mxu0 0.0
    %1623 = vmatpush2.msra.mxu0 0.0
    %1624 = vmatprep.subr.mxu0 0.0
    %1625 = vmatpush2.msra.mxu0 0.0
    %1626 = vmatprep.subr.mxu0 0.0
    %1627 = vmatpush2.msra.mxu0 0.0
    %1628 = vmatprep.mubr.f32.mxu0 0.0
    %1629 = vmatmul.mubr.f32.gmra.mxu0 %v458
    %v1630 = vpop.f32.mrf.mxu0
    %v1631 = vadd.f32 0.0, %v1630
    %v1632 = vpop.f32.mrf.mxu0
    %1633 = vdwg.mxu0
    %1634 = vmatprep.subr.mxu0 0.0
    %1635 = vmatpush1.msra.mxu0 0.0
    %1636 = vmatprep.subr.mxu0 0.0
    %1637 = vmatpush1.msra.mxu0 0.0
    %1638 = vmatprep.subr.mxu0 0.0
    %1639 = vmatpush1.msra.mxu0 0.0
    %1640 = vmatprep.subr.mxu0 0.0
    %1641 = vmatpush1.msra.mxu0 0.0
    %1642 = vmatprep.subr.mxu0 0.0
    %1643 = vmatpush1.msra.mxu0 0.0
    %1644 = vmatprep.subr.mxu0 0.0
    %1645 = vmatpush1.msra.mxu0 0.0
    %1646 = vmatprep.subr.mxu0 0.0
    %1647 = vmatpush1.msra.mxu0 0.0
    %1648 = vmatprep.subr.mxu0 0.0
    %1649 = vmatpush1.msra.mxu0 0.0
    %1650 = vmatprep.subr.mxu0 0.0
    %1651 = vmatpush1.msra.mxu0 0.0
    %1652 = vmatprep.subr.mxu0 0.0
    %1653 = vmatpush1.msra.mxu0 0.0
    %1654 = vmatprep.subr.mxu0 0.0
    %1655 = vmatpush1.msra.mxu0 0.0
    %1656 = vmatprep.subr.mxu0 0.0
    %1657 = vmatpush1.msra.mxu0 0.0
    %1658 = vmatprep.subr.mxu0 0.0
    %1659 = vmatpush1.msra.mxu0 0.0
    %1660 = vmatprep.subr.mxu0 0.0
    %1661 = vmatpush1.msra.mxu0 0.0
    %1662 = vmatprep.subr.mxu0 0.0
    %1663 = vmatpush1.msra.mxu0 %v1561
    %1664 = vmatprep.subr.mxu0 0.0
    %1665 = vmatpush1.msra.mxu0 %v1560
    %1666 = vmatprep.subr.mxu0 0.0
    %1667 = vmatpush2.msra.mxu0 0.0
    %1668 = vmatprep.subr.mxu0 0.0
    %1669 = vmatpush2.msra.mxu0 0.0
    %1670 = vmatprep.subr.mxu0 0.0
    %1671 = vmatpush2.msra.mxu0 0.0
    %1672 = vmatprep.subr.mxu0 0.0
    %1673 = vmatpush2.msra.mxu0 0.0
    %1674 = vmatprep.subr.mxu0 0.0
    %1675 = vmatpush2.msra.mxu0 0.0
    %1676 = vmatprep.subr.mxu0 0.0
    %1677 = vmatpush2.msra.mxu0 0.0
    %1678 = vmatprep.subr.mxu0 0.0
    %1679 = vmatpush2.msra.mxu0 0.0
    %1680 = vmatprep.subr.mxu0 0.0
    %1681 = vmatpush2.msra.mxu0 0.0
    %1682 = vmatprep.subr.mxu0 0.0
    %1683 = vmatpush2.msra.mxu0 0.0
    %1684 = vmatprep.subr.mxu0 0.0
    %1685 = vmatpush2.msra.mxu0 0.0
    %1686 = vmatprep.subr.mxu0 0.0
    %1687 = vmatpush2.msra.mxu0 0.0
    %1688 = vmatprep.subr.mxu0 0.0
    %1689 = vmatpush2.msra.mxu0 0.0
    %1690 = vmatprep.subr.mxu0 0.0
    %1691 = vmatpush2.msra.mxu0 0.0
    %1692 = vmatprep.subr.mxu0 0.0
    %1693 = vmatpush2.msra.mxu0 0.0
    %1694 = vmatprep.subr.mxu0 0.0
    %1695 = vmatpush2.msra.mxu0 0.0
    %1696 = vmatprep.subr.mxu0 0.0
    %1697 = vmatpush2.msra.mxu0 0.0
    %1698 = vmatprep.mubr.f32.mxu0 0.0
    %1699 = vmatmul.mubr.f32.gmra.mxu0 %v1487
    %v1700 = vpop.f32.mrf.mxu0
    %v1701 = vadd.f32 %v1631, %v1700
    %v1702 = vpop.f32.mrf.mxu0
    %1703 = vdwg.mxu0
    %s1704 = scalar_lea.vmem [#allocation17], 2
    %v1705 = vld [vmem:[%s1704] sm:$0x1]
    %v1707 = vlaneseq
    %v1708 = vshrl.u32 %v1707, 7
    %v1709 = vsub.s32 0, %v1708
    %v1710 = vrot.slane %v1705, %v1709
    %v1712 = vadd.f32 %v1701, %v1710
    %v1713 = vmax.f32 %v1712, 0.0
    %s1714 = scalar_lea.vmem [#allocation19], 128
    %v1715 = vld [vmem:[%s1714] sm:$0xff]
    %v1716 = vld [vmem:[%s1714 + $0x8] sm:$0xff]
    %v1717 = vld [vmem:[%s1714 + $0x10] sm:$0xff]
    %v1718 = vld [vmem:[%s1714 + $0x18] sm:$0xff]
    %v1719 = vld [vmem:[%s1714 + $0x20] sm:$0xff]
    %v1720 = vld [vmem:[%s1714 + $0x28] sm:$0xff]
    %v1721 = vld [vmem:[%s1714 + $0x30] sm:$0xff]
    %v1722 = vld [vmem:[%s1714 + $0x38] sm:$0xff]
    %s1723 = scalar_lea.vmem %s13, 2
    %v1724 = vld [vmem:[%s1723] sm:$0x1]
    %v1726 = vlaneseq
    %v1727 = vshrl.u32 %v1726, 7
    %v1728 = vsub.s32 0, %v1727
    %v1729 = vrot.slane %v1724, %v1728
    %v1732 = vsel %vm624, %v1713, 0
    %1734 = vmatprep.subr.mxu0 0.0
    %1735 = vmatpush1.msra.mxu0 0.0
    %1736 = vmatprep.subr.mxu0 0.0
    %1737 = vmatpush1.msra.mxu0 0.0
    %1738 = vmatprep.subr.mxu0 0.0
    %1739 = vmatpush1.msra.mxu0 0.0
    %1740 = vmatprep.subr.mxu0 0.0
    %1741 = vmatpush1.msra.mxu0 0.0
    %1742 = vmatprep.subr.mxu0 0.0
    %1743 = vmatpush1.msra.mxu0 0.0
    %1744 = vmatprep.subr.mxu0 0.0
    %1745 = vmatpush1.msra.mxu0 0.0
    %1746 = vmatprep.subr.mxu0 0.0
    %1747 = vmatpush1.msra.mxu0 0.0
    %1748 = vmatprep.subr.mxu0 0.0
    %1749 = vmatpush1.msra.mxu0 0.0
    %1750 = vmatprep.subr.mxu0 0.0
    %1751 = vmatpush1.msra.mxu0 %v1722
    %1752 = vmatprep.subr.mxu0 0.0
    %1753 = vmatpush1.msra.mxu0 %v1721
    %1754 = vmatprep.subr.mxu0 0.0
    %1755 = vmatpush1.msra.mxu0 %v1720
    %1756 = vmatprep.subr.mxu0 0.0
    %1757 = vmatpush1.msra.mxu0 %v1719
    %1758 = vmatprep.subr.mxu0 0.0
    %1759 = vmatpush1.msra.mxu0 %v1718
    %1760 = vmatprep.subr.mxu0 0.0
    %1761 = vmatpush1.msra.mxu0 %v1717
    %1762 = vmatprep.subr.mxu0 0.0
    %1763 = vmatpush1.msra.mxu0 %v1716
    %1764 = vmatprep.subr.mxu0 0.0
    %1765 = vmatpush1.msra.mxu0 %v1715
    %1766 = vmatprep.subr.mxu0 0.0
    %1767 = vmatpush2.msra.mxu0 0.0
    %1768 = vmatprep.subr.mxu0 0.0
    %1769 = vmatpush2.msra.mxu0 0.0
    %1770 = vmatprep.subr.mxu0 0.0
    %1771 = vmatpush2.msra.mxu0 0.0
    %1772 = vmatprep.subr.mxu0 0.0
    %1773 = vmatpush2.msra.mxu0 0.0
    %1774 = vmatprep.subr.mxu0 0.0
    %1775 = vmatpush2.msra.mxu0 0.0
    %1776 = vmatprep.subr.mxu0 0.0
    %1777 = vmatpush2.msra.mxu0 0.0
    %1778 = vmatprep.subr.mxu0 0.0
    %1779 = vmatpush2.msra.mxu0 0.0
    %1780 = vmatprep.subr.mxu0 0.0
    %1781 = vmatpush2.msra.mxu0 0.0
    %1782 = vmatprep.subr.mxu0 0.0
    %1783 = vmatpush2.msra.mxu0 0.0
    %1784 = vmatprep.subr.mxu0 0.0
    %1785 = vmatpush2.msra.mxu0 0.0
    %1786 = vmatprep.subr.mxu0 0.0
    %1787 = vmatpush2.msra.mxu0 0.0
    %1788 = vmatprep.subr.mxu0 0.0
    %1789 = vmatpush2.msra.mxu0 0.0
    %1790 = vmatprep.subr.mxu0 0.0
    %1791 = vmatpush2.msra.mxu0 0.0
    %1792 = vmatprep.subr.mxu0 0.0
    %1793 = vmatpush2.msra.mxu0 0.0
    %1794 = vmatprep.subr.mxu0 0.0
    %1795 = vmatpush2.msra.mxu0 0.0
    %1796 = vmatprep.subr.mxu0 0.0
    %1797 = vmatpush2.msra.mxu0 0.0
    %1798 = vmatprep.mubr.f32.mxu0 0.0
    %1799 = vmatmul.mubr.f32.gmra.mxu0 %v1732
    %v1800 = vpop.f32.mrf.mxu0
    %v1801 = vadd.f32 %v1729, %v1800
    %v1802 = vpop.f32.mrf.mxu0
    %1803 = vdwg.mxu0
    %v1804 = vtanh.pop %v1801
    %s1805 = scalar_lea.vmem [#allocation20], 128
    %v1806 = vld [vmem:[%s1805] sm:$0xff]
    %v1807 = vld [vmem:[%s1805 + $0x8] sm:$0xff]
    %v1808 = vld [vmem:[%s1805 + $0x10] sm:$0xff]
    %v1809 = vld [vmem:[%s1805 + $0x18] sm:$0xff]
    %v1810 = vld [vmem:[%s1805 + $0x20] sm:$0xff]
    %v1811 = vld [vmem:[%s1805 + $0x28] sm:$0xff]
    %v1812 = vld [vmem:[%s1805 + $0x30] sm:$0xff]
    %v1813 = vld [vmem:[%s1805 + $0x38] sm:$0xff]
    %s1814 = scalar_lea.vmem %s15, 2
    %v1815 = vld [vmem:[%s1814] sm:$0x1]
    %v1817 = vlaneseq
    %v1818 = vshrl.u32 %v1817, 7
    %v1819 = vsub.s32 0, %v1818
    %v1820 = vrot.slane %v1815, %v1819
    %1822 = vmatprep.subr.mxu0 0.0
    %1823 = vmatpush1.msra.mxu0 0.0
    %1824 = vmatprep.subr.mxu0 0.0
    %1825 = vmatpush1.msra.mxu0 0.0
    %1826 = vmatprep.subr.mxu0 0.0
    %1827 = vmatpush1.msra.mxu0 0.0
    %1828 = vmatprep.subr.mxu0 0.0
    %1829 = vmatpush1.msra.mxu0 0.0
    %1830 = vmatprep.subr.mxu0 0.0
    %1831 = vmatpush1.msra.mxu0 0.0
    %1832 = vmatprep.subr.mxu0 0.0
    %1833 = vmatpush1.msra.mxu0 0.0
    %1834 = vmatprep.subr.mxu0 0.0
    %1835 = vmatpush1.msra.mxu0 0.0
    %1836 = vmatprep.subr.mxu0 0.0
    %1837 = vmatpush1.msra.mxu0 0.0
    %1838 = vmatprep.subr.mxu0 0.0
    %1839 = vmatpush1.msra.mxu0 %v1813
    %1840 = vmatprep.subr.mxu0 0.0
    %1841 = vmatpush1.msra.mxu0 %v1812
    %1842 = vmatprep.subr.mxu0 0.0
    %1843 = vmatpush1.msra.mxu0 %v1811
    %1844 = vmatprep.subr.mxu0 0.0
    %1845 = vmatpush1.msra.mxu0 %v1810
    %1846 = vmatprep.subr.mxu0 0.0
    %1847 = vmatpush1.msra.mxu0 %v1809
    %1848 = vmatprep.subr.mxu0 0.0
    %1849 = vmatpush1.msra.mxu0 %v1808
    %1850 = vmatprep.subr.mxu0 0.0
    %1851 = vmatpush1.msra.mxu0 %v1807
    %1852 = vmatprep.subr.mxu0 0.0
    %1853 = vmatpush1.msra.mxu0 %v1806
    %1854 = vmatprep.subr.mxu0 0.0
    %1855 = vmatpush2.msra.mxu0 0.0
    %1856 = vmatprep.subr.mxu0 0.0
    %1857 = vmatpush2.msra.mxu0 0.0
    %1858 = vmatprep.subr.mxu0 0.0
    %1859 = vmatpush2.msra.mxu0 0.0
    %1860 = vmatprep.subr.mxu0 0.0
    %1861 = vmatpush2.msra.mxu0 0.0
    %1862 = vmatprep.subr.mxu0 0.0
    %1863 = vmatpush2.msra.mxu0 0.0
    %1864 = vmatprep.subr.mxu0 0.0
    %1865 = vmatpush2.msra.mxu0 0.0
    %1866 = vmatprep.subr.mxu0 0.0
    %1867 = vmatpush2.msra.mxu0 0.0
    %1868 = vmatprep.subr.mxu0 0.0
    %1869 = vmatpush2.msra.mxu0 0.0
    %1870 = vmatprep.subr.mxu0 0.0
    %1871 = vmatpush2.msra.mxu0 0.0
    %1872 = vmatprep.subr.mxu0 0.0
    %1873 = vmatpush2.msra.mxu0 0.0
    %1874 = vmatprep.subr.mxu0 0.0
    %1875 = vmatpush2.msra.mxu0 0.0
    %1876 = vmatprep.subr.mxu0 0.0
    %1877 = vmatpush2.msra.mxu0 0.0
    %1878 = vmatprep.subr.mxu0 0.0
    %1879 = vmatpush2.msra.mxu0 0.0
    %1880 = vmatprep.subr.mxu0 0.0
    %1881 = vmatpush2.msra.mxu0 0.0
    %1882 = vmatprep.subr.mxu0 0.0
    %1883 = vmatpush2.msra.mxu0 0.0
    %1884 = vmatprep.subr.mxu0 0.0
    %1885 = vmatpush2.msra.mxu0 0.0
    %1886 = vmatprep.mubr.f32.mxu0 0.0
    %1887 = vmatmul.mubr.f32.gmra.mxu0 %v1732
    %v1888 = vpop.f32.mrf.mxu0
    %v1889 = vadd.f32 %v1820, %v1888
    %v1890 = vpop.f32.mrf.mxu0
    %1891 = vdwg.mxu0
    %v1892 = vmul.f32 %v1804, 1.442695
    %v1893 = vpow.pop %v1892
    %v1894 = vmul.f32 %v1556, %v1893
    %v1895 = vadd.f32 %v1894, %v1889
    %v1897 = vsel %vm218, %v1895, 0
    %1899 = vmatprep.subr.mxu0 0.0
    %1900 = vmatpush1.msra.mxu0 0.0
    %1901 = vmatprep.subr.mxu0 0.0
    %1902 = vmatpush1.msra.mxu0 0.0
    %1903 = vmatprep.subr.mxu0 0.0
    %1904 = vmatpush1.msra.mxu0 0.0
    %1905 = vmatprep.subr.mxu0 0.0
    %1906 = vmatpush1.msra.mxu0 0.0
    %1907 = vmatprep.subr.mxu0 0.0
    %1908 = vmatpush1.msra.mxu0 0.0
    %1909 = vmatprep.subr.mxu0 0.0
    %1910 = vmatpush1.msra.mxu0 0.0
    %1911 = vmatprep.subr.mxu0 0.0
    %1912 = vmatpush1.msra.mxu0 0.0
    %1913 = vmatprep.subr.mxu0 0.0
    %1914 = vmatpush1.msra.mxu0 0.0
    %1915 = vmatprep.subr.mxu0 0.0
    %1916 = vmatpush1.msra.mxu0 0.0
    %1917 = vmatprep.subr.mxu0 0.0
    %1918 = vmatpush1.msra.mxu0 0.0
    %1919 = vmatprep.subr.mxu0 0.0
    %1920 = vmatpush1.msra.mxu0 0.0
    %1921 = vmatprep.subr.mxu0 0.0
    %1922 = vmatpush1.msra.mxu0 0.0
    %1923 = vmatprep.subr.mxu0 0.0
    %1924 = vmatpush1.msra.mxu0 0.0
    %1925 = vmatprep.subr.mxu0 0.0
    %1926 = vmatpush1.msra.mxu0 0.0
    %1927 = vmatprep.subr.mxu0 0.0
    %1928 = vmatpush1.msra.mxu0 0.0
    %1929 = vmatprep.subr.mxu0 0.0
    %1930 = vmatpush1.msra.mxu0 %v378
    %1931 = vmatprep.subr.mxu0 0.0
    %1932 = vmatpush2.msra.mxu0 0.0
    %1933 = vmatprep.subr.mxu0 0.0
    %1934 = vmatpush2.msra.mxu0 0.0
    %1935 = vmatprep.subr.mxu0 0.0
    %1936 = vmatpush2.msra.mxu0 0.0
    %1937 = vmatprep.subr.mxu0 0.0
    %1938 = vmatpush2.msra.mxu0 0.0
    %1939 = vmatprep.subr.mxu0 0.0
    %1940 = vmatpush2.msra.mxu0 0.0
    %1941 = vmatprep.subr.mxu0 0.0
    %1942 = vmatpush2.msra.mxu0 0.0
    %1943 = vmatprep.subr.mxu0 0.0
    %1944 = vmatpush2.msra.mxu0 0.0
    %1945 = vmatprep.subr.mxu0 0.0
    %1946 = vmatpush2.msra.mxu0 0.0
    %1947 = vmatprep.subr.mxu0 0.0
    %1948 = vmatpush2.msra.mxu0 0.0
    %1949 = vmatprep.subr.mxu0 0.0
    %1950 = vmatpush2.msra.mxu0 0.0
    %1951 = vmatprep.subr.mxu0 0.0
    %1952 = vmatpush2.msra.mxu0 0.0
    %1953 = vmatprep.subr.mxu0 0.0
    %1954 = vmatpush2.msra.mxu0 0.0
    %1955 = vmatprep.subr.mxu0 0.0
    %1956 = vmatpush2.msra.mxu0 0.0
    %1957 = vmatprep.subr.mxu0 0.0
    %1958 = vmatpush2.msra.mxu0 0.0
    %1959 = vmatprep.subr.mxu0 0.0
    %1960 = vmatpush2.msra.mxu0 0.0
    %1961 = vmatprep.subr.mxu0 0.0
    %1962 = vmatpush2.msra.mxu0 0.0
    %1963 = vmatprep.mubr.f32.mxu0 0.0
    %1964 = vmatmul.mubr.f32.gmra.mxu0 %v1897
    %v1965 = vpop.f32.mrf.mxu0
    %v1966 = vadd.f32 0.0, %v1965
    %v1967 = vpop.f32.mrf.mxu0
    %1968 = vdwg.mxu0
    %1969 = vmatprep.subr.mxu0 0.0
    %1970 = vmatpush1.msra.mxu0 0.0
    %1971 = vmatprep.subr.mxu0 0.0
    %1972 = vmatpush1.msra.mxu0 0.0
    %1973 = vmatprep.subr.mxu0 0.0
    %1974 = vmatpush1.msra.mxu0 0.0
    %1975 = vmatprep.subr.mxu0 0.0
    %1976 = vmatpush1.msra.mxu0 0.0
    %1977 = vmatprep.subr.mxu0 0.0
    %1978 = vmatpush1.msra.mxu0 0.0
    %1979 = vmatprep.subr.mxu0 0.0
    %1980 = vmatpush1.msra.mxu0 0.0
    %1981 = vmatprep.subr.mxu0 0.0
    %1982 = vmatpush1.msra.mxu0 0.0
    %1983 = vmatprep.subr.mxu0 0.0
    %1984 = vmatpush1.msra.mxu0 0.0
    %1985 = vmatprep.subr.mxu0 0.0
    %1986 = vmatpush1.msra.mxu0 0.0
    %1987 = vmatprep.subr.mxu0 0.0
    %1988 = vmatpush1.msra.mxu0 0.0
    %1989 = vmatprep.subr.mxu0 0.0
    %1990 = vmatpush1.msra.mxu0 0.0
    %1991 = vmatprep.subr.mxu0 0.0
    %1992 = vmatpush1.msra.mxu0 0.0
    %1993 = vmatprep.subr.mxu0 0.0
    %1994 = vmatpush1.msra.mxu0 0.0
    %1995 = vmatprep.subr.mxu0 0.0
    %1996 = vmatpush1.msra.mxu0 0.0
    %1997 = vmatprep.subr.mxu0 0.0
    %1998 = vmatpush1.msra.mxu0 %v377
    %1999 = vmatprep.subr.mxu0 0.0
    %2000 = vmatpush1.msra.mxu0 %v376
    %2001 = vmatprep.subr.mxu0 0.0
    %2002 = vmatpush2.msra.mxu0 0.0
    %2003 = vmatprep.subr.mxu0 0.0
    %2004 = vmatpush2.msra.mxu0 0.0
    %2005 = vmatprep.subr.mxu0 0.0
    %2006 = vmatpush2.msra.mxu0 0.0
    %2007 = vmatprep.subr.mxu0 0.0
    %2008 = vmatpush2.msra.mxu0 0.0
    %2009 = vmatprep.subr.mxu0 0.0
    %2010 = vmatpush2.msra.mxu0 0.0
    %2011 = vmatprep.subr.mxu0 0.0
    %2012 = vmatpush2.msra.mxu0 0.0
    %2013 = vmatprep.subr.mxu0 0.0
    %2014 = vmatpush2.msra.mxu0 0.0
    %2015 = vmatprep.subr.mxu0 0.0
    %2016 = vmatpush2.msra.mxu0 0.0
    %2017 = vmatprep.subr.mxu0 0.0
    %2018 = vmatpush2.msra.mxu0 0.0
    %2019 = vmatprep.subr.mxu0 0.0
    %2020 = vmatpush2.msra.mxu0 0.0
    %2021 = vmatprep.subr.mxu0 0.0
    %2022 = vmatpush2.msra.mxu0 0.0
    %2023 = vmatprep.subr.mxu0 0.0
    %2024 = vmatpush2.msra.mxu0 0.0
    %2025 = vmatprep.subr.mxu0 0.0
    %2026 = vmatpush2.msra.mxu0 0.0
    %2027 = vmatprep.subr.mxu0 0.0
    %2028 = vmatpush2.msra.mxu0 0.0
    %2029 = vmatprep.subr.mxu0 0.0
    %2030 = vmatpush2.msra.mxu0 0.0
    %2031 = vmatprep.subr.mxu0 0.0
    %2032 = vmatpush2.msra.mxu0 0.0
    %2033 = vmatprep.mubr.f32.mxu0 0.0
    %2034 = vmatmul.mubr.f32.gmra.mxu0 %v1487
    %v2035 = vpop.f32.mrf.mxu0
    %v2036 = vadd.f32 %v1966, %v2035
    %v2037 = vpop.f32.mrf.mxu0
    %2038 = vdwg.mxu0
    %v2039 = vadd.f32 %v1485, %v1804
    %v2041 = vsel %vm380, %v2036, 0
    %2043 = vmatprep.subr.mxu0 0.0
    %2044 = vmatpush1.msra.mxu0 0.0
    %2045 = vmatprep.subr.mxu0 0.0
    %2046 = vmatpush1.msra.mxu0 0.0
    %2047 = vmatprep.subr.mxu0 0.0
    %2048 = vmatpush1.msra.mxu0 0.0
    %2049 = vmatprep.subr.mxu0 0.0
    %2050 = vmatpush1.msra.mxu0 0.0
    %2051 = vmatprep.subr.mxu0 0.0
    %2052 = vmatpush1.msra.mxu0 0.0
    %2053 = vmatprep.subr.mxu0 0.0
    %2054 = vmatpush1.msra.mxu0 0.0
    %2055 = vmatprep.subr.mxu0 0.0
    %2056 = vmatpush1.msra.mxu0 0.0
    %2057 = vmatprep.subr.mxu0 0.0
    %2058 = vmatpush1.msra.mxu0 0.0
    %2059 = vmatprep.subr.mxu0 0.0
    %2060 = vmatpush1.msra.mxu0 0.0
    %2061 = vmatprep.subr.mxu0 0.0
    %2062 = vmatpush1.msra.mxu0 0.0
    %2063 = vmatprep.subr.mxu0 0.0
    %2064 = vmatpush1.msra.mxu0 0.0
    %2065 = vmatprep.subr.mxu0 0.0
    %2066 = vmatpush1.msra.mxu0 0.0
    %2067 = vmatprep.subr.mxu0 0.0
    %2068 = vmatpush1.msra.mxu0 0.0
    %2069 = vmatprep.subr.mxu0 0.0
    %2070 = vmatpush1.msra.mxu0 0.0
    %2071 = vmatprep.subr.mxu0 0.0
    %2072 = vmatpush1.msra.mxu0 %v375
    %2073 = vmatprep.subr.mxu0 0.0
    %2074 = vmatpush1.msra.mxu0 %v374
    %2075 = vmatprep.subr.mxu0 0.0
    %2076 = vmatpush2.msra.mxu0 0.0
    %2077 = vmatprep.subr.mxu0 0.0
    %2078 = vmatpush2.msra.mxu0 0.0
    %2079 = vmatprep.subr.mxu0 0.0
    %2080 = vmatpush2.msra.mxu0 0.0
    %2081 = vmatprep.subr.mxu0 0.0
    %2082 = vmatpush2.msra.mxu0 0.0
    %2083 = vmatprep.subr.mxu0 0.0
    %2084 = vmatpush2.msra.mxu0 0.0
    %2085 = vmatprep.subr.mxu0 0.0
    %2086 = vmatpush2.msra.mxu0 0.0
    %2087 = vmatprep.subr.mxu0 0.0
    %2088 = vmatpush2.msra.mxu0 0.0
    %2089 = vmatprep.subr.mxu0 0.0
    %2090 = vmatpush2.msra.mxu0 0.0
    %2091 = vmatprep.subr.mxu0 0.0
    %2092 = vmatpush2.msra.mxu0 0.0
    %2093 = vmatprep.subr.mxu0 0.0
    %2094 = vmatpush2.msra.mxu0 0.0
    %2095 = vmatprep.subr.mxu0 0.0
    %2096 = vmatpush2.msra.mxu0 0.0
    %2097 = vmatprep.subr.mxu0 0.0
    %2098 = vmatpush2.msra.mxu0 0.0
    %2099 = vmatprep.subr.mxu0 0.0
    %2100 = vmatpush2.msra.mxu0 0.0
    %2101 = vmatprep.subr.mxu0 0.0
    %2102 = vmatpush2.msra.mxu0 0.0
    %2103 = vmatprep.subr.mxu0 0.0
    %2104 = vmatpush2.msra.mxu0 0.0
    %2105 = vmatprep.subr.mxu0 0.0
    %2106 = vmatpush2.msra.mxu0 0.0
    %2107 = vmatprep.mubr.f32.mxu0 0.0
    %2108 = vmatmul.mubr.f32.gmra.mxu0 %v2041
    %v2109 = vpop.f32.mrf.mxu0
    %v2110 = vadd.f32 0.0, %v2109
    %v2111 = vpop.f32.mrf.mxu0
    %2112 = vdwg.mxu0
    %s2113 = scalar_lea.vmem [#allocation14], 48
    %v2114 = vld [vmem:[%s2113] sm:$0xff]
    %v2115 = vld [vmem:[%s2113 + $0x8] sm:$0xff]
    %s2116 = scalar_lea.vmem [#allocation16], 24
    %v2117 = vld [vmem:[%s2116] sm:$0xff]
    %2118 = vmatprep.subr.mxu0 0.0
    %2119 = vmatpush1.msra.mxu0 0.0
    %2120 = vmatprep.subr.mxu0 0.0
    %2121 = vmatpush1.msra.mxu0 0.0
    %2122 = vmatprep.subr.mxu0 0.0
    %2123 = vmatpush1.msra.mxu0 0.0
    %2124 = vmatprep.subr.mxu0 0.0
    %2125 = vmatpush1.msra.mxu0 0.0
    %2126 = vmatprep.subr.mxu0 0.0
    %2127 = vmatpush1.msra.mxu0 0.0
    %2128 = vmatprep.subr.mxu0 0.0
    %2129 = vmatpush1.msra.mxu0 0.0
    %2130 = vmatprep.subr.mxu0 0.0
    %2131 = vmatpush1.msra.mxu0 0.0
    %2132 = vmatprep.subr.mxu0 0.0
    %2133 = vmatpush1.msra.mxu0 0.0
    %2134 = vmatprep.subr.mxu0 0.0
    %2135 = vmatpush1.msra.mxu0 0.0
    %2136 = vmatprep.subr.mxu0 0.0
    %2137 = vmatpush1.msra.mxu0 0.0
    %2138 = vmatprep.subr.mxu0 0.0
    %2139 = vmatpush1.msra.mxu0 0.0
    %2140 = vmatprep.subr.mxu0 0.0
    %2141 = vmatpush1.msra.mxu0 0.0
    %2142 = vmatprep.subr.mxu0 0.0
    %2143 = vmatpush1.msra.mxu0 0.0
    %2144 = vmatprep.subr.mxu0 0.0
    %2145 = vmatpush1.msra.mxu0 0.0
    %2146 = vmatprep.subr.mxu0 0.0
    %2147 = vmatpush1.msra.mxu0 0.0
    %2148 = vmatprep.subr.mxu0 0.0
    %2149 = vmatpush1.msra.mxu0 %v2117
    %2150 = vmatprep.subr.mxu0 0.0
    %2151 = vmatpush2.msra.mxu0 0.0
    %2152 = vmatprep.subr.mxu0 0.0
    %2153 = vmatpush2.msra.mxu0 0.0
    %2154 = vmatprep.subr.mxu0 0.0
    %2155 = vmatpush2.msra.mxu0 0.0
    %2156 = vmatprep.subr.mxu0 0.0
    %2157 = vmatpush2.msra.mxu0 0.0
    %2158 = vmatprep.subr.mxu0 0.0
    %2159 = vmatpush2.msra.mxu0 0.0
    %2160 = vmatprep.subr.mxu0 0.0
    %2161 = vmatpush2.msra.mxu0 0.0
    %2162 = vmatprep.subr.mxu0 0.0
    %2163 = vmatpush2.msra.mxu0 0.0
    %2164 = vmatprep.subr.mxu0 0.0
    %2165 = vmatpush2.msra.mxu0 0.0
    %2166 = vmatprep.subr.mxu0 0.0
    %2167 = vmatpush2.msra.mxu0 0.0
    %2168 = vmatprep.subr.mxu0 0.0
    %2169 = vmatpush2.msra.mxu0 0.0
    %2170 = vmatprep.subr.mxu0 0.0
    %2171 = vmatpush2.msra.mxu0 0.0
    %2172 = vmatprep.subr.mxu0 0.0
    %2173 = vmatpush2.msra.mxu0 0.0
    %2174 = vmatprep.subr.mxu0 0.0
    %2175 = vmatpush2.msra.mxu0 0.0
    %2176 = vmatprep.subr.mxu0 0.0
    %2177 = vmatpush2.msra.mxu0 0.0
    %2178 = vmatprep.subr.mxu0 0.0
    %2179 = vmatpush2.msra.mxu0 0.0
    %2180 = vmatprep.subr.mxu0 0.0
    %2181 = vmatpush2.msra.mxu0 0.0
    %2182 = vmatprep.mubr.f32.mxu0 0.0
    %2183 = vmatmul.mubr.f32.gmra.mxu0 %v458
    %v2184 = vpop.f32.mrf.mxu0
    %v2185 = vadd.f32 0.0, %v2184
    %v2186 = vpop.f32.mrf.mxu0
    %2187 = vdwg.mxu0
    %2188 = vmatprep.subr.mxu0 0.0
    %2189 = vmatpush1.msra.mxu0 0.0
    %2190 = vmatprep.subr.mxu0 0.0
    %2191 = vmatpush1.msra.mxu0 0.0
    %2192 = vmatprep.subr.mxu0 0.0
    %2193 = vmatpush1.msra.mxu0 0.0
    %2194 = vmatprep.subr.mxu0 0.0
    %2195 = vmatpush1.msra.mxu0 0.0
    %2196 = vmatprep.subr.mxu0 0.0
    %2197 = vmatpush1.msra.mxu0 0.0
    %2198 = vmatprep.subr.mxu0 0.0
    %2199 = vmatpush1.msra.mxu0 0.0
    %2200 = vmatprep.subr.mxu0 0.0
    %2201 = vmatpush1.msra.mxu0 0.0
    %2202 = vmatprep.subr.mxu0 0.0
    %2203 = vmatpush1.msra.mxu0 0.0
    %2204 = vmatprep.subr.mxu0 0.0
    %2205 = vmatpush1.msra.mxu0 0.0
    %2206 = vmatprep.subr.mxu0 0.0
    %2207 = vmatpush1.msra.mxu0 0.0
    %2208 = vmatprep.subr.mxu0 0.0
    %2209 = vmatpush1.msra.mxu0 0.0
    %2210 = vmatprep.subr.mxu0 0.0
    %2211 = vmatpush1.msra.mxu0 0.0
    %2212 = vmatprep.subr.mxu0 0.0
    %2213 = vmatpush1.msra.mxu0 0.0
    %2214 = vmatprep.subr.mxu0 0.0
    %2215 = vmatpush1.msra.mxu0 0.0
    %2216 = vmatprep.subr.mxu0 0.0
    %2217 = vmatpush1.msra.mxu0 %v2115
    %2218 = vmatprep.subr.mxu0 0.0
    %2219 = vmatpush1.msra.mxu0 %v2114
    %2220 = vmatprep.subr.mxu0 0.0
    %2221 = vmatpush2.msra.mxu0 0.0
    %2222 = vmatprep.subr.mxu0 0.0
    %2223 = vmatpush2.msra.mxu0 0.0
    %2224 = vmatprep.subr.mxu0 0.0
    %2225 = vmatpush2.msra.mxu0 0.0
    %2226 = vmatprep.subr.mxu0 0.0
    %2227 = vmatpush2.msra.mxu0 0.0
    %2228 = vmatprep.subr.mxu0 0.0
    %2229 = vmatpush2.msra.mxu0 0.0
    %2230 = vmatprep.subr.mxu0 0.0
    %2231 = vmatpush2.msra.mxu0 0.0
    %2232 = vmatprep.subr.mxu0 0.0
    %2233 = vmatpush2.msra.mxu0 0.0
    %2234 = vmatprep.subr.mxu0 0.0
    %2235 = vmatpush2.msra.mxu0 0.0
    %2236 = vmatprep.subr.mxu0 0.0
    %2237 = vmatpush2.msra.mxu0 0.0
    %2238 = vmatprep.subr.mxu0 0.0
    %2239 = vmatpush2.msra.mxu0 0.0
    %2240 = vmatprep.subr.mxu0 0.0
    %2241 = vmatpush2.msra.mxu0 0.0
    %2242 = vmatprep.subr.mxu0 0.0
    %2243 = vmatpush2.msra.mxu0 0.0
    %2244 = vmatprep.subr.mxu0 0.0
    %2245 = vmatpush2.msra.mxu0 0.0
    %2246 = vmatprep.subr.mxu0 0.0
    %2247 = vmatpush2.msra.mxu0 0.0
    %2248 = vmatprep.subr.mxu0 0.0
    %2249 = vmatpush2.msra.mxu0 0.0
    %2250 = vmatprep.subr.mxu0 0.0
    %2251 = vmatpush2.msra.mxu0 0.0
    %2252 = vmatprep.mubr.f32.mxu0 0.0
    %2253 = vmatmul.mubr.f32.gmra.mxu0 %v2041
    %v2254 = vpop.f32.mrf.mxu0
    %v2255 = vadd.f32 %v2185, %v2254
    %v2256 = vpop.f32.mrf.mxu0
    %2257 = vdwg.mxu0
    %s2258 = scalar_lea.vmem [#allocation17], 3
    %v2259 = vld [vmem:[%s2258] sm:$0x1]
    %v2261 = vlaneseq
    %v2262 = vshrl.u32 %v2261, 7
    %v2263 = vsub.s32 0, %v2262
    %v2264 = vrot.slane %v2259, %v2263
    %v2266 = vadd.f32 %v2255, %v2264
    %v2267 = vmax.f32 %v2266, 0.0
    %s2268 = scalar_lea.vmem [#allocation19], 192
    %v2269 = vld [vmem:[%s2268] sm:$0xff]
    %v2270 = vld [vmem:[%s2268 + $0x8] sm:$0xff]
    %v2271 = vld [vmem:[%s2268 + $0x10] sm:$0xff]
    %v2272 = vld [vmem:[%s2268 + $0x18] sm:$0xff]
    %v2273 = vld [vmem:[%s2268 + $0x20] sm:$0xff]
    %v2274 = vld [vmem:[%s2268 + $0x28] sm:$0xff]
    %v2275 = vld [vmem:[%s2268 + $0x30] sm:$0xff]
    %v2276 = vld [vmem:[%s2268 + $0x38] sm:$0xff]
    %s2277 = scalar_lea.vmem %s13, 3
    %v2278 = vld [vmem:[%s2277] sm:$0x1]
    %v2280 = vlaneseq
    %v2281 = vshrl.u32 %v2280, 7
    %v2282 = vsub.s32 0, %v2281
    %v2283 = vrot.slane %v2278, %v2282
    %v2286 = vsel %vm624, %v2267, 0
    %2288 = vmatprep.subr.mxu0 0.0
    %2289 = vmatpush1.msra.mxu0 0.0
    %2290 = vmatprep.subr.mxu0 0.0
    %2291 = vmatpush1.msra.mxu0 0.0
    %2292 = vmatprep.subr.mxu0 0.0
    %2293 = vmatpush1.msra.mxu0 0.0
    %2294 = vmatprep.subr.mxu0 0.0
    %2295 = vmatpush1.msra.mxu0 0.0
    %2296 = vmatprep.subr.mxu0 0.0
    %2297 = vmatpush1.msra.mxu0 0.0
    %2298 = vmatprep.subr.mxu0 0.0
    %2299 = vmatpush1.msra.mxu0 0.0
    %2300 = vmatprep.subr.mxu0 0.0
    %2301 = vmatpush1.msra.mxu0 0.0
    %2302 = vmatprep.subr.mxu0 0.0
    %2303 = vmatpush1.msra.mxu0 0.0
    %2304 = vmatprep.subr.mxu0 0.0
    %2305 = vmatpush1.msra.mxu0 %v2276
    %2306 = vmatprep.subr.mxu0 0.0
    %2307 = vmatpush1.msra.mxu0 %v2275
    %2308 = vmatprep.subr.mxu0 0.0
    %2309 = vmatpush1.msra.mxu0 %v2274
    %2310 = vmatprep.subr.mxu0 0.0
    %2311 = vmatpush1.msra.mxu0 %v2273
    %2312 = vmatprep.subr.mxu0 0.0
    %2313 = vmatpush1.msra.mxu0 %v2272
    %2314 = vmatprep.subr.mxu0 0.0
    %2315 = vmatpush1.msra.mxu0 %v2271
    %2316 = vmatprep.subr.mxu0 0.0
    %2317 = vmatpush1.msra.mxu0 %v2270
    %2318 = vmatprep.subr.mxu0 0.0
    %2319 = vmatpush1.msra.mxu0 %v2269
    %2320 = vmatprep.subr.mxu0 0.0
    %2321 = vmatpush2.msra.mxu0 0.0
    %2322 = vmatprep.subr.mxu0 0.0
    %2323 = vmatpush2.msra.mxu0 0.0
    %2324 = vmatprep.subr.mxu0 0.0
    %2325 = vmatpush2.msra.mxu0 0.0
    %2326 = vmatprep.subr.mxu0 0.0
    %2327 = vmatpush2.msra.mxu0 0.0
    %2328 = vmatprep.subr.mxu0 0.0
    %2329 = vmatpush2.msra.mxu0 0.0
    %2330 = vmatprep.subr.mxu0 0.0
    %2331 = vmatpush2.msra.mxu0 0.0
    %2332 = vmatprep.subr.mxu0 0.0
    %2333 = vmatpush2.msra.mxu0 0.0
    %2334 = vmatprep.subr.mxu0 0.0
    %2335 = vmatpush2.msra.mxu0 0.0
    %2336 = vmatprep.subr.mxu0 0.0
    %2337 = vmatpush2.msra.mxu0 0.0
    %2338 = vmatprep.subr.mxu0 0.0
    %2339 = vmatpush2.msra.mxu0 0.0
    %2340 = vmatprep.subr.mxu0 0.0
    %2341 = vmatpush2.msra.mxu0 0.0
    %2342 = vmatprep.subr.mxu0 0.0
    %2343 = vmatpush2.msra.mxu0 0.0
    %2344 = vmatprep.subr.mxu0 0.0
    %2345 = vmatpush2.msra.mxu0 0.0
    %2346 = vmatprep.subr.mxu0 0.0
    %2347 = vmatpush2.msra.mxu0 0.0
    %2348 = vmatprep.subr.mxu0 0.0
    %2349 = vmatpush2.msra.mxu0 0.0
    %2350 = vmatprep.subr.mxu0 0.0
    %2351 = vmatpush2.msra.mxu0 0.0
    %2352 = vmatprep.mubr.f32.mxu0 0.0
    %2353 = vmatmul.mubr.f32.gmra.mxu0 %v2286
    %v2354 = vpop.f32.mrf.mxu0
    %v2355 = vadd.f32 %v2283, %v2354
    %v2356 = vpop.f32.mrf.mxu0
    %2357 = vdwg.mxu0
    %v2358 = vtanh.pop %v2355
    %s2359 = scalar_lea.vmem [#allocation20], 192
    %v2360 = vld [vmem:[%s2359] sm:$0xff]
    %v2361 = vld [vmem:[%s2359 + $0x8] sm:$0xff]
    %v2362 = vld [vmem:[%s2359 + $0x10] sm:$0xff]
    %v2363 = vld [vmem:[%s2359 + $0x18] sm:$0xff]
    %v2364 = vld [vmem:[%s2359 + $0x20] sm:$0xff]
    %v2365 = vld [vmem:[%s2359 + $0x28] sm:$0xff]
    %v2366 = vld [vmem:[%s2359 + $0x30] sm:$0xff]
    %v2367 = vld [vmem:[%s2359 + $0x38] sm:$0xff]
    %s2368 = scalar_lea.vmem %s15, 3
    %v2369 = vld [vmem:[%s2368] sm:$0x1]
    %v2371 = vlaneseq
    %v2372 = vshrl.u32 %v2371, 7
    %v2373 = vsub.s32 0, %v2372
    %v2374 = vrot.slane %v2369, %v2373
    %2376 = vmatprep.subr.mxu0 0.0
    %2377 = vmatpush1.msra.mxu0 0.0
    %2378 = vmatprep.subr.mxu0 0.0
    %2379 = vmatpush1.msra.mxu0 0.0
    %2380 = vmatprep.subr.mxu0 0.0
    %2381 = vmatpush1.msra.mxu0 0.0
    %2382 = vmatprep.subr.mxu0 0.0
    %2383 = vmatpush1.msra.mxu0 0.0
    %2384 = vmatprep.subr.mxu0 0.0
    %2385 = vmatpush1.msra.mxu0 0.0
    %2386 = vmatprep.subr.mxu0 0.0
    %2387 = vmatpush1.msra.mxu0 0.0
    %2388 = vmatprep.subr.mxu0 0.0
    %2389 = vmatpush1.msra.mxu0 0.0
    %2390 = vmatprep.subr.mxu0 0.0
    %2391 = vmatpush1.msra.mxu0 0.0
    %2392 = vmatprep.subr.mxu0 0.0
    %2393 = vmatpush1.msra.mxu0 %v2367
    %2394 = vmatprep.subr.mxu0 0.0
    %2395 = vmatpush1.msra.mxu0 %v2366
    %2396 = vmatprep.subr.mxu0 0.0
    %2397 = vmatpush1.msra.mxu0 %v2365
    %2398 = vmatprep.subr.mxu0 0.0
    %2399 = vmatpush1.msra.mxu0 %v2364
    %2400 = vmatprep.subr.mxu0 0.0
    %2401 = vmatpush1.msra.mxu0 %v2363
    %2402 = vmatprep.subr.mxu0 0.0
    %2403 = vmatpush1.msra.mxu0 %v2362
    %2404 = vmatprep.subr.mxu0 0.0
    %2405 = vmatpush1.msra.mxu0 %v2361
    %2406 = vmatprep.subr.mxu0 0.0
    %2407 = vmatpush1.msra.mxu0 %v2360
    %2408 = vmatprep.subr.mxu0 0.0
    %2409 = vmatpush2.msra.mxu0 0.0
    %2410 = vmatprep.subr.mxu0 0.0
    %2411 = vmatpush2.msra.mxu0 0.0
    %2412 = vmatprep.subr.mxu0 0.0
    %2413 = vmatpush2.msra.mxu0 0.0
    %2414 = vmatprep.subr.mxu0 0.0
    %2415 = vmatpush2.msra.mxu0 0.0
    %2416 = vmatprep.subr.mxu0 0.0
    %2417 = vmatpush2.msra.mxu0 0.0
    %2418 = vmatprep.subr.mxu0 0.0
    %2419 = vmatpush2.msra.mxu0 0.0
    %2420 = vmatprep.subr.mxu0 0.0
    %2421 = vmatpush2.msra.mxu0 0.0
    %2422 = vmatprep.subr.mxu0 0.0
    %2423 = vmatpush2.msra.mxu0 0.0
    %2424 = vmatprep.subr.mxu0 0.0
    %2425 = vmatpush2.msra.mxu0 0.0
    %2426 = vmatprep.subr.mxu0 0.0
    %2427 = vmatpush2.msra.mxu0 0.0
    %2428 = vmatprep.subr.mxu0 0.0
    %2429 = vmatpush2.msra.mxu0 0.0
    %2430 = vmatprep.subr.mxu0 0.0
    %2431 = vmatpush2.msra.mxu0 0.0
    %2432 = vmatprep.subr.mxu0 0.0
    %2433 = vmatpush2.msra.mxu0 0.0
    %2434 = vmatprep.subr.mxu0 0.0
    %2435 = vmatpush2.msra.mxu0 0.0
    %2436 = vmatprep.subr.mxu0 0.0
    %2437 = vmatpush2.msra.mxu0 0.0
    %2438 = vmatprep.subr.mxu0 0.0
    %2439 = vmatpush2.msra.mxu0 0.0
    %2440 = vmatprep.mubr.f32.mxu0 0.0
    %2441 = vmatmul.mubr.f32.gmra.mxu0 %v2286
    %v2442 = vpop.f32.mrf.mxu0
    %v2443 = vadd.f32 %v2374, %v2442
    %v2444 = vpop.f32.mrf.mxu0
    %2445 = vdwg.mxu0
    %v2446 = vmul.f32 %v2358, 1.442695
    %v2447 = vpow.pop %v2446
    %v2448 = vmul.f32 %v2110, %v2447
    %v2449 = vadd.f32 %v2448, %v2443
    %v2451 = vsel %vm218, %v2449, 0
    %2453 = vmatprep.subr.mxu0 0.0
    %2454 = vmatpush1.msra.mxu0 0.0
    %2455 = vmatprep.subr.mxu0 0.0
    %2456 = vmatpush1.msra.mxu0 0.0
    %2457 = vmatprep.subr.mxu0 0.0
    %2458 = vmatpush1.msra.mxu0 0.0
    %2459 = vmatprep.subr.mxu0 0.0
    %2460 = vmatpush1.msra.mxu0 0.0
    %2461 = vmatprep.subr.mxu0 0.0
    %2462 = vmatpush1.msra.mxu0 0.0
    %2463 = vmatprep.subr.mxu0 0.0
    %2464 = vmatpush1.msra.mxu0 0.0
    %2465 = vmatprep.subr.mxu0 0.0
    %2466 = vmatpush1.msra.mxu0 0.0
    %2467 = vmatprep.subr.mxu0 0.0
    %2468 = vmatpush1.msra.mxu0 0.0
    %2469 = vmatprep.subr.mxu0 0.0
    %2470 = vmatpush1.msra.mxu0 0.0
    %2471 = vmatprep.subr.mxu0 0.0
    %2472 = vmatpush1.msra.mxu0 0.0
    %2473 = vmatprep.subr.mxu0 0.0
    %2474 = vmatpush1.msra.mxu0 0.0
    %2475 = vmatprep.subr.mxu0 0.0
    %2476 = vmatpush1.msra.mxu0 0.0
    %2477 = vmatprep.subr.mxu0 0.0
    %2478 = vmatpush1.msra.mxu0 0.0
    %2479 = vmatprep.subr.mxu0 0.0
    %2480 = vmatpush1.msra.mxu0 0.0
    %2481 = vmatprep.subr.mxu0 0.0
    %2482 = vmatpush1.msra.mxu0 0.0
    %2483 = vmatprep.subr.mxu0 0.0
    %2484 = vmatpush1.msra.mxu0 %v378
    %2485 = vmatprep.subr.mxu0 0.0
    %2486 = vmatpush2.msra.mxu0 0.0
    %2487 = vmatprep.subr.mxu0 0.0
    %2488 = vmatpush2.msra.mxu0 0.0
    %2489 = vmatprep.subr.mxu0 0.0
    %2490 = vmatpush2.msra.mxu0 0.0
    %2491 = vmatprep.subr.mxu0 0.0
    %2492 = vmatpush2.msra.mxu0 0.0
    %2493 = vmatprep.subr.mxu0 0.0
    %2494 = vmatpush2.msra.mxu0 0.0
    %2495 = vmatprep.subr.mxu0 0.0
    %2496 = vmatpush2.msra.mxu0 0.0
    %2497 = vmatprep.subr.mxu0 0.0
    %2498 = vmatpush2.msra.mxu0 0.0
    %2499 = vmatprep.subr.mxu0 0.0
    %2500 = vmatpush2.msra.mxu0 0.0
    %2501 = vmatprep.subr.mxu0 0.0
    %2502 = vmatpush2.msra.mxu0 0.0
    %2503 = vmatprep.subr.mxu0 0.0
    %2504 = vmatpush2.msra.mxu0 0.0
    %2505 = vmatprep.subr.mxu0 0.0
    %2506 = vmatpush2.msra.mxu0 0.0
    %2507 = vmatprep.subr.mxu0 0.0
    %2508 = vmatpush2.msra.mxu0 0.0
    %2509 = vmatprep.subr.mxu0 0.0
    %2510 = vmatpush2.msra.mxu0 0.0
    %2511 = vmatprep.subr.mxu0 0.0
    %2512 = vmatpush2.msra.mxu0 0.0
    %2513 = vmatprep.subr.mxu0 0.0
    %2514 = vmatpush2.msra.mxu0 0.0
    %2515 = vmatprep.subr.mxu0 0.0
    %2516 = vmatpush2.msra.mxu0 0.0
    %2517 = vmatprep.mubr.f32.mxu0 0.0
    %2518 = vmatmul.mubr.f32.gmra.mxu0 %v2451
    %v2519 = vpop.f32.mrf.mxu0
    %v2520 = vadd.f32 0.0, %v2519
    %v2521 = vpop.f32.mrf.mxu0
    %2522 = vdwg.mxu0
    %2523 = vmatprep.subr.mxu0 0.0
    %2524 = vmatpush1.msra.mxu0 0.0
    %2525 = vmatprep.subr.mxu0 0.0
    %2526 = vmatpush1.msra.mxu0 0.0
    %2527 = vmatprep.subr.mxu0 0.0
    %2528 = vmatpush1.msra.mxu0 0.0
    %2529 = vmatprep.subr.mxu0 0.0
    %2530 = vmatpush1.msra.mxu0 0.0
    %2531 = vmatprep.subr.mxu0 0.0
    %2532 = vmatpush1.msra.mxu0 0.0
    %2533 = vmatprep.subr.mxu0 0.0
    %2534 = vmatpush1.msra.mxu0 0.0
    %2535 = vmatprep.subr.mxu0 0.0
    %2536 = vmatpush1.msra.mxu0 0.0
    %2537 = vmatprep.subr.mxu0 0.0
    %2538 = vmatpush1.msra.mxu0 0.0
    %2539 = vmatprep.subr.mxu0 0.0
    %2540 = vmatpush1.msra.mxu0 0.0
    %2541 = vmatprep.subr.mxu0 0.0
    %2542 = vmatpush1.msra.mxu0 0.0
    %2543 = vmatprep.subr.mxu0 0.0
    %2544 = vmatpush1.msra.mxu0 0.0
    %2545 = vmatprep.subr.mxu0 0.0
    %2546 = vmatpush1.msra.mxu0 0.0
    %2547 = vmatprep.subr.mxu0 0.0
    %2548 = vmatpush1.msra.mxu0 0.0
    %2549 = vmatprep.subr.mxu0 0.0
    %2550 = vmatpush1.msra.mxu0 0.0
    %2551 = vmatprep.subr.mxu0 0.0
    %2552 = vmatpush1.msra.mxu0 %v377
    %2553 = vmatprep.subr.mxu0 0.0
    %2554 = vmatpush1.msra.mxu0 %v376
    %2555 = vmatprep.subr.mxu0 0.0
    %2556 = vmatpush2.msra.mxu0 0.0
    %2557 = vmatprep.subr.mxu0 0.0
    %2558 = vmatpush2.msra.mxu0 0.0
    %2559 = vmatprep.subr.mxu0 0.0
    %2560 = vmatpush2.msra.mxu0 0.0
    %2561 = vmatprep.subr.mxu0 0.0
    %2562 = vmatpush2.msra.mxu0 0.0
    %2563 = vmatprep.subr.mxu0 0.0
    %2564 = vmatpush2.msra.mxu0 0.0
    %2565 = vmatprep.subr.mxu0 0.0
    %2566 = vmatpush2.msra.mxu0 0.0
    %2567 = vmatprep.subr.mxu0 0.0
    %2568 = vmatpush2.msra.mxu0 0.0
    %2569 = vmatprep.subr.mxu0 0.0
    %2570 = vmatpush2.msra.mxu0 0.0
    %2571 = vmatprep.subr.mxu0 0.0
    %2572 = vmatpush2.msra.mxu0 0.0
    %2573 = vmatprep.subr.mxu0 0.0
    %2574 = vmatpush2.msra.mxu0 0.0
    %2575 = vmatprep.subr.mxu0 0.0
    %2576 = vmatpush2.msra.mxu0 0.0
    %2577 = vmatprep.subr.mxu0 0.0
    %2578 = vmatpush2.msra.mxu0 0.0
    %2579 = vmatprep.subr.mxu0 0.0
    %2580 = vmatpush2.msra.mxu0 0.0
    %2581 = vmatprep.subr.mxu0 0.0
    %2582 = vmatpush2.msra.mxu0 0.0
    %2583 = vmatprep.subr.mxu0 0.0
    %2584 = vmatpush2.msra.mxu0 0.0
    %2585 = vmatprep.subr.mxu0 0.0
    %2586 = vmatpush2.msra.mxu0 0.0
    %2587 = vmatprep.mubr.f32.mxu0 0.0
    %2588 = vmatmul.mubr.f32.gmra.mxu0 %v2041
    %v2589 = vpop.f32.mrf.mxu0
    %v2590 = vadd.f32 %v2520, %v2589
    %v2591 = vpop.f32.mrf.mxu0
    %2592 = vdwg.mxu0
    %v2593 = vadd.f32 %v2039, %v2358
    %2594 = vst.msk [vmem:[#allocation22] sm:$0xff] %vm380, %v2590
    %v2595 = vsel %vm218, %v2593, 0.0
    %2596 = vadd.xlane.f32.xlu0 %v2595
    %v2597 = vpop.xlane.xlu0 %2596
    %vm2598 = vcmask 7168
    %2599 = vst.msk [vmem:[%s17] sm:$0xff] %vm2598, %v2597
    // Predicated region
    $region114: #{normalizing_flow_forward.1} parent=1 // pred_check
      _
    $region115: #{normalizing_flow_forward.1} parent=1 // pred_check_branch
      %2601 = sbr.rel (0) target = $region117
    $region116: #{normalizing_flow_forward.1} parent=1 // pred_region
      %s2603 = ssub.s32 128, 128
      %2604 = vsyncadd [#allocation4], %s2603
      %s2606 = sshll.u32 [#allocation22], 4
      %s2607 = int_to_ptr.vmem [resolvable:$true] %s2606
      %2609 = dma.vmem_to_hbm [thread:$0]  %s2607, 128, %s16, [#allocation4]
    $region117: #{normalizing_flow_forward.1} parent=1 // pred_fallthru
      _
    // Predicated region
    $region118: #{normalizing_flow_forward.1} parent=1 // pred_check
      _
    $region119: #{normalizing_flow_forward.1} parent=1 // pred_check_branch
      %2611 = sbr.rel (0) target = $region121
    $region120: #{normalizing_flow_forward.1} parent=1 // pred_region
      _
    $region121: #{normalizing_flow_forward.1} parent=1 // pred_fallthru
      _
    // Predicated region
    $region122: #{normalizing_flow_forward.1} parent=1 // pred_check
      _
    $region123: #{normalizing_flow_forward.1} parent=1 // pred_check_branch
      %2613 = sbr.rel (0) target = $region125
    $region124: #{normalizing_flow_forward.1} parent=1 // pred_region
      %2614 = dma.done [#allocation4], 128
    $region125: #{normalizing_flow_forward.1} parent=1 // pred_fallthru
      _
    // Predicated region
    $region126: #{normalizing_flow_forward.1} parent=1 // pred_check
      _
    $region127: #{normalizing_flow_forward.1} parent=1 // pred_check_branch
      %2616 = sbr.rel (0) target = $region129
    $region128: #{normalizing_flow_forward.1} parent=1 // pred_region
      _
    $region129: #{normalizing_flow_forward.1} parent=1 // pred_fallthru
      _
    %2617 = vsyncpa [#allocation3], 1
    %2618 = vsyncpa [#allocation6], 1
    %2619 = vsyncpa [#allocation9], 1
    %2620 = vsyncpa [#allocation12], 1
    %2621 = vsyncpa [#allocation15], 1
    %2622 = vsyncpa [#allocation18], 1
    %2623 = vsyncpa [#allocation21], 1
    %2624 = vsyncpa [#allocation4], 1

</llo_original>
